<compile_context>
chip_gen: v7x
topology: tpu7x:2x2x1
jax: 0.10.0
libtpu: 0.0.40
codegen_flags: <defaults>
</compile_context>

<pallas_src>
import functools

import jax
import jax.numpy as jnp
from jax.experimental import pallas as pl
from jax.experimental.pallas import tpu as pltpu

BN_EPS = 1e-5              # nn.BatchNorm2d default
LANE = 128                 # pad output channels to a multiple of the lane width
_ROW_TILE_TARGET = 256     # rows per tile (raise to 512-1024 for production sizes)
_VMEM_LIMIT = 32 * 1024 * 1024


def _round_up(x, m):
    return (x + m - 1) // m * m


def _pick_tile_rows(H, Wp, target=_ROW_TILE_TARGET):
    """Largest TH dividing H with TH*Wp a multiple of 8 and <= target rows."""
    best = H                                     # full extent is always legal
    for th in range(1, H + 1):
        if H % th == 0 and (th * Wp) % 8 == 0 and th * Wp <= target:
            best = th
    return best


def _conv_stats_kernel(tile_rows, wp, x_ref, w_ref, b_ref, mask_ref,
                       y_ref, s_ref, ss_ref):
    """Conv3x3 (+bias) for one (sample, row-tile) + partial BN statistics.

    x_ref   : (1, (H+3)*Wp, Cin) f32  flattened zero-padded input (resident per n)
    w_ref   : (9, Cin, Cpad)    bf16  full weight tensor (resident)
    b_ref   : (1, Cpad)         f32   conv bias, channel-padded (resident)
    mask_ref: (TM, 1)           f32   1.0 on real width columns, 0.0 on the 2
                                      junk columns per row (Wp = W + 2)
    y_ref   : (1, TM, Cpad)     f32   pre-BN conv output tile
    s_ref   : (1, 1, 1, Cpad)   f32   per-tile sum   over valid columns
    ss_ref  : (1, 1, 1, Cpad)   f32   per-tile sum^2 over valid columns
    """
    r0 = pl.program_id(1) * tile_rows
    acc = None
    for t in range(9):                      # unrolled; weights stay resident
        kh, kw = t // 3, t % 3
        tap = x_ref[0, pl.ds(r0 + kh * wp + kw, tile_rows), :]
        d = jnp.dot(tap.astype(jnp.bfloat16), w_ref[t],
                    preferred_element_type=jnp.float32)
        acc = d if acc is None else acc + d
    y = acc + b_ref[...]                    # (TM, Cpad), f32
    y_ref[0] = y
    ym = y * mask_ref[...]                  # zero the width-padding junk cols
    s_ref[0, 0] = jnp.sum(ym, axis=0, keepdims=True)
    ss_ref[0, 0] = jnp.sum(ym * ym, axis=0, keepdims=True)


def _bn_relu_kernel(y_ref, scale_ref, shift_ref, o_ref):
    """Elementwise y*scale + shift, then ReLU (pass 2 of the two-pass BN)."""
    o_ref[...] = jnp.maximum(
        y_ref[...] * scale_ref[...] + shift_ref[...], 0.0).astype(o_ref.dtype)


def conv3x3_bn_relu(x_nhwc, w_hwio, conv_b, gamma, beta):
    """Fused 3x3 same-padding conv + BatchNorm(batch stats) + ReLU, NHWC."""
    N, H, W, Cin = x_nhwc.shape
    Cout = w_hwio.shape[-1]
    Cpad = _round_up(Cout, LANE)
    Wp = W + 2

    # Zero-pad (1 top, 2 bottom, 1 left/right; the extra bottom row keeps every
    # in-kernel tap slice in-bounds) and flatten rows: tap (kh, kw) of output
    # pixel o = h*Wp + w is simply row o + kh*Wp + kw of the flattened image.
    xp = jnp.pad(x_nhwc, ((0, 0), (1, 2), (1, 1), (0, 0)))
    R = (H + 3) * Wp
    xf = xp.reshape(N, R, Cin).astype(jnp.float32)

    M_pad = H * Wp                           # output rows incl. 2 junk cols/row
    TH = _pick_tile_rows(H, Wp)
    TM = TH * Wp
    n_m = H // TH

    # Parameters, padded to the lane-dense channel count.
    w9 = jnp.zeros((9, Cin, Cpad), jnp.bfloat16)
    w9 = w9.at[:, :, :Cout].set(w_hwio.reshape(9, Cin, Cout).astype(jnp.bfloat16))
    bias = jnp.zeros((1, Cpad), jnp.float32).at[0, :Cout].set(conv_b)
    col_mask = (jnp.arange(TM) % Wp < W).astype(jnp.float32).reshape(TM, 1)

    # ---- Pass 1: conv (+bias) and per-tile BN partial sums. ----
    y, psum, psumsq = pl.pallas_call(
        functools.partial(_conv_stats_kernel, TM, Wp),
        out_shape=(
            jax.ShapeDtypeStruct((N, M_pad, Cpad), jnp.float32),
            jax.ShapeDtypeStruct((N, n_m, 1, Cpad), jnp.float32),
            jax.ShapeDtypeStruct((N, n_m, 1, Cpad), jnp.float32),
        ),
        grid_spec=pltpu.PrefetchScalarGridSpec(
            num_scalar_prefetch=0,
            grid=(N, n_m),
            in_specs=[
                pl.BlockSpec((1, R, Cin), lambda n, m: (n, 0, 0)),     # per-n resident
                pl.BlockSpec((9, Cin, Cpad), lambda n, m: (0, 0, 0)),  # resident
                pl.BlockSpec((1, Cpad), lambda n, m: (0, 0)),          # resident
                pl.BlockSpec((TM, 1), lambda n, m: (0, 0)),            # resident
            ],
            out_specs=(
                pl.BlockSpec((1, TM, Cpad), lambda n, m: (n, m, 0)),
                pl.BlockSpec((1, 1, 1, Cpad), lambda n, m: (n, m, 0, 0)),
                pl.BlockSpec((1, 1, 1, Cpad), lambda n, m: (n, m, 0, 0)),
            ),
        ),
        compiler_params=pltpu.CompilerParams(
            dimension_semantics=("parallel", "parallel"),
            vmem_limit_bytes=_VMEM_LIMIT),
    )(xf, w9, bias, col_mask)

    # ---- Tiny host-side BN finalize: per-channel scale/shift. ----
    count = N * H * W
    mean = jnp.sum(psum, axis=(0, 1, 2)) / count
    var = jnp.sum(psumsq, axis=(0, 1, 2)) / count - mean * mean   # biased var
    gpad = jnp.zeros((Cpad,), jnp.float32).at[:Cout].set(gamma)
    bpad = jnp.zeros((Cpad,), jnp.float32).at[:Cout].set(beta)
    scale_v = gpad * jax.lax.rsqrt(var + BN_EPS)
    shift_v = bpad - mean * scale_v
    scale = scale_v.reshape(1, Cpad)
    shift = shift_v.reshape(1, Cpad)

    # ---- Pass 2: elementwise normalize + ReLU over row tiles. ----
    rows = N * M_pad
    out = pl.pallas_call(
        _bn_relu_kernel,
        out_shape=jax.ShapeDtypeStruct((rows, Cpad), jnp.float32),
        grid_spec=pltpu.PrefetchScalarGridSpec(
            num_scalar_prefetch=0,
            grid=(rows // TM,),
            in_specs=[
                pl.BlockSpec((TM, Cpad), lambda i: (i, 0)),
                pl.BlockSpec((1, Cpad), lambda i: (0, 0)),
                pl.BlockSpec((1, Cpad), lambda i: (0, 0)),
            ],
            out_specs=pl.BlockSpec((TM, Cpad), lambda i: (i, 0)),
        ),
        compiler_params=pltpu.CompilerParams(
            dimension_semantics=("parallel",),
            vmem_limit_bytes=_VMEM_LIMIT),
    )(y.reshape(rows, Cpad), scale, shift)

    # Drop the width-padding junk columns and the channel padding.
    return out.reshape(N, H, Wp, Cpad)[:, :, :W, :Cout]


def middle_block(x_nchw, params):
    """Full MiddleBlock forward. Input/output NCHW (PyTorch convention)."""
    x = jnp.transpose(x_nchw, (0, 2, 3, 1))                   # NCHW -> NHWC
    y = conv3x3_bn_relu(x, params["w1"], params["b1"],
                        params["g1"], params["be1"])
    y = conv3x3_bn_relu(y, params["w2"], params["b2"],
                        params["g2"], params["be2"])
    return jnp.transpose(y, (0, 3, 1, 2))                     # NHWC -> NCHW


def init_params(key, cin, cout):
    """Deterministic synthetic parameters (shapes match nn.Conv2d/BatchNorm2d)."""
    ks = jax.random.split(key, 8)

    def uni(k, shape, scale):
        return jax.random.uniform(k, shape, jnp.float32, -scale, scale)

    s1 = 1.0 / (cin * 9) ** 0.5
    s2 = 1.0 / (cout * 9) ** 0.5
    return {
        # conv weights stored HWIO (= PyTorch OIHW weight transposed (2,3,1,0))
        "w1": uni(ks[0], (3, 3, cin, cout), s1),
        "b1": uni(ks[1], (cout,), s1),
        "g1": 1.0 + 0.1 * jax.random.normal(ks[2], (cout,), jnp.float32),
        "be1": 0.1 * jax.random.normal(ks[3], (cout,), jnp.float32),
        "w2": uni(ks[4], (3, 3, cout, cout), s2),
        "b2": uni(ks[5], (cout,), s2),
        "g2": 1.0 + 0.1 * jax.random.normal(ks[6], (cout,), jnp.float32),
        "be2": 0.1 * jax.random.normal(ks[7], (cout,), jnp.float32),
    }


def _reference(x_nchw, params):
    """Pure-JAX reference mirroring the kernel's precision choices
    (conv operands rounded to bf16, f32 accumulation / BN epilogue)."""
    def rb(a):
        return a.astype(jnp.bfloat16).astype(jnp.float32)

    def layer(x, w_hwio, cb, g, b):
        y = jax.lax.conv_general_dilated(
            rb(x), rb(w_hwio), window_strides=(1, 1), padding="SAME",
            dimension_numbers=("NHWC", "HWIO", "NHWC"),
            precision=jax.lax.Precision.HIGHEST)
        y = y + cb[None, None, None, :]
        mean = jnp.mean(y, axis=(0, 1, 2))
        var = jnp.mean(jnp.square(y), axis=(0, 1, 2)) - mean * mean
        y = (y - mean) * jax.lax.rsqrt(var + BN_EPS) * g + b
        return jnp.maximum(y, 0.0)

    x = jnp.transpose(x_nchw, (0, 2, 3, 1))
    y = layer(x, params["w1"], params["b1"], params["g1"], params["be1"])
    y = layer(y, params["w2"], params["b2"], params["g2"], params["be2"])
    return jnp.transpose(y, (0, 3, 1, 2))


if __name__ == "__main__":
    N, CIN, COUT, H, W = 2, 4, 8, 16, 16
    key = jax.random.PRNGKey(0)
    kx, kp = jax.random.split(key)
    x = jax.random.normal(kx, (N, CIN, H, W), jnp.float32)    # NCHW, like PyTorch
    params = init_params(kp, CIN, COUT)

    fwd = jax.jit(middle_block)
    out = jax.block_until_ready(fwd(x, params))
    assert out.shape == (N, COUT, H, W), out.shape

    ref = jax.block_until_ready(_reference(x, params))
    err = float(jnp.max(jnp.abs(out - ref)))
    assert err < 1e-2, err

    print("KERNEL_OK")
</pallas_src>

<mosaic_0001>
module attributes {stable_mosaic.version = 11 : i64} {
  func.func @_conv_stats_kernel(%arg0: i32, %arg1: i32, %arg2: memref<1x342x4xf32, #tpu.memory_space<vmem>>, %arg3: memref<9x4x128xbf16, #tpu.memory_space<vmem>>, %arg4: memref<1x128xf32, #tpu.memory_space<vmem>>, %arg5: memref<144x1xf32, #tpu.memory_space<vmem>>, %arg6: memref<1x144x128xf32, #tpu.memory_space<vmem>>, %arg7: memref<1x1x1x128xf32, #tpu.memory_space<vmem>>, %arg8: memref<1x1x1x128xf32, #tpu.memory_space<vmem>>) attributes {dimension_semantics = [#tpu.dimension_semantics<parallel>, #tpu.dimension_semantics<parallel>], iteration_bounds = array<i64: 2, 2>, scalar_prefetch = 0 : i64, scratch_operands = 0 : i64, tpu.core_type = #tpu.core_type<tc>, window_params = [{transform_indices = @transform_0, window_bounds = array<i64: 1, 342, 4>}, {pipeline_mode = #tpu.pipeline_mode<synchronous>, transform_indices = @transform_1, window_bounds = array<i64: 9, 4, 128>}, {pipeline_mode = #tpu.pipeline_mode<synchronous>, transform_indices = @transform_2, window_bounds = array<i64: 1, 128>}, {pipeline_mode = #tpu.pipeline_mode<synchronous>, transform_indices = @transform_3, window_bounds = array<i64: 144, 1>}, {transform_indices = @transform_4, window_bounds = array<i64: 1, 144, 128>}, {transform_indices = @transform_5, window_bounds = array<i64: 1, 1, 1, 128>}, {transform_indices = @transform_6, window_bounds = array<i64: 1, 1, 1, 128>}]} {
    %c144_i32 = arith.constant 144 : i32
    %0 = arith.muli %arg1, %c144_i32 : i32
    %c0_i32 = arith.constant 0 : i32
    %1 = arith.addi %0, %c0_i32 : i32
    %c0_i32_0 = arith.constant 0 : i32
    %2 = arith.addi %1, %c0_i32_0 : i32
    %c0 = arith.constant 0 : index
    %3 = arith.index_cast %2 : i32 to index
    %c0_1 = arith.constant 0 : index
    %4 = vector.load %arg2[%c0, %3, %c0_1] : memref<1x342x4xf32, #tpu.memory_space<vmem>>, vector<1x144x4xf32>
    %5 = vector.shape_cast %4 : vector<1x144x4xf32> to vector<144x4xf32>
    %6 = arith.truncf %5 : vector<144x4xf32> to vector<144x4xbf16>
    %c0_2 = arith.constant 0 : index
    %c0_3 = arith.constant 0 : index
    %c0_4 = arith.constant 0 : index
    %7 = vector.load %arg3[%c0_2, %c0_3, %c0_4] : memref<9x4x128xbf16, #tpu.memory_space<vmem>>, vector<1x4x128xbf16>
    %8 = vector.shape_cast %7 : vector<1x4x128xbf16> to vector<4x128xbf16>
    %cst = arith.constant dense<0.000000e+00> : vector<144x128xf32>
    %9 = tpu.matmul %6, %8, %cst {dimension_numbers = #tpu.dot_dimension_numbers<[1], [0], [0], [1], [0, 0, 1, 1], [], []>} : vector<144x4xbf16>, vector<4x128xbf16>, vector<144x128xf32> -> vector<144x128xf32>
    %c0_i32_5 = arith.constant 0 : i32
    %10 = arith.addi %0, %c0_i32_5 : i32
    %c1_i32 = arith.constant 1 : i32
    %11 = arith.addi %10, %c1_i32 : i32
    %c0_6 = arith.constant 0 : index
    %12 = arith.index_cast %11 : i32 to index
    %c0_7 = arith.constant 0 : index
    %13 = vector.load %arg2[%c0_6, %12, %c0_7] : memref<1x342x4xf32, #tpu.memory_space<vmem>>, vector<1x144x4xf32>
    %14 = vector.shape_cast %13 : vector<1x144x4xf32> to vector<144x4xf32>
    %15 = arith.truncf %14 : vector<144x4xf32> to vector<144x4xbf16>
    %c1 = arith.constant 1 : index
    %c0_8 = arith.constant 0 : index
    %c0_9 = arith.constant 0 : index
    %16 = vector.load %arg3[%c1, %c0_8, %c0_9] : memref<9x4x128xbf16, #tpu.memory_space<vmem>>, vector<1x4x128xbf16>
    %17 = vector.shape_cast %16 : vector<1x4x128xbf16> to vector<4x128xbf16>
    %cst_10 = arith.constant dense<0.000000e+00> : vector<144x128xf32>
    %18 = tpu.matmul %15, %17, %cst_10 {dimension_numbers = #tpu.dot_dimension_numbers<[1], [0], [0], [1], [0, 0, 1, 1], [], []>} : vector<144x4xbf16>, vector<4x128xbf16>, vector<144x128xf32> -> vector<144x128xf32>
    %19 = arith.addf %9, %18 : vector<144x128xf32>
    %c0_i32_11 = arith.constant 0 : i32
    %20 = arith.addi %0, %c0_i32_11 : i32
    %c2_i32 = arith.constant 2 : i32
    %21 = arith.addi %20, %c2_i32 : i32
    %c0_12 = arith.constant 0 : index
    %22 = arith.index_cast %21 : i32 to index
    %c0_13 = arith.constant 0 : index
    %23 = vector.load %arg2[%c0_12, %22, %c0_13] : memref<1x342x4xf32, #tpu.memory_space<vmem>>, vector<1x144x4xf32>
    %24 = vector.shape_cast %23 : vector<1x144x4xf32> to vector<144x4xf32>
    %25 = arith.truncf %24 : vector<144x4xf32> to vector<144x4xbf16>
    %c2 = arith.constant 2 : index
    %c0_14 = arith.constant 0 : index
    %c0_15 = arith.constant 0 : index
    %26 = vector.load %arg3[%c2, %c0_14, %c0_15] : memref<9x4x128xbf16, #tpu.memory_space<vmem>>, vector<1x4x128xbf16>
    %27 = vector.shape_cast %26 : vector<1x4x128xbf16> to vector<4x128xbf16>
    %cst_16 = arith.constant dense<0.000000e+00> : vector<144x128xf32>
    %28 = tpu.matmul %25, %27, %cst_16 {dimension_numbers = #tpu.dot_dimension_numbers<[1], [0], [0], [1], [0, 0, 1, 1], [], []>} : vector<144x4xbf16>, vector<4x128xbf16>, vector<144x128xf32> -> vector<144x128xf32>
    %29 = arith.addf %19, %28 : vector<144x128xf32>
    %c18_i32 = arith.constant 18 : i32
    %30 = arith.addi %0, %c18_i32 : i32
    %c0_i32_17 = arith.constant 0 : i32
    %31 = arith.addi %30, %c0_i32_17 : i32
    %c0_18 = arith.constant 0 : index
    %32 = arith.index_cast %31 : i32 to index
    %c0_19 = arith.constant 0 : index
    %33 = vector.load %arg2[%c0_18, %32, %c0_19] : memref<1x342x4xf32, #tpu.memory_space<vmem>>, vector<1x144x4xf32>
    %34 = vector.shape_cast %33 : vector<1x144x4xf32> to vector<144x4xf32>
    %35 = arith.truncf %34 : vector<144x4xf32> to vector<144x4xbf16>
    %c3 = arith.constant 3 : index
    %c0_20 = arith.constant 0 : index
    %c0_21 = arith.constant 0 : index
    %36 = vector.load %arg3[%c3, %c0_20, %c0_21] : memref<9x4x128xbf16, #tpu.memory_space<vmem>>, vector<1x4x128xbf16>
    %37 = vector.shape_cast %36 : vector<1x4x128xbf16> to vector<4x128xbf16>
    %cst_22 = arith.constant dense<0.000000e+00> : vector<144x128xf32>
    %38 = tpu.matmul %35, %37, %cst_22 {dimension_numbers = #tpu.dot_dimension_numbers<[1], [0], [0], [1], [0, 0, 1, 1], [], []>} : vector<144x4xbf16>, vector<4x128xbf16>, vector<144x128xf32> -> vector<144x128xf32>
    %39 = arith.addf %29, %38 : vector<144x128xf32>
    %c18_i32_23 = arith.constant 18 : i32
    %40 = arith.addi %0, %c18_i32_23 : i32
    %c1_i32_24 = arith.constant 1 : i32
    %41 = arith.addi %40, %c1_i32_24 : i32
    %c0_25 = arith.constant 0 : index
    %42 = arith.index_cast %41 : i32 to index
    %c0_26 = arith.constant 0 : index
    %43 = vector.load %arg2[%c0_25, %42, %c0_26] : memref<1x342x4xf32, #tpu.memory_space<vmem>>, vector<1x144x4xf32>
    %44 = vector.shape_cast %43 : vector<1x144x4xf32> to vector<144x4xf32>
    %45 = arith.truncf %44 : vector<144x4xf32> to vector<144x4xbf16>
    %c4 = arith.constant 4 : index
    %c0_27 = arith.constant 0 : index
    %c0_28 = arith.constant 0 : index
    %46 = vector.load %arg3[%c4, %c0_27, %c0_28] : memref<9x4x128xbf16, #tpu.memory_space<vmem>>, vector<1x4x128xbf16>
    %47 = vector.shape_cast %46 : vector<1x4x128xbf16> to vector<4x128xbf16>
    %cst_29 = arith.constant dense<0.000000e+00> : vector<144x128xf32>
    %48 = tpu.matmul %45, %47, %cst_29 {dimension_numbers = #tpu.dot_dimension_numbers<[1], [0], [0], [1], [0, 0, 1, 1], [], []>} : vector<144x4xbf16>, vector<4x128xbf16>, vector<144x128xf32> -> vector<144x128xf32>
    %49 = arith.addf %39, %48 : vector<144x128xf32>
    %c18_i32_30 = arith.constant 18 : i32
    %50 = arith.addi %0, %c18_i32_30 : i32
    %c2_i32_31 = arith.constant 2 : i32
    %51 = arith.addi %50, %c2_i32_31 : i32
    %c0_32 = arith.constant 0 : index
    %52 = arith.index_cast %51 : i32 to index
    %c0_33 = arith.constant 0 : index
    %53 = vector.load %arg2[%c0_32, %52, %c0_33] : memref<1x342x4xf32, #tpu.memory_space<vmem>>, vector<1x144x4xf32>
    %54 = vector.shape_cast %53 : vector<1x144x4xf32> to vector<144x4xf32>
    %55 = arith.truncf %54 : vector<144x4xf32> to vector<144x4xbf16>
    %c5 = arith.constant 5 : index
    %c0_34 = arith.constant 0 : index
    %c0_35 = arith.constant 0 : index
    %56 = vector.load %arg3[%c5, %c0_34, %c0_35] : memref<9x4x128xbf16, #tpu.memory_space<vmem>>, vector<1x4x128xbf16>
    %57 = vector.shape_cast %56 : vector<1x4x128xbf16> to vector<4x128xbf16>
    %cst_36 = arith.constant dense<0.000000e+00> : vector<144x128xf32>
    %58 = tpu.matmul %55, %57, %cst_36 {dimension_numbers = #tpu.dot_dimension_numbers<[1], [0], [0], [1], [0, 0, 1, 1], [], []>} : vector<144x4xbf16>, vector<4x128xbf16>, vector<144x128xf32> -> vector<144x128xf32>
    %59 = arith.addf %49, %58 : vector<144x128xf32>
    %c36_i32 = arith.constant 36 : i32
    %60 = arith.addi %0, %c36_i32 : i32
    %c0_i32_37 = arith.constant 0 : i32
    %61 = arith.addi %60, %c0_i32_37 : i32
    %c0_38 = arith.constant 0 : index
    %62 = arith.index_cast %61 : i32 to index
    %c0_39 = arith.constant 0 : index
    %63 = vector.load %arg2[%c0_38, %62, %c0_39] : memref<1x342x4xf32, #tpu.memory_space<vmem>>, vector<1x144x4xf32>
    %64 = vector.shape_cast %63 : vector<1x144x4xf32> to vector<144x4xf32>
    %65 = arith.truncf %64 : vector<144x4xf32> to vector<144x4xbf16>
    %c6 = arith.constant 6 : index
    %c0_40 = arith.constant 0 : index
    %c0_41 = arith.constant 0 : index
    %66 = vector.load %arg3[%c6, %c0_40, %c0_41] : memref<9x4x128xbf16, #tpu.memory_space<vmem>>, vector<1x4x128xbf16>
    %67 = vector.shape_cast %66 : vector<1x4x128xbf16> to vector<4x128xbf16>
    %cst_42 = arith.constant dense<0.000000e+00> : vector<144x128xf32>
    %68 = tpu.matmul %65, %67, %cst_42 {dimension_numbers = #tpu.dot_dimension_numbers<[1], [0], [0], [1], [0, 0, 1, 1], [], []>} : vector<144x4xbf16>, vector<4x128xbf16>, vector<144x128xf32> -> vector<144x128xf32>
    %69 = arith.addf %59, %68 : vector<144x128xf32>
    %c36_i32_43 = arith.constant 36 : i32
    %70 = arith.addi %0, %c36_i32_43 : i32
    %c1_i32_44 = arith.constant 1 : i32
    %71 = arith.addi %70, %c1_i32_44 : i32
    %c0_45 = arith.constant 0 : index
    %72 = arith.index_cast %71 : i32 to index
    %c0_46 = arith.constant 0 : index
    %73 = vector.load %arg2[%c0_45, %72, %c0_46] : memref<1x342x4xf32, #tpu.memory_space<vmem>>, vector<1x144x4xf32>
    %74 = vector.shape_cast %73 : vector<1x144x4xf32> to vector<144x4xf32>
    %75 = arith.truncf %74 : vector<144x4xf32> to vector<144x4xbf16>
    %c7 = arith.constant 7 : index
    %c0_47 = arith.constant 0 : index
    %c0_48 = arith.constant 0 : index
    %76 = vector.load %arg3[%c7, %c0_47, %c0_48] : memref<9x4x128xbf16, #tpu.memory_space<vmem>>, vector<1x4x128xbf16>
    %77 = vector.shape_cast %76 : vector<1x4x128xbf16> to vector<4x128xbf16>
    %cst_49 = arith.constant dense<0.000000e+00> : vector<144x128xf32>
    %78 = tpu.matmul %75, %77, %cst_49 {dimension_numbers = #tpu.dot_dimension_numbers<[1], [0], [0], [1], [0, 0, 1, 1], [], []>} : vector<144x4xbf16>, vector<4x128xbf16>, vector<144x128xf32> -> vector<144x128xf32>
    %79 = arith.addf %69, %78 : vector<144x128xf32>
    %c36_i32_50 = arith.constant 36 : i32
    %80 = arith.addi %0, %c36_i32_50 : i32
    %c2_i32_51 = arith.constant 2 : i32
    %81 = arith.addi %80, %c2_i32_51 : i32
    %c0_52 = arith.constant 0 : index
    %82 = arith.index_cast %81 : i32 to index
    %c0_53 = arith.constant 0 : index
    %83 = vector.load %arg2[%c0_52, %82, %c0_53] : memref<1x342x4xf32, #tpu.memory_space<vmem>>, vector<1x144x4xf32>
    %84 = vector.shape_cast %83 : vector<1x144x4xf32> to vector<144x4xf32>
    %85 = arith.truncf %84 : vector<144x4xf32> to vector<144x4xbf16>
    %c8 = arith.constant 8 : index
    %c0_54 = arith.constant 0 : index
    %c0_55 = arith.constant 0 : index
    %86 = vector.load %arg3[%c8, %c0_54, %c0_55] : memref<9x4x128xbf16, #tpu.memory_space<vmem>>, vector<1x4x128xbf16>
    %87 = vector.shape_cast %86 : vector<1x4x128xbf16> to vector<4x128xbf16>
    %cst_56 = arith.constant dense<0.000000e+00> : vector<144x128xf32>
    %88 = tpu.matmul %85, %87, %cst_56 {dimension_numbers = #tpu.dot_dimension_numbers<[1], [0], [0], [1], [0, 0, 1, 1], [], []>} : vector<144x4xbf16>, vector<4x128xbf16>, vector<144x128xf32> -> vector<144x128xf32>
    %89 = arith.addf %79, %88 : vector<144x128xf32>
    %c0_57 = arith.constant 0 : index
    %c0_58 = arith.constant 0 : index
    %90 = vector.load %arg4[%c0_57, %c0_58] : memref<1x128xf32, #tpu.memory_space<vmem>>, vector<1x128xf32>
    %91 = vector.broadcast %90 : vector<1x128xf32> to vector<144x128xf32>
    %92 = arith.addf %89, %91 : vector<144x128xf32>
    %c0_59 = arith.constant 0 : index
    %c0_60 = arith.constant 0 : index
    %c0_61 = arith.constant 0 : index
    %93 = vector.load %arg6[%c0_59, %c0_60, %c0_61] : memref<1x144x128xf32, #tpu.memory_space<vmem>>, vector<1x144x128xf32>
    %94 = vector.shape_cast %93 : vector<1x144x128xf32> to vector<144x128xf32>
    %95 = vector.shape_cast %92 : vector<144x128xf32> to vector<1x144x128xf32>
    tpu.vector_store %arg6[%c0_59, %c0_60, %c0_61], %95 {strides = array<i32>} : memref<1x144x128xf32, #tpu.memory_space<vmem>>, vector<1x144x128xf32>,
    %c0_62 = arith.constant 0 : index
    %c0_63 = arith.constant 0 : index
    %96 = vector.load %arg5[%c0_62, %c0_63] : memref<144x1xf32, #tpu.memory_space<vmem>>, vector<144x1xf32>
    %97 = vector.broadcast %96 : vector<144x1xf32> to vector<144x128xf32>
    %98 = arith.mulf %92, %97 : vector<144x128xf32>
    %cst_64 = arith.constant dense<0.000000e+00> : vector<128xf32>
    %99 = vector.multi_reduction <add>, %98, %cst_64 [0] : vector<144x128xf32> to vector<128xf32>
    %100 = vector.shape_cast %99 : vector<128xf32> to vector<1x128xf32>
    %c0_65 = arith.constant 0 : index
    %c0_66 = arith.constant 0 : index
    %c0_67 = arith.constant 0 : index
    %c0_68 = arith.constant 0 : index
    %101 = vector.load %arg7[%c0_65, %c0_66, %c0_67, %c0_68] : memref<1x1x1x128xf32, #tpu.memory_space<vmem>>, vector<1x1x1x128xf32>
    %102 = vector.shape_cast %101 : vector<1x1x1x128xf32> to vector<1x128xf32>
    %103 = vector.shape_cast %100 : vector<1x128xf32> to vector<1x1x1x128xf32>
    tpu.vector_store %arg7[%c0_65, %c0_66, %c0_67, %c0_68], %103 {strides = array<i32>} : memref<1x1x1x128xf32, #tpu.memory_space<vmem>>, vector<1x1x1x128xf32>,
    %104 = arith.mulf %98, %98 : vector<144x128xf32>
    %cst_69 = arith.constant dense<0.000000e+00> : vector<128xf32>
    %105 = vector.multi_reduction <add>, %104, %cst_69 [0] : vector<144x128xf32> to vector<128xf32>
    %106 = vector.shape_cast %105 : vector<128xf32> to vector<1x128xf32>
    %c0_70 = arith.constant 0 : index
    %c0_71 = arith.constant 0 : index
    %c0_72 = arith.constant 0 : index
    %c0_73 = arith.constant 0 : index
    %107 = vector.load %arg8[%c0_70, %c0_71, %c0_72, %c0_73] : memref<1x1x1x128xf32, #tpu.memory_space<vmem>>, vector<1x1x1x128xf32>
    %108 = vector.shape_cast %107 : vector<1x1x1x128xf32> to vector<1x128xf32>
    %109 = vector.shape_cast %106 : vector<1x128xf32> to vector<1x1x1x128xf32>
    tpu.vector_store %arg8[%c0_70, %c0_71, %c0_72, %c0_73], %109 {strides = array<i32>} : memref<1x1x1x128xf32, #tpu.memory_space<vmem>>, vector<1x1x1x128xf32>,
    return
  }
  func.func @transform_0(%arg0: i32, %arg1: i32) -> (i32, i32, i32) {
    %c0_i32 = arith.constant 0 : i32
    %c0_i32_0 = arith.constant 0 : i32
    %c0_i32_1 = arith.constant 0 : i32
    return %arg0, %c0_i32, %c0_i32_0 : i32, i32, i32
  }
  func.func @transform_1(%arg0: i32, %arg1: i32) -> (i32, i32, i32) {
    %c0_i32 = arith.constant 0 : i32
    %c0_i32_0 = arith.constant 0 : i32
    %c0_i32_1 = arith.constant 0 : i32
    %c0_i32_2 = arith.constant 0 : i32
    return %c0_i32, %c0_i32_0, %c0_i32_1 : i32, i32, i32
  }
  func.func @transform_2(%arg0: i32, %arg1: i32) -> (i32, i32) {
    %c0_i32 = arith.constant 0 : i32
    %c0_i32_0 = arith.constant 0 : i32
    %c0_i32_1 = arith.constant 0 : i32
    return %c0_i32, %c0_i32_0 : i32, i32
  }
  func.func @transform_3(%arg0: i32, %arg1: i32) -> (i32, i32) {
    %c0_i32 = arith.constant 0 : i32
    %c0_i32_0 = arith.constant 0 : i32
    %c0_i32_1 = arith.constant 0 : i32
    return %c0_i32, %c0_i32_0 : i32, i32
  }
  func.func @transform_4(%arg0: i32, %arg1: i32) -> (i32, i32, i32) {
    %c0_i32 = arith.constant 0 : i32
    %c0_i32_0 = arith.constant 0 : i32
    return %arg0, %arg1, %c0_i32 : i32, i32, i32
  }
  func.func @transform_5(%arg0: i32, %arg1: i32) -> (i32, i32, i32, i32) {
    %c0_i32 = arith.constant 0 : i32
    %c0_i32_0 = arith.constant 0 : i32
    %c0_i32_1 = arith.constant 0 : i32
    return %arg0, %arg1, %c0_i32, %c0_i32_0 : i32, i32, i32, i32
  }
  func.func @transform_6(%arg0: i32, %arg1: i32) -> (i32, i32, i32, i32) {
    %c0_i32 = arith.constant 0 : i32
    %c0_i32_0 = arith.constant 0 : i32
    %c0_i32_1 = arith.constant 0 : i32
    return %arg0, %arg1, %c0_i32, %c0_i32_0 : i32, i32, i32, i32
  }
}

module attributes {stable_mosaic.version = 11 : i64} {
  func.func @_bn_relu_kernel(%arg0: i32, %arg1: memref<144x128xf32, #tpu.memory_space<vmem>>, %arg2: memref<1x128xf32, #tpu.memory_space<vmem>>, %arg3: memref<1x128xf32, #tpu.memory_space<vmem>>, %arg4: memref<144x128xf32, #tpu.memory_space<vmem>>) attributes {dimension_semantics = [#tpu.dimension_semantics<parallel>], iteration_bounds = array<i64: 4>, scalar_prefetch = 0 : i64, scratch_operands = 0 : i64, tpu.core_type = #tpu.core_type<tc>, window_params = [{transform_indices = @transform_0, window_bounds = array<i64: 144, 128>}, {pipeline_mode = #tpu.pipeline_mode<synchronous>, transform_indices = @transform_1, window_bounds = array<i64: 1, 128>}, {pipeline_mode = #tpu.pipeline_mode<synchronous>, transform_indices = @transform_2, window_bounds = array<i64: 1, 128>}, {transform_indices = @transform_3, window_bounds = array<i64: 144, 128>}]} {
    %c0 = arith.constant 0 : index
    %c0_0 = arith.constant 0 : index
    %0 = vector.load %arg1[%c0, %c0_0] : memref<144x128xf32, #tpu.memory_space<vmem>>, vector<144x128xf32>
    %c0_1 = arith.constant 0 : index
    %c0_2 = arith.constant 0 : index
    %1 = vector.load %arg2[%c0_1, %c0_2] : memref<1x128xf32, #tpu.memory_space<vmem>>, vector<1x128xf32>
    %2 = vector.broadcast %1 : vector<1x128xf32> to vector<144x128xf32>
    %3 = arith.mulf %0, %2 : vector<144x128xf32>
    %c0_3 = arith.constant 0 : index
    %c0_4 = arith.constant 0 : index
    %4 = vector.load %arg3[%c0_3, %c0_4] : memref<1x128xf32, #tpu.memory_space<vmem>>, vector<1x128xf32>
    %5 = vector.broadcast %4 : vector<1x128xf32> to vector<144x128xf32>
    %6 = arith.addf %3, %5 : vector<144x128xf32>
    %cst = arith.constant 0.000000e+00 : f32
    %7 = vector.broadcast %cst : f32 to vector<144x128xf32>
    %8 = arith.maximumf %6, %7 : vector<144x128xf32>
    %c0_5 = arith.constant 0 : index
    %c0_6 = arith.constant 0 : index
    %9 = vector.load %arg4[%c0_5, %c0_6] : memref<144x128xf32, #tpu.memory_space<vmem>>, vector<144x128xf32>
    tpu.vector_store %arg4[%c0_5, %c0_6], %8 {strides = array<i32>} : memref<144x128xf32, #tpu.memory_space<vmem>>, vector<144x128xf32>,
    return
  }
  func.func @transform_0(%arg0: i32) -> (i32, i32) {
    %c0_i32 = arith.constant 0 : i32
    %c0_i32_0 = arith.constant 0 : i32
    return %arg0, %c0_i32 : i32, i32
  }
  func.func @transform_1(%arg0: i32) -> (i32, i32) {
    %c0_i32 = arith.constant 0 : i32
    %c0_i32_0 = arith.constant 0 : i32
    %c0_i32_1 = arith.constant 0 : i32
    return %c0_i32, %c0_i32_0 : i32, i32
  }
  func.func @transform_2(%arg0: i32) -> (i32, i32) {
    %c0_i32 = arith.constant 0 : i32
    %c0_i32_0 = arith.constant 0 : i32
    %c0_i32_1 = arith.constant 0 : i32
    return %c0_i32, %c0_i32_0 : i32, i32
  }
  func.func @transform_3(%arg0: i32) -> (i32, i32) {
    %c0_i32 = arith.constant 0 : i32
    %c0_i32_0 = arith.constant 0 : i32
    return %arg0, %c0_i32 : i32, i32
  }
}

module attributes {stable_mosaic.version = 11 : i64} {
  func.func @_conv_stats_kernel(%arg0: i32, %arg1: i32, %arg2: memref<1x342x8xf32, #tpu.memory_space<vmem>>, %arg3: memref<9x8x128xbf16, #tpu.memory_space<vmem>>, %arg4: memref<1x128xf32, #tpu.memory_space<vmem>>, %arg5: memref<144x1xf32, #tpu.memory_space<vmem>>, %arg6: memref<1x144x128xf32, #tpu.memory_space<vmem>>, %arg7: memref<1x1x1x128xf32, #tpu.memory_space<vmem>>, %arg8: memref<1x1x1x128xf32, #tpu.memory_space<vmem>>) attributes {dimension_semantics = [#tpu.dimension_semantics<parallel>, #tpu.dimension_semantics<parallel>], iteration_bounds = array<i64: 2, 2>, scalar_prefetch = 0 : i64, scratch_operands = 0 : i64, tpu.core_type = #tpu.core_type<tc>, window_params = [{transform_indices = @transform_0, window_bounds = array<i64: 1, 342, 8>}, {pipeline_mode = #tpu.pipeline_mode<synchronous>, transform_indices = @transform_1, window_bounds = array<i64: 9, 8, 128>}, {pipeline_mode = #tpu.pipeline_mode<synchronous>, transform_indices = @transform_2, window_bounds = array<i64: 1, 128>}, {pipeline_mode = #tpu.pipeline_mode<synchronous>, transform_indices = @transform_3, window_bounds = array<i64: 144, 1>}, {transform_indices = @transform_4, window_bounds = array<i64: 1, 144, 128>}, {transform_indices = @transform_5, window_bounds = array<i64: 1, 1, 1, 128>}, {transform_indices = @transform_6, window_bounds = array<i64: 1, 1, 1, 128>}]} {
    %c144_i32 = arith.constant 144 : i32
    %0 = arith.muli %arg1, %c144_i32 : i32
    %c0_i32 = arith.constant 0 : i32
    %1 = arith.addi %0, %c0_i32 : i32
    %c0_i32_0 = arith.constant 0 : i32
    %2 = arith.addi %1, %c0_i32_0 : i32
    %c0 = arith.constant 0 : index
    %3 = arith.index_cast %2 : i32 to index
    %c0_1 = arith.constant 0 : index
    %4 = vector.load %arg2[%c0, %3, %c0_1] : memref<1x342x8xf32, #tpu.memory_space<vmem>>, vector<1x144x8xf32>
    %5 = vector.shape_cast %4 : vector<1x144x8xf32> to vector<144x8xf32>
    %6 = arith.truncf %5 : vector<144x8xf32> to vector<144x8xbf16>
    %c0_2 = arith.constant 0 : index
    %c0_3 = arith.constant 0 : index
    %c0_4 = arith.constant 0 : index
    %7 = vector.load %arg3[%c0_2, %c0_3, %c0_4] : memref<9x8x128xbf16, #tpu.memory_space<vmem>>, vector<1x8x128xbf16>
    %8 = vector.shape_cast %7 : vector<1x8x128xbf16> to vector<8x128xbf16>
    %cst = arith.constant dense<0.000000e+00> : vector<144x128xf32>
    %9 = tpu.matmul %6, %8, %cst {dimension_numbers = #tpu.dot_dimension_numbers<[1], [0], [0], [1], [0, 0, 1, 1], [], []>} : vector<144x8xbf16>, vector<8x128xbf16>, vector<144x128xf32> -> vector<144x128xf32>
    %c0_i32_5 = arith.constant 0 : i32
    %10 = arith.addi %0, %c0_i32_5 : i32
    %c1_i32 = arith.constant 1 : i32
    %11 = arith.addi %10, %c1_i32 : i32
    %c0_6 = arith.constant 0 : index
    %12 = arith.index_cast %11 : i32 to index
    %c0_7 = arith.constant 0 : index
    %13 = vector.load %arg2[%c0_6, %12, %c0_7] : memref<1x342x8xf32, #tpu.memory_space<vmem>>, vector<1x144x8xf32>
    %14 = vector.shape_cast %13 : vector<1x144x8xf32> to vector<144x8xf32>
    %15 = arith.truncf %14 : vector<144x8xf32> to vector<144x8xbf16>
    %c1 = arith.constant 1 : index
    %c0_8 = arith.constant 0 : index
    %c0_9 = arith.constant 0 : index
    %16 = vector.load %arg3[%c1, %c0_8, %c0_9] : memref<9x8x128xbf16, #tpu.memory_space<vmem>>, vector<1x8x128xbf16>
    %17 = vector.shape_cast %16 : vector<1x8x128xbf16> to vector<8x128xbf16>
    %cst_10 = arith.constant dense<0.000000e+00> : vector<144x128xf32>
    %18 = tpu.matmul %15, %17, %cst_10 {dimension_numbers = #tpu.dot_dimension_numbers<[1], [0], [0], [1], [0, 0, 1, 1], [], []>} : vector<144x8xbf16>, vector<8x128xbf16>, vector<144x128xf32> -> vector<144x128xf32>
    %19 = arith.addf %9, %18 : vector<144x128xf32>
    %c0_i32_11 = arith.constant 0 : i32
    %20 = arith.addi %0, %c0_i32_11 : i32
    %c2_i32 = arith.constant 2 : i32
    %21 = arith.addi %20, %c2_i32 : i32
    %c0_12 = arith.constant 0 : index
    %22 = arith.index_cast %21 : i32 to index
    %c0_13 = arith.constant 0 : index
    %23 = vector.load %arg2[%c0_12, %22, %c0_13] : memref<1x342x8xf32, #tpu.memory_space<vmem>>, vector<1x144x8xf32>
    %24 = vector.shape_cast %23 : vector<1x144x8xf32> to vector<144x8xf32>
    %25 = arith.truncf %24 : vector<144x8xf32> to vector<144x8xbf16>
    %c2 = arith.constant 2 : index
    %c0_14 = arith.constant 0 : index
    %c0_15 = arith.constant 0 : index
    %26 = vector.load %arg3[%c2, %c0_14, %c0_15] : memref<9x8x128xbf16, #tpu.memory_space<vmem>>, vector<1x8x128xbf16>
    %27 = vector.shape_cast %26 : vector<1x8x128xbf16> to vector<8x128xbf16>
    %cst_16 = arith.constant dense<0.000000e+00> : vector<144x128xf32>
    %28 = tpu.matmul %25, %27, %cst_16 {dimension_numbers = #tpu.dot_dimension_numbers<[1], [0], [0], [1], [0, 0, 1, 1], [], []>} : vector<144x8xbf16>, vector<8x128xbf16>, vector<144x128xf32> -> vector<144x128xf32>
    %29 = arith.addf %19, %28 : vector<144x128xf32>
    %c18_i32 = arith.constant 18 : i32
    %30 = arith.addi %0, %c18_i32 : i32
    %c0_i32_17 = arith.constant 0 : i32
    %31 = arith.addi %30, %c0_i32_17 : i32
    %c0_18 = arith.constant 0 : index
    %32 = arith.index_cast %31 : i32 to index
    %c0_19 = arith.constant 0 : index
    %33 = vector.load %arg2[%c0_18, %32, %c0_19] : memref<1x342x8xf32, #tpu.memory_space<vmem>>, vector<1x144x8xf32>
    %34 = vector.shape_cast %33 : vector<1x144x8xf32> to vector<144x8xf32>
    %35 = arith.truncf %34 : vector<144x8xf32> to vector<144x8xbf16>
    %c3 = arith.constant 3 : index
    %c0_20 = arith.constant 0 : index
    %c0_21 = arith.constant 0 : index
    %36 = vector.load %arg3[%c3, %c0_20, %c0_21] : memref<9x8x128xbf16, #tpu.memory_space<vmem>>, vector<1x8x128xbf16>
    %37 = vector.shape_cast %36 : vector<1x8x128xbf16> to vector<8x128xbf16>
    %cst_22 = arith.constant dense<0.000000e+00> : vector<144x128xf32>
    %38 = tpu.matmul %35, %37, %cst_22 {dimension_numbers = #tpu.dot_dimension_numbers<[1], [0], [0], [1], [0, 0, 1, 1], [], []>} : vector<144x8xbf16>, vector<8x128xbf16>, vector<144x128xf32> -> vector<144x128xf32>
    %39 = arith.addf %29, %38 : vector<144x128xf32>
    %c18_i32_23 = arith.constant 18 : i32
    %40 = arith.addi %0, %c18_i32_23 : i32
    %c1_i32_24 = arith.constant 1 : i32
    %41 = arith.addi %40, %c1_i32_24 : i32
    %c0_25 = arith.constant 0 : index
    %42 = arith.index_cast %41 : i32 to index
    %c0_26 = arith.constant 0 : index
    %43 = vector.load %arg2[%c0_25, %42, %c0_26] : memref<1x342x8xf32, #tpu.memory_space<vmem>>, vector<1x144x8xf32>
    %44 = vector.shape_cast %43 : vector<1x144x8xf32> to vector<144x8xf32>
    %45 = arith.truncf %44 : vector<144x8xf32> to vector<144x8xbf16>
    %c4 = arith.constant 4 : index
    %c0_27 = arith.constant 0 : index
    %c0_28 = arith.constant 0 : index
    %46 = vector.load %arg3[%c4, %c0_27, %c0_28] : memref<9x8x128xbf16, #tpu.memory_space<vmem>>, vector<1x8x128xbf16>
    %47 = vector.shape_cast %46 : vector<1x8x128xbf16> to vector<8x128xbf16>
    %cst_29 = arith.constant dense<0.000000e+00> : vector<144x128xf32>
    %48 = tpu.matmul %45, %47, %cst_29 {dimension_numbers = #tpu.dot_dimension_numbers<[1], [0], [0], [1], [0, 0, 1, 1], [], []>} : vector<144x8xbf16>, vector<8x128xbf16>, vector<144x128xf32> -> vector<144x128xf32>
    %49 = arith.addf %39, %48 : vector<144x128xf32>
    %c18_i32_30 = arith.constant 18 : i32
    %50 = arith.addi %0, %c18_i32_30 : i32
    %c2_i32_31 = arith.constant 2 : i32
    %51 = arith.addi %50, %c2_i32_31 : i32
    %c0_32 = arith.constant 0 : index
    %52 = arith.index_cast %51 : i32 to index
    %c0_33 = arith.constant 0 : index
    %53 = vector.load %arg2[%c0_32, %52, %c0_33] : memref<1x342x8xf32, #tpu.memory_space<vmem>>, vector<1x144x8xf32>
    %54 = vector.shape_cast %53 : vector<1x144x8xf32> to vector<144x8xf32>
    %55 = arith.truncf %54 : vector<144x8xf32> to vector<144x8xbf16>
    %c5 = arith.constant 5 : index
    %c0_34 = arith.constant 0 : index
    %c0_35 = arith.constant 0 : index
    %56 = vector.load %arg3[%c5, %c0_34, %c0_35] : memref<9x8x128xbf16, #tpu.memory_space<vmem>>, vector<1x8x128xbf16>
    %57 = vector.shape_cast %56 : vector<1x8x128xbf16> to vector<8x128xbf16>
    %cst_36 = arith.constant dense<0.000000e+00> : vector<144x128xf32>
    %58 = tpu.matmul %55, %57, %cst_36 {dimension_numbers = #tpu.dot_dimension_numbers<[1], [0], [0], [1], [0, 0, 1, 1], [], []>} : vector<144x8xbf16>, vector<8x128xbf16>, vector<144x128xf32> -> vector<144x128xf32>
    %59 = arith.addf %49, %58 : vector<144x128xf32>
    %c36_i32 = arith.constant 36 : i32
    %60 = arith.addi %0, %c36_i32 : i32
    %c0_i32_37 = arith.constant 0 : i32
    %61 = arith.addi %60, %c0_i32_37 : i32
    %c0_38 = arith.constant 0 : index
    %62 = arith.index_cast %61 : i32 to index
    %c0_39 = arith.constant 0 : index
    %63 = vector.load %arg2[%c0_38, %62, %c0_39] : memref<1x342x8xf32, #tpu.memory_space<vmem>>, vector<1x144x8xf32>
    %64 = vector.shape_cast %63 : vector<1x144x8xf32> to vector<144x8xf32>
    %65 = arith.truncf %64 : vector<144x8xf32> to vector<144x8xbf16>
    %c6 = arith.constant 6 : index
    %c0_40 = arith.constant 0 : index
    %c0_41 = arith.constant 0 : index
    %66 = vector.load %arg3[%c6, %c0_40, %c0_41] : memref<9x8x128xbf16, #tpu.memory_space<vmem>>, vector<1x8x128xbf16>
    %67 = vector.shape_cast %66 : vector<1x8x128xbf16> to vector<8x128xbf16>
    %cst_42 = arith.constant dense<0.000000e+00> : vector<144x128xf32>
    %68 = tpu.matmul %65, %67, %cst_42 {dimension_numbers = #tpu.dot_dimension_numbers<[1], [0], [0], [1], [0, 0, 1, 1], [], []>} : vector<144x8xbf16>, vector<8x128xbf16>, vector<144x128xf32> -> vector<144x128xf32>
    %69 = arith.addf %59, %68 : vector<144x128xf32>
    %c36_i32_43 = arith.constant 36 : i32
    %70 = arith.addi %0, %c36_i32_43 : i32
    %c1_i32_44 = arith.constant 1 : i32
    %71 = arith.addi %70, %c1_i32_44 : i32
    %c0_45 = arith.constant 0 : index
    %72 = arith.index_cast %71 : i32 to index
    %c0_46 = arith.constant 0 : index
    %73 = vector.load %arg2[%c0_45, %72, %c0_46] : memref<1x342x8xf32, #tpu.memory_space<vmem>>, vector<1x144x8xf32>
    %74 = vector.shape_cast %73 : vector<1x144x8xf32> to vector<144x8xf32>
    %75 = arith.truncf %74 : vector<144x8xf32> to vector<144x8xbf16>
    %c7 = arith.constant 7 : index
    %c0_47 = arith.constant 0 : index
    %c0_48 = arith.constant 0 : index
    %76 = vector.load %arg3[%c7, %c0_47, %c0_48] : memref<9x8x128xbf16, #tpu.memory_space<vmem>>, vector<1x8x128xbf16>
    %77 = vector.shape_cast %76 : vector<1x8x128xbf16> to vector<8x128xbf16>
    %cst_49 = arith.constant dense<0.000000e+00> : vector<144x128xf32>
    %78 = tpu.matmul %75, %77, %cst_49 {dimension_numbers = #tpu.dot_dimension_numbers<[1], [0], [0], [1], [0, 0, 1, 1], [], []>} : vector<144x8xbf16>, vector<8x128xbf16>, vector<144x128xf32> -> vector<144x128xf32>
    %79 = arith.addf %69, %78 : vector<144x128xf32>
    %c36_i32_50 = arith.constant 36 : i32
    %80 = arith.addi %0, %c36_i32_50 : i32
    %c2_i32_51 = arith.constant 2 : i32
    %81 = arith.addi %80, %c2_i32_51 : i32
    %c0_52 = arith.constant 0 : index
    %82 = arith.index_cast %81 : i32 to index
    %c0_53 = arith.constant 0 : index
    %83 = vector.load %arg2[%c0_52, %82, %c0_53] : memref<1x342x8xf32, #tpu.memory_space<vmem>>, vector<1x144x8xf32>
    %84 = vector.shape_cast %83 : vector<1x144x8xf32> to vector<144x8xf32>
    %85 = arith.truncf %84 : vector<144x8xf32> to vector<144x8xbf16>
    %c8 = arith.constant 8 : index
    %c0_54 = arith.constant 0 : index
    %c0_55 = arith.constant 0 : index
    %86 = vector.load %arg3[%c8, %c0_54, %c0_55] : memref<9x8x128xbf16, #tpu.memory_space<vmem>>, vector<1x8x128xbf16>
    %87 = vector.shape_cast %86 : vector<1x8x128xbf16> to vector<8x128xbf16>
    %cst_56 = arith.constant dense<0.000000e+00> : vector<144x128xf32>
    %88 = tpu.matmul %85, %87, %cst_56 {dimension_numbers = #tpu.dot_dimension_numbers<[1], [0], [0], [1], [0, 0, 1, 1], [], []>} : vector<144x8xbf16>, vector<8x128xbf16>, vector<144x128xf32> -> vector<144x128xf32>
    %89 = arith.addf %79, %88 : vector<144x128xf32>
    %c0_57 = arith.constant 0 : index
    %c0_58 = arith.constant 0 : index
    %90 = vector.load %arg4[%c0_57, %c0_58] : memref<1x128xf32, #tpu.memory_space<vmem>>, vector<1x128xf32>
    %91 = vector.broadcast %90 : vector<1x128xf32> to vector<144x128xf32>
    %92 = arith.addf %89, %91 : vector<144x128xf32>
    %c0_59 = arith.constant 0 : index
    %c0_60 = arith.constant 0 : index
    %c0_61 = arith.constant 0 : index
    %93 = vector.load %arg6[%c0_59, %c0_60, %c0_61] : memref<1x144x128xf32, #tpu.memory_space<vmem>>, vector<1x144x128xf32>
    %94 = vector.shape_cast %93 : vector<1x144x128xf32> to vector<144x128xf32>
    %95 = vector.shape_cast %92 : vector<144x128xf32> to vector<1x144x128xf32>
    tpu.vector_store %arg6[%c0_59, %c0_60, %c0_61], %95 {strides = array<i32>} : memref<1x144x128xf32, #tpu.memory_space<vmem>>, vector<1x144x128xf32>,
    %c0_62 = arith.constant 0 : index
    %c0_63 = arith.constant 0 : index
    %96 = vector.load %arg5[%c0_62, %c0_63] : memref<144x1xf32, #tpu.memory_space<vmem>>, vector<144x1xf32>
    %97 = vector.broadcast %96 : vector<144x1xf32> to vector<144x128xf32>
    %98 = arith.mulf %92, %97 : vector<144x128xf32>
    %cst_64 = arith.constant dense<0.000000e+00> : vector<128xf32>
    %99 = vector.multi_reduction <add>, %98, %cst_64 [0] : vector<144x128xf32> to vector<128xf32>
    %100 = vector.shape_cast %99 : vector<128xf32> to vector<1x128xf32>
    %c0_65 = arith.constant 0 : index
    %c0_66 = arith.constant 0 : index
    %c0_67 = arith.constant 0 : index
    %c0_68 = arith.constant 0 : index
    %101 = vector.load %arg7[%c0_65, %c0_66, %c0_67, %c0_68] : memref<1x1x1x128xf32, #tpu.memory_space<vmem>>, vector<1x1x1x128xf32>
    %102 = vector.shape_cast %101 : vector<1x1x1x128xf32> to vector<1x128xf32>
    %103 = vector.shape_cast %100 : vector<1x128xf32> to vector<1x1x1x128xf32>
    tpu.vector_store %arg7[%c0_65, %c0_66, %c0_67, %c0_68], %103 {strides = array<i32>} : memref<1x1x1x128xf32, #tpu.memory_space<vmem>>, vector<1x1x1x128xf32>,
    %104 = arith.mulf %98, %98 : vector<144x128xf32>
    %cst_69 = arith.constant dense<0.000000e+00> : vector<128xf32>
    %105 = vector.multi_reduction <add>, %104, %cst_69 [0] : vector<144x128xf32> to vector<128xf32>
    %106 = vector.shape_cast %105 : vector<128xf32> to vector<1x128xf32>
    %c0_70 = arith.constant 0 : index
    %c0_71 = arith.constant 0 : index
    %c0_72 = arith.constant 0 : index
    %c0_73 = arith.constant 0 : index
    %107 = vector.load %arg8[%c0_70, %c0_71, %c0_72, %c0_73] : memref<1x1x1x128xf32, #tpu.memory_space<vmem>>, vector<1x1x1x128xf32>
    %108 = vector.shape_cast %107 : vector<1x1x1x128xf32> to vector<1x128xf32>
    %109 = vector.shape_cast %106 : vector<1x128xf32> to vector<1x1x1x128xf32>
    tpu.vector_store %arg8[%c0_70, %c0_71, %c0_72, %c0_73], %109 {strides = array<i32>} : memref<1x1x1x128xf32, #tpu.memory_space<vmem>>, vector<1x1x1x128xf32>,
    return
  }
  func.func @transform_0(%arg0: i32, %arg1: i32) -> (i32, i32, i32) {
    %c0_i32 = arith.constant 0 : i32
    %c0_i32_0 = arith.constant 0 : i32
    %c0_i32_1 = arith.constant 0 : i32
    return %arg0, %c0_i32, %c0_i32_0 : i32, i32, i32
  }
  func.func @transform_1(%arg0: i32, %arg1: i32) -> (i32, i32, i32) {
    %c0_i32 = arith.constant 0 : i32
    %c0_i32_0 = arith.constant 0 : i32
    %c0_i32_1 = arith.constant 0 : i32
    %c0_i32_2 = arith.constant 0 : i32
    return %c0_i32, %c0_i32_0, %c0_i32_1 : i32, i32, i32
  }
  func.func @transform_2(%arg0: i32, %arg1: i32) -> (i32, i32) {
    %c0_i32 = arith.constant 0 : i32
    %c0_i32_0 = arith.constant 0 : i32
    %c0_i32_1 = arith.constant 0 : i32
    return %c0_i32, %c0_i32_0 : i32, i32
  }
  func.func @transform_3(%arg0: i32, %arg1: i32) -> (i32, i32) {
    %c0_i32 = arith.constant 0 : i32
    %c0_i32_0 = arith.constant 0 : i32
    %c0_i32_1 = arith.constant 0 : i32
    return %c0_i32, %c0_i32_0 : i32, i32
  }
  func.func @transform_4(%arg0: i32, %arg1: i32) -> (i32, i32, i32) {
    %c0_i32 = arith.constant 0 : i32
    %c0_i32_0 = arith.constant 0 : i32
    return %arg0, %arg1, %c0_i32 : i32, i32, i32
  }
  func.func @transform_5(%arg0: i32, %arg1: i32) -> (i32, i32, i32, i32) {
    %c0_i32 = arith.constant 0 : i32
    %c0_i32_0 = arith.constant 0 : i32
    %c0_i32_1 = arith.constant 0 : i32
    return %arg0, %arg1, %c0_i32, %c0_i32_0 : i32, i32, i32, i32
  }
  func.func @transform_6(%arg0: i32, %arg1: i32) -> (i32, i32, i32, i32) {
    %c0_i32 = arith.constant 0 : i32
    %c0_i32_0 = arith.constant 0 : i32
    %c0_i32_1 = arith.constant 0 : i32
    return %arg0, %arg1, %c0_i32, %c0_i32_0 : i32, i32, i32, i32
  }
}

</mosaic_0001>

<llo_original>
// kernel: middle_block.5
$region0: #{middle_block.5}
  #allocation0 [shape = 'u32[]', space=smem, size = 0x4, offset = 0x4, fixed_abs, tag = 'smem constant byte address 0x4 - core index']
  #allocation1 [shape = 'u32[144,128]{1,0:T(1,128)}', space=vmem, size = 0x12000, scoped, tag = 'internal scratch']
  %s0 = inlined_call_operand.vmem [shape: f32[576,128], index: 0, kind: input, shape index: {}]
  %s1 = inlined_call_operand.vmem [shape: f32[1,128], index: 1, kind: input, shape index: {}]
  %s2 = inlined_call_operand.vmem [shape: f32[1,128], index: 2, kind: input, shape index: {}]
  %s3 = inlined_call_operand.vmem [shape: f32[576,128], index: 3, kind: output, shape index: {}]
  %s4 = sld [smem:[#allocation0]]
  $region45: #{middle_block.5} parent=0
    _
  %s6 = ssub.s32 1, %s4
  %s7 = scalar_select 0, %s6, %s4
  loop: start=0, step=1, limit=6
  $region2: #{middle_block.5} parent=0 // loop_pre_header
    _
  $region3: #{middle_block.5} parent=0 // loop_header
    %s9 = sphi 0, %s13
    %p10 = scmp.ge.s32.totalorder %s9, 6
    %s19 = sphi 0, %s21
    %s22 = sphi 0, %s19
    %s23 = sphi 0, %s22
    %s39 = sphi 0, %s23
    %s43 = sphi 0, %s43
    %s45 = sphi 0, %s43
    %s46 = sphi 0, %s45
    %s60 = sphi 0, %s46
    %s64 = sphi 0, %s64
    %s66 = sphi 0, %s64
    %s67 = sphi 0, %s66
    %s81 = sphi 0, %s67
    %s87 = sphi 0, %s89
    %s90 = sphi 0, %s87
    %s91 = sphi 0, %s90
    %s107 = sphi 0, %s91
  $region4: #{middle_block.5} parent=0 // loop_header_branch
    %12 = sbr.rel (%p10) target = $region8
  $region5: #{middle_block.5} parent=0 // loop_body
    %s14 = ssub.s32 %s9, 1
    %s15 = ssub.s32 %s9, 2
    %s16 = sadd.s32 %s9, 1
    %s17 = ssub.s32 %s9, %s16
    %p18 = scmp.eq.s32.totalorder %s17, 0
    %s20 = sadd.s32 %s19, 1
    %s21 = scalar_select %p18, %s19, %s20
    %p24 = pneg %p18
    %p25 = scmp.eq.s32.totalorder %s9, 3
    %p26 = por %p24, %p25
    %p27 = scmp.ne.s32.totalorder %s19, %s22
    %p28 = scmp.eq.s32.totalorder %s9, 0
    %p29 = por %p27, %p28
    %p30 = scmp.ne.s32.totalorder %s19, %s22
    %p31 = scmp.eq.s32.totalorder %s14, 3
    %p32 = por %p30, %p31
    %p33 = scmp.ne.s32.totalorder %s22, %s23
    %p34 = scmp.eq.s32.totalorder %s14, 0
    %p35 = por %p33, %p34
    %p36 = scmp.ne.s32.totalorder %s22, %s23
    %p37 = scmp.eq.s32.totalorder %s15, 3
    %p38 = por %p36, %p37
    %p40 = scmp.ne.s32.totalorder %s23, %s39
    %p41 = scmp.eq.s32.totalorder %s15, 0
    %p42 = por %p40, %p41
    %s44 = sadd.s32 %s43, 1
    %p47 = scmp.eq.s32.totalorder %s9, 3
    %p48 = scmp.ne.s32.totalorder %s43, %s45
    %p49 = scmp.eq.s32.totalorder %s9, 0
    %p50 = por %p48, %p49
    %p51 = scmp.ne.s32.totalorder %s43, %s45
    %p52 = scmp.eq.s32.totalorder %s14, 3
    %p53 = por %p51, %p52
    %p54 = scmp.ne.s32.totalorder %s45, %s46
    %p55 = scmp.eq.s32.totalorder %s14, 0
    %p56 = por %p54, %p55
    %p57 = scmp.ne.s32.totalorder %s45, %s46
    %p58 = scmp.eq.s32.totalorder %s15, 3
    %p59 = por %p57, %p58
    %p61 = scmp.ne.s32.totalorder %s46, %s60
    %p62 = scmp.eq.s32.totalorder %s15, 0
    %p63 = por %p61, %p62
    %s65 = sadd.s32 %s64, 1
    %p68 = scmp.eq.s32.totalorder %s9, 3
    %p69 = scmp.ne.s32.totalorder %s64, %s66
    %p70 = scmp.eq.s32.totalorder %s9, 0
    %p71 = por %p69, %p70
    %p72 = scmp.ne.s32.totalorder %s64, %s66
    %p73 = scmp.eq.s32.totalorder %s14, 3
    %p74 = por %p72, %p73
    %p75 = scmp.ne.s32.totalorder %s66, %s67
    %p76 = scmp.eq.s32.totalorder %s14, 0
    %p77 = por %p75, %p76
    %p78 = scmp.ne.s32.totalorder %s66, %s67
    %p79 = scmp.eq.s32.totalorder %s15, 3
    %p80 = por %p78, %p79
    %p82 = scmp.ne.s32.totalorder %s67, %s81
    %p83 = scmp.eq.s32.totalorder %s15, 0
    %p84 = por %p82, %p83
    %s85 = ssub.s32 %s9, %s16
    %p86 = scmp.eq.s32.totalorder %s85, 0
    %s88 = sadd.s32 %s87, 1
    %s89 = scalar_select %p86, %s87, %s88
    %p92 = pneg %p86
    %p93 = scmp.eq.s32.totalorder %s9, 3
    %p94 = por %p92, %p93
    %p95 = scmp.ne.s32.totalorder %s87, %s90
    %p96 = scmp.eq.s32.totalorder %s9, 0
    %p97 = por %p95, %p96
    %p98 = scmp.ne.s32.totalorder %s87, %s90
    %p99 = scmp.eq.s32.totalorder %s14, 3
    %p100 = por %p98, %p99
    %p101 = scmp.ne.s32.totalorder %s90, %s91
    %p102 = scmp.eq.s32.totalorder %s14, 0
    %p103 = por %p101, %p102
    %p104 = scmp.ne.s32.totalorder %s90, %s91
    %p105 = scmp.eq.s32.totalorder %s15, 3
    %p106 = por %p104, %p105
    %p108 = scmp.ne.s32.totalorder %s91, %s107
    %p109 = scmp.eq.s32.totalorder %s15, 0
    %p110 = por %p108, %p109
    %p111 = scmp.le.s32.totalorder 1, %s9
    %p112 = scmp.lt.s32.totalorder %s9, 5
    %p113 = pnand %p111, %p112
    %p114 = pneg %p113
    // Predicated region
    $region9: #{middle_block.5} parent=5 // pred_check
      _
    $region10: #{middle_block.5} parent=5 // pred_check_branch
      %116 = sbr.rel (%p113) target = $region12
    $region11: #{middle_block.5} parent=5 // pred_region
      %s117 = ssub.s32 %s9, 1
      // Predicated region
      $region13: #{middle_block.5} parent=11 // pred_check
        %p118 = pneg %p56
      $region14: #{middle_block.5} parent=11 // pred_check_branch
        %120 = sbr.rel (%p118) target = $region16
      $region15: #{middle_block.5} parent=11 // pred_region
        _
      $region16: #{middle_block.5} parent=11 // pred_fallthru
        _
      // Predicated region
      $region17: #{middle_block.5} parent=11 // pred_check
        %p121 = pneg %p77
      $region18: #{middle_block.5} parent=11 // pred_check_branch
        %123 = sbr.rel (%p121) target = $region20
      $region19: #{middle_block.5} parent=11 // pred_region
        _
      $region20: #{middle_block.5} parent=11 // pred_fallthru
        _
    $region12: #{middle_block.5} parent=5 // pred_fallthru
      _
    %p124 = scmp.lt.s32.totalorder %s9, 4
    // Predicated region
    $region21: #{middle_block.5} parent=5 // pred_check
      %p125 = pneg %p124
    $region22: #{middle_block.5} parent=5 // pred_check_branch
      %127 = sbr.rel (%p125) target = $region24
    $region23: #{middle_block.5} parent=5 // pred_region
      // Predicated region
      $region25: #{middle_block.5} parent=23 // pred_check
        %p128 = pneg %p29
      $region26: #{middle_block.5} parent=23 // pred_check_branch
        %130 = sbr.rel (%p128) target = $region28
      $region27: #{middle_block.5} parent=23 // pred_region
        %s131 = smul.u32 18, %s9
        %p132 = scmp.lt.s32.totalorder %s131, 71
        %s133 = scalar_select %p132, %s131, 71
        %s134 = smul.addr %s133, 8
        %s135 = scalar_lea.vmem %s0, %s134
        %s136 = smul.u32 18, %s9
      $region28: #{middle_block.5} parent=23 // pred_fallthru
        _
    $region24: #{middle_block.5} parent=5 // pred_fallthru
      _
    %p137 = scmp.le.s32.totalorder 1, %s9
    %p138 = scmp.lt.s32.totalorder %s9, 5
    %p139 = pnand %p137, %p138
    %p140 = pneg %p139
    // Predicated region
    $region29: #{middle_block.5} parent=5 // pred_check
      _
    $region30: #{middle_block.5} parent=5 // pred_check_branch
      %142 = sbr.rel (%p139) target = $region32
    $region31: #{middle_block.5} parent=5 // pred_region
      %s143 = ssub.s32 %s9, 1
      %s144 = smul.u32 18, %s14
      %p145 = scmp.lt.s32.totalorder %s144, 71
      %s146 = scalar_select %p145, %s144, 71
      %s147 = smul.addr %s146, 8
      %s148 = scalar_lea.vmem %s0, %s147
      %p149 = pneg %p35
      %p150 = pneg %p32
      %p151 = pneg %p56
      %p152 = pneg %p53
      %p153 = pneg %p77
      %p154 = pneg %p74
      %p155 = pneg %p103
      %p156 = pneg %p100
      %s157 = smul.u32 18, %s14
      %p158 = scmp.lt.s32.totalorder %s157, 71
      %s159 = scalar_select %p158, %s157, 71
      %s160 = smul.addr %s159, 8
      %s161 = scalar_lea.vmem %s3, %s160
      %s162 = smul.u32 18, %s14
      %p163 = scmp.lt.s32.totalorder %s162, 71
      %s164 = scalar_select %p163, %s162, 71
      %s165 = smul.addr %s164, 8
      %s166 = scalar_lea.vmem %s0, %s165
      %s167 = smul.u32 18, %s14
      %s168 = smul.u32 18, %s14
      %p169 = scmp.lt.s32.totalorder %s168, 71
      %s170 = scalar_select %p169, %s168, 71
      %s171 = smul.addr %s170, 8
      %s172 = scalar_lea.vmem %s3, %s171
      %s173 = smul.u32 18, %s14
      %v174 = vld [vmem:[%s166] sm:$0xff]
      %v175 = vld [vmem:[%s166 + $0x8] sm:$0xff]
      %v176 = vld [vmem:[%s166 + $0x10] sm:$0xff]
      %v177 = vld [vmem:[%s166 + $0x18] sm:$0xff]
      %v178 = vld [vmem:[%s166 + $0x20] sm:$0xff]
      %v179 = vld [vmem:[%s166 + $0x28] sm:$0xff]
      %v180 = vld [vmem:[%s166 + $0x30] sm:$0xff]
      %v181 = vld [vmem:[%s166 + $0x38] sm:$0xff]
      %v182 = vld [vmem:[%s166 + $0x40] sm:$0xff]
      %v183 = vld [vmem:[%s166 + $0x48] sm:$0xff]
      %v184 = vld [vmem:[%s166 + $0x50] sm:$0xff]
      %v185 = vld [vmem:[%s166 + $0x58] sm:$0xff]
      %v186 = vld [vmem:[%s166 + $0x60] sm:$0xff]
      %v187 = vld [vmem:[%s166 + $0x68] sm:$0xff]
      %v188 = vld [vmem:[%s166 + $0x70] sm:$0xff]
      %v189 = vld [vmem:[%s166 + $0x78] sm:$0xff]
      %v190 = vld [vmem:[%s166 + $0x80] sm:$0xff]
      %v191 = vld [vmem:[%s166 + $0x88] sm:$0xff]
      %v192 = vld [vmem:[%s1] sm:$0x1]
      %v194 = vlaneseq
      %v195 = vshrl.u32 %v194, 7
      %v196 = vsub.s32 0, %v195
      %v197 = vrot.slane %v192, %v196
      %v199 = vmul.f32 %v174, %v197
      %v200 = vmul.f32 %v175, %v197
      %v201 = vmul.f32 %v176, %v197
      %v202 = vmul.f32 %v177, %v197
      %v203 = vmul.f32 %v178, %v197
      %v204 = vmul.f32 %v179, %v197
      %v205 = vmul.f32 %v180, %v197
      %v206 = vmul.f32 %v181, %v197
      %v207 = vmul.f32 %v182, %v197
      %v208 = vmul.f32 %v183, %v197
      %v209 = vmul.f32 %v184, %v197
      %v210 = vmul.f32 %v185, %v197
      %v211 = vmul.f32 %v186, %v197
      %v212 = vmul.f32 %v187, %v197
      %v213 = vmul.f32 %v188, %v197
      %v214 = vmul.f32 %v189, %v197
      %v215 = vmul.f32 %v190, %v197
      %v216 = vmul.f32 %v191, %v197
      %v217 = vld [vmem:[%s2] sm:$0x1]
      %v219 = vlaneseq
      %v220 = vshrl.u32 %v219, 7
      %v221 = vsub.s32 0, %v220
      %v222 = vrot.slane %v217, %v221
      %v224 = vadd.f32 %v199, %v222
      %v225 = vadd.f32 %v200, %v222
      %v226 = vadd.f32 %v201, %v222
      %v227 = vadd.f32 %v202, %v222
      %v228 = vadd.f32 %v203, %v222
      %v229 = vadd.f32 %v204, %v222
      %v230 = vadd.f32 %v205, %v222
      %v231 = vadd.f32 %v206, %v222
      %v232 = vadd.f32 %v207, %v222
      %v233 = vadd.f32 %v208, %v222
      %v234 = vadd.f32 %v209, %v222
      %v235 = vadd.f32 %v210, %v222
      %v236 = vadd.f32 %v211, %v222
      %v237 = vadd.f32 %v212, %v222
      %v238 = vadd.f32 %v213, %v222
      %v239 = vadd.f32 %v214, %v222
      %v240 = vadd.f32 %v215, %v222
      %v241 = vadd.f32 %v216, %v222
      %v242 = vmax.f32 %v224, 0.0
      %v243 = vmax.f32 %v225, 0.0
      %v244 = vmax.f32 %v226, 0.0
      %v245 = vmax.f32 %v227, 0.0
      %v246 = vmax.f32 %v228, 0.0
      %v247 = vmax.f32 %v229, 0.0
      %v248 = vmax.f32 %v230, 0.0
      %v249 = vmax.f32 %v231, 0.0
      %v250 = vmax.f32 %v232, 0.0
      %v251 = vmax.f32 %v233, 0.0
      %v252 = vmax.f32 %v234, 0.0
      %v253 = vmax.f32 %v235, 0.0
      %v254 = vmax.f32 %v236, 0.0
      %v255 = vmax.f32 %v237, 0.0
      %v256 = vmax.f32 %v238, 0.0
      %v257 = vmax.f32 %v239, 0.0
      %v258 = vmax.f32 %v240, 0.0
      %v259 = vmax.f32 %v241, 0.0
      %260 = vst [vmem:[%s172] sm:$0xff] %v242
      %261 = vst [vmem:[%s172 + $0x8] sm:$0xff] %v243
      %262 = vst [vmem:[%s172 + $0x10] sm:$0xff] %v244
      %263 = vst [vmem:[%s172 + $0x18] sm:$0xff] %v245
      %264 = vst [vmem:[%s172 + $0x20] sm:$0xff] %v246
      %265 = vst [vmem:[%s172 + $0x28] sm:$0xff] %v247
      %266 = vst [vmem:[%s172 + $0x30] sm:$0xff] %v248
      %267 = vst [vmem:[%s172 + $0x38] sm:$0xff] %v249
      %268 = vst [vmem:[%s172 + $0x40] sm:$0xff] %v250
      %269 = vst [vmem:[%s172 + $0x48] sm:$0xff] %v251
      %270 = vst [vmem:[%s172 + $0x50] sm:$0xff] %v252
      %271 = vst [vmem:[%s172 + $0x58] sm:$0xff] %v253
      %272 = vst [vmem:[%s172 + $0x60] sm:$0xff] %v254
      %273 = vst [vmem:[%s172 + $0x68] sm:$0xff] %v255
      %274 = vst [vmem:[%s172 + $0x70] sm:$0xff] %v256
      %275 = vst [vmem:[%s172 + $0x78] sm:$0xff] %v257
      %276 = vst [vmem:[%s172 + $0x80] sm:$0xff] %v258
      %277 = vst [vmem:[%s172 + $0x88] sm:$0xff] %v259
      %s278 = smul.u32 18, %s14
      %p279 = scmp.lt.s32.totalorder %s278, 71
      %s280 = scalar_select %p279, %s278, 71
      %s281 = smul.addr %s280, 8
      %s282 = scalar_lea.vmem %s3, %s281
      // Predicated region
      $region33: #{middle_block.5} parent=31 // pred_check
        %p283 = pneg %p100
      $region34: #{middle_block.5} parent=31 // pred_check_branch
        %285 = sbr.rel (%p283) target = $region36
      $region35: #{middle_block.5} parent=31 // pred_region
        %s286 = smul.u32 18, %s14
      $region36: #{middle_block.5} parent=31 // pred_fallthru
        _
    $region32: #{middle_block.5} parent=5 // pred_fallthru
      _
    %p287 = scmp.le.s32.totalorder 2, %s9
    // Predicated region
    $region37: #{middle_block.5} parent=5 // pred_check
      %p288 = pneg %p287
    $region38: #{middle_block.5} parent=5 // pred_check_branch
      %290 = sbr.rel (%p288) target = $region40
    $region39: #{middle_block.5} parent=5 // pred_region
      %s291 = ssub.s32 %s9, 2
      // Predicated region
      $region41: #{middle_block.5} parent=39 // pred_check
        %p292 = pneg %p106
      $region42: #{middle_block.5} parent=39 // pred_check_branch
        %294 = sbr.rel (%p292) target = $region44
      $region43: #{middle_block.5} parent=39 // pred_region
        %s295 = smul.u32 18, %s15
        %p296 = scmp.lt.s32.totalorder %s295, 71
        %s297 = scalar_select %p296, %s295, 71
        %s298 = smul.addr %s297, 8
        %s299 = scalar_lea.vmem %s3, %s298
      $region44: #{middle_block.5} parent=39 // pred_fallthru
        _
    $region40: #{middle_block.5} parent=5 // pred_fallthru
      _
  $region6: #{middle_block.5} parent=0 // loop_footer
    %s13 = sadd.s32 1, %s9
  $region7: #{middle_block.5} parent=0 // loop_footer_branch
    %8 = sbr.rel target = $region3
  $region8: #{middle_block.5} parent=0 // loop_exit
    _

// kernel: middle_block.4
$region0: #{middle_block.4}
  #allocation0 [shape = 'u32[]', space=smem, size = 0x4, offset = 0x4, fixed_abs, tag = 'smem constant byte address 0x4 - core index']
  #allocation1 [shape = 'u32[144,128]{1,0:T(1,128)}', space=vmem, size = 0x12000, scoped, tag = 'internal scratch']
  %s0 = inlined_call_operand.vmem [shape: f32[2,342,4], index: 0, kind: input, shape index: {}]
  %s1 = inlined_call_operand.vmem [shape: bf16[9,4,128], index: 1, kind: input, shape index: {}]
  %s2 = inlined_call_operand.vmem [shape: f32[1,128], index: 2, kind: input, shape index: {}]
  %s3 = inlined_call_operand.vmem [shape: f32[144,1], index: 3, kind: input, shape index: {}]
  %s4 = inlined_call_operand.vmem [shape: f32[2,288,128], index: 4, kind: output, shape index: {0}]
  %s5 = inlined_call_operand.vmem [shape: f32[2,2,1,128], index: 5, kind: output, shape index: {1}]
  %s6 = inlined_call_operand.vmem [shape: f32[2,2,1,128], index: 6, kind: output, shape index: {2}]
  %7 = xla_tuple %s4, %s5, %s6
  %s8 = sld [smem:[#allocation0]]
  $region65: #{middle_block.4} parent=0
    _
  %s10 = ssub.s32 1, %s8
  %s11 = scalar_select 0, %s10, %s8
  loop: start=0, step=1, limit=6
  $region2: #{middle_block.4} parent=0 // loop_pre_header
    _
  $region3: #{middle_block.4} parent=0 // loop_header
    %s13 = sphi 0, %s17
    %p14 = scmp.ge.s32.totalorder %s13, 6
    %s20 = sphi 0, %s32
    %s21 = sphi 0, %s28
    %s22 = sphi 0, %s20
    %s23 = sphi 0, %s21
    %s24 = sphi 0, %s22
    %s25 = sphi 0, %s23
    %s35 = sphi 0, %s37
    %s38 = sphi 0, %s35
    %s39 = sphi 0, %s38
    %s55 = sphi 0, %s39
    %s59 = sphi 0, %s59
    %s61 = sphi 0, %s59
    %s62 = sphi 0, %s61
    %s76 = sphi 0, %s62
    %s80 = sphi 0, %s80
    %s82 = sphi 0, %s80
    %s83 = sphi 0, %s82
    %s97 = sphi 0, %s83
    %s101 = sphi 0, %s101
    %s103 = sphi 0, %s101
    %s104 = sphi 0, %s103
    %s118 = sphi 0, %s104
    %s126 = sphi 0, %s128
    %s129 = sphi 0, %s126
    %s130 = sphi 0, %s129
    %s146 = sphi 0, %s130
    %s154 = sphi 0, %s156
    %s157 = sphi 0, %s154
    %s158 = sphi 0, %s157
    %s174 = sphi 0, %s158
    %s182 = sphi 0, %s184
    %s185 = sphi 0, %s182
    %s186 = sphi 0, %s185
    %s202 = sphi 0, %s186
  $region4: #{middle_block.4} parent=0 // loop_header_branch
    %16 = sbr.rel (%p14) target = $region8
  $region5: #{middle_block.4} parent=0 // loop_body
    %s18 = ssub.s32 %s13, 1
    %s19 = ssub.s32 %s13, 2
    %s26 = sadd.s32 1, %s21
    %p27 = scmp.ge.s32.totalorder %s26, 2
    %s28 = scalar_select %p27, 0, %s26
    %s29 = sadd.s32 1, %s20
    %s30 = scalar_select %p27, %s29, %s20
    %p31 = scmp.ge.s32.totalorder %s30, 2
    %s32 = scalar_select %p31, 0, %s30
    %s33 = ssub.s32 %s20, %s32
    %p34 = scmp.eq.s32.totalorder %s33, 0
    %s36 = sadd.s32 %s35, 1
    %s37 = scalar_select %p34, %s35, %s36
    %p40 = pneg %p34
    %p41 = scmp.eq.s32.totalorder %s13, 3
    %p42 = por %p40, %p41
    %p43 = scmp.ne.s32.totalorder %s35, %s38
    %p44 = scmp.eq.s32.totalorder %s13, 0
    %p45 = por %p43, %p44
    %p46 = scmp.ne.s32.totalorder %s35, %s38
    %p47 = scmp.eq.s32.totalorder %s18, 3
    %p48 = por %p46, %p47
    %p49 = scmp.ne.s32.totalorder %s38, %s39
    %p50 = scmp.eq.s32.totalorder %s18, 0
    %p51 = por %p49, %p50
    %p52 = scmp.ne.s32.totalorder %s38, %s39
    %p53 = scmp.eq.s32.totalorder %s19, 3
    %p54 = por %p52, %p53
    %p56 = scmp.ne.s32.totalorder %s39, %s55
    %p57 = scmp.eq.s32.totalorder %s19, 0
    %p58 = por %p56, %p57
    %s60 = sadd.s32 %s59, 1
    %p63 = scmp.eq.s32.totalorder %s13, 3
    %p64 = scmp.ne.s32.totalorder %s59, %s61
    %p65 = scmp.eq.s32.totalorder %s13, 0
    %p66 = por %p64, %p65
    %p67 = scmp.ne.s32.totalorder %s59, %s61
    %p68 = scmp.eq.s32.totalorder %s18, 3
    %p69 = por %p67, %p68
    %p70 = scmp.ne.s32.totalorder %s61, %s62
    %p71 = scmp.eq.s32.totalorder %s18, 0
    %p72 = por %p70, %p71
    %p73 = scmp.ne.s32.totalorder %s61, %s62
    %p74 = scmp.eq.s32.totalorder %s19, 3
    %p75 = por %p73, %p74
    %p77 = scmp.ne.s32.totalorder %s62, %s76
    %p78 = scmp.eq.s32.totalorder %s19, 0
    %p79 = por %p77, %p78
    %s81 = sadd.s32 %s80, 1
    %p84 = scmp.eq.s32.totalorder %s13, 3
    %p85 = scmp.ne.s32.totalorder %s80, %s82
    %p86 = scmp.eq.s32.totalorder %s13, 0
    %p87 = por %p85, %p86
    %p88 = scmp.ne.s32.totalorder %s80, %s82
    %p89 = scmp.eq.s32.totalorder %s18, 3
    %p90 = por %p88, %p89
    %p91 = scmp.ne.s32.totalorder %s82, %s83
    %p92 = scmp.eq.s32.totalorder %s18, 0
    %p93 = por %p91, %p92
    %p94 = scmp.ne.s32.totalorder %s82, %s83
    %p95 = scmp.eq.s32.totalorder %s19, 3
    %p96 = por %p94, %p95
    %p98 = scmp.ne.s32.totalorder %s83, %s97
    %p99 = scmp.eq.s32.totalorder %s19, 0
    %p100 = por %p98, %p99
    %s102 = sadd.s32 %s101, 1
    %p105 = scmp.eq.s32.totalorder %s13, 3
    %p106 = scmp.ne.s32.totalorder %s101, %s103
    %p107 = scmp.eq.s32.totalorder %s13, 0
    %p108 = por %p106, %p107
    %p109 = scmp.ne.s32.totalorder %s101, %s103
    %p110 = scmp.eq.s32.totalorder %s18, 3
    %p111 = por %p109, %p110
    %p112 = scmp.ne.s32.totalorder %s103, %s104
    %p113 = scmp.eq.s32.totalorder %s18, 0
    %p114 = por %p112, %p113
    %p115 = scmp.ne.s32.totalorder %s103, %s104
    %p116 = scmp.eq.s32.totalorder %s19, 3
    %p117 = por %p115, %p116
    %p119 = scmp.ne.s32.totalorder %s104, %s118
    %p120 = scmp.eq.s32.totalorder %s19, 0
    %p121 = por %p119, %p120
    %s122 = ssub.s32 %s20, %s32
    %s123 = ssub.s32 %s21, %s28
    %s124 = sor.u32 %s122, %s123
    %p125 = scmp.eq.s32.totalorder %s124, 0
    %s127 = sadd.s32 %s126, 1
    %s128 = scalar_select %p125, %s126, %s127
    %p131 = pneg %p125
    %p132 = scmp.eq.s32.totalorder %s13, 3
    %p133 = por %p131, %p132
    %p134 = scmp.ne.s32.totalorder %s126, %s129
    %p135 = scmp.eq.s32.totalorder %s13, 0
    %p136 = por %p134, %p135
    %p137 = scmp.ne.s32.totalorder %s126, %s129
    %p138 = scmp.eq.s32.totalorder %s18, 3
    %p139 = por %p137, %p138
    %p140 = scmp.ne.s32.totalorder %s129, %s130
    %p141 = scmp.eq.s32.totalorder %s18, 0
    %p142 = por %p140, %p141
    %p143 = scmp.ne.s32.totalorder %s129, %s130
    %p144 = scmp.eq.s32.totalorder %s19, 3
    %p145 = por %p143, %p144
    %p147 = scmp.ne.s32.totalorder %s130, %s146
    %p148 = scmp.eq.s32.totalorder %s19, 0
    %p149 = por %p147, %p148
    %s150 = ssub.s32 %s20, %s32
    %s151 = ssub.s32 %s21, %s28
    %s152 = sor.u32 %s150, %s151
    %p153 = scmp.eq.s32.totalorder %s152, 0
    %s155 = sadd.s32 %s154, 1
    %s156 = scalar_select %p153, %s154, %s155
    %p159 = pneg %p153
    %p160 = scmp.eq.s32.totalorder %s13, 3
    %p161 = por %p159, %p160
    %p162 = scmp.ne.s32.totalorder %s154, %s157
    %p163 = scmp.eq.s32.totalorder %s13, 0
    %p164 = por %p162, %p163
    %p165 = scmp.ne.s32.totalorder %s154, %s157
    %p166 = scmp.eq.s32.totalorder %s18, 3
    %p167 = por %p165, %p166
    %p168 = scmp.ne.s32.totalorder %s157, %s158
    %p169 = scmp.eq.s32.totalorder %s18, 0
    %p170 = por %p168, %p169
    %p171 = scmp.ne.s32.totalorder %s157, %s158
    %p172 = scmp.eq.s32.totalorder %s19, 3
    %p173 = por %p171, %p172
    %p175 = scmp.ne.s32.totalorder %s158, %s174
    %p176 = scmp.eq.s32.totalorder %s19, 0
    %p177 = por %p175, %p176
    %s178 = ssub.s32 %s20, %s32
    %s179 = ssub.s32 %s21, %s28
    %s180 = sor.u32 %s178, %s179
    %p181 = scmp.eq.s32.totalorder %s180, 0
    %s183 = sadd.s32 %s182, 1
    %s184 = scalar_select %p181, %s182, %s183
    %p187 = pneg %p181
    %p188 = scmp.eq.s32.totalorder %s13, 3
    %p189 = por %p187, %p188
    %p190 = scmp.ne.s32.totalorder %s182, %s185
    %p191 = scmp.eq.s32.totalorder %s13, 0
    %p192 = por %p190, %p191
    %p193 = scmp.ne.s32.totalorder %s182, %s185
    %p194 = scmp.eq.s32.totalorder %s18, 3
    %p195 = por %p193, %p194
    %p196 = scmp.ne.s32.totalorder %s185, %s186
    %p197 = scmp.eq.s32.totalorder %s18, 0
    %p198 = por %p196, %p197
    %p199 = scmp.ne.s32.totalorder %s185, %s186
    %p200 = scmp.eq.s32.totalorder %s19, 3
    %p201 = por %p199, %p200
    %p203 = scmp.ne.s32.totalorder %s186, %s202
    %p204 = scmp.eq.s32.totalorder %s19, 0
    %p205 = por %p203, %p204
    %p206 = scmp.le.s32.totalorder 1, %s13
    %p207 = scmp.lt.s32.totalorder %s13, 5
    %p208 = pnand %p206, %p207
    %p209 = pneg %p208
    // Predicated region
    $region9: #{middle_block.4} parent=5 // pred_check
      _
    $region10: #{middle_block.4} parent=5 // pred_check_branch
      %211 = sbr.rel (%p208) target = $region12
    $region11: #{middle_block.4} parent=5 // pred_region
      %s212 = ssub.s32 %s13, 1
      // Predicated region
      $region13: #{middle_block.4} parent=11 // pred_check
        %p213 = pneg %p72
      $region14: #{middle_block.4} parent=11 // pred_check_branch
        %215 = sbr.rel (%p213) target = $region16
      $region15: #{middle_block.4} parent=11 // pred_region
        _
      $region16: #{middle_block.4} parent=11 // pred_fallthru
        _
      // Predicated region
      $region17: #{middle_block.4} parent=11 // pred_check
        %p216 = pneg %p93
      $region18: #{middle_block.4} parent=11 // pred_check_branch
        %218 = sbr.rel (%p216) target = $region20
      $region19: #{middle_block.4} parent=11 // pred_region
        _
      $region20: #{middle_block.4} parent=11 // pred_fallthru
        _
      // Predicated region
      $region21: #{middle_block.4} parent=11 // pred_check
        %p219 = pneg %p114
      $region22: #{middle_block.4} parent=11 // pred_check_branch
        %221 = sbr.rel (%p219) target = $region24
      $region23: #{middle_block.4} parent=11 // pred_region
        _
      $region24: #{middle_block.4} parent=11 // pred_fallthru
        _
    $region12: #{middle_block.4} parent=5 // pred_fallthru
      _
    %p222 = scmp.lt.s32.totalorder %s13, 4
    // Predicated region
    $region25: #{middle_block.4} parent=5 // pred_check
      %p223 = pneg %p222
    $region26: #{middle_block.4} parent=5 // pred_check_branch
      %225 = sbr.rel (%p223) target = $region28
    $region27: #{middle_block.4} parent=5 // pred_region
      // Predicated region
      $region29: #{middle_block.4} parent=27 // pred_check
        %p226 = pneg %p45
      $region30: #{middle_block.4} parent=27 // pred_check_branch
        %228 = sbr.rel (%p226) target = $region32
      $region31: #{middle_block.4} parent=27 // pred_region
        %p229 = scmp.lt.s32.totalorder %s20, 1
        %s230 = scalar_select %p229, %s20, 1
        %s231 = smul.addr %s230, 43
        %s232 = smul.addr %s231, 8
        %s233 = scalar_lea.vmem %s0, %s232
      $region32: #{middle_block.4} parent=27 // pred_fallthru
        _
    $region28: #{middle_block.4} parent=5 // pred_fallthru
      _
    %p234 = scmp.le.s32.totalorder 1, %s13
    %p235 = scmp.lt.s32.totalorder %s13, 5
    %p236 = pnand %p234, %p235
    %p237 = pneg %p236
    // Predicated region
    $region33: #{middle_block.4} parent=5 // pred_check
      _
    $region34: #{middle_block.4} parent=5 // pred_check_branch
      %239 = sbr.rel (%p236) target = $region36
    $region35: #{middle_block.4} parent=5 // pred_region
      %s240 = ssub.s32 %s13, 1
      %p241 = scmp.lt.s32.totalorder %s22, 1
      %s242 = scalar_select %p241, %s22, 1
      %s243 = smul.addr %s242, 43
      %s244 = smul.addr %s243, 8
      %s245 = scalar_lea.vmem %s0, %s244
      %p246 = pneg %p51
      %p247 = pneg %p48
      %p248 = pneg %p72
      %p249 = pneg %p69
      %p250 = pneg %p93
      %p251 = pneg %p90
      %p252 = pneg %p114
      %p253 = pneg %p111
      %p254 = pneg %p142
      %p255 = pneg %p139
      %s256 = smul.u32 18, %s23
      %p257 = scmp.lt.s32.totalorder %s22, 1
      %s258 = scalar_select %p257, %s22, 1
      %p259 = scmp.lt.s32.totalorder %s256, 35
      %s260 = scalar_select %p259, %s256, 35
      %s261 = smul.addr %s258, 36
      %s262 = sadd.s32 %s260, %s261
      %s263 = smul.addr %s262, 8
      %s264 = scalar_lea.vmem %s4, %s263
      %p265 = pneg %p170
      %p266 = pneg %p167
      %p267 = scmp.lt.s32.totalorder %s22, 1
      %s268 = scalar_select %p267, %s22, 1
      %p269 = scmp.lt.s32.totalorder %s23, 1
      %s270 = scalar_select %p269, %s23, 1
      %s271 = smul.addr %s268, 2
      %s272 = sadd.s32 %s270, %s271
      %s273 = scalar_lea.vmem %s5, %s272
      %p274 = pneg %p198
      %p275 = pneg %p195
      %p276 = scmp.lt.s32.totalorder %s22, 1
      %s277 = scalar_select %p276, %s22, 1
      %p278 = scmp.lt.s32.totalorder %s23, 1
      %s279 = scalar_select %p278, %s23, 1
      %s280 = smul.addr %s277, 2
      %s281 = sadd.s32 %s279, %s280
      %s282 = scalar_lea.vmem %s6, %s281
      %p283 = scmp.lt.s32.totalorder %s22, 1
      %s284 = scalar_select %p283, %s22, 1
      %s285 = smul.addr %s284, 43
      %s286 = smul.addr %s285, 8
      %s287 = scalar_lea.vmem %s0, %s286
      %s288 = smul.u32 18, %s23
      %p289 = scmp.lt.s32.totalorder %s22, 1
      %s290 = scalar_select %p289, %s22, 1
      %p291 = scmp.lt.s32.totalorder %s288, 35
      %s292 = scalar_select %p291, %s288, 35
      %s293 = smul.addr %s290, 36
      %s294 = sadd.s32 %s292, %s293
      %s295 = smul.addr %s294, 8
      %s296 = scalar_lea.vmem %s4, %s295
      %s297 = smul.u32 18, %s23
      %p298 = scmp.lt.s32.totalorder %s22, 1
      %s299 = scalar_select %p298, %s22, 1
      %p300 = scmp.lt.s32.totalorder %s23, 1
      %s301 = scalar_select %p300, %s23, 1
      %s302 = smul.addr %s299, 2
      %s303 = sadd.s32 %s301, %s302
      %s304 = scalar_lea.vmem %s5, %s303
      %p305 = scmp.lt.s32.totalorder %s22, 1
      %s306 = scalar_select %p305, %s22, 1
      %p307 = scmp.lt.s32.totalorder %s23, 1
      %s308 = scalar_select %p307, %s23, 1
      %s309 = smul.addr %s306, 2
      %s310 = sadd.s32 %s308, %s309
      %s311 = scalar_lea.vmem %s6, %s310
      %s313 = smul.u32 %s23, 144
      %s314 = scalar_lea.vmem %s287, %s313
      %v315 = vld [vmem:[%s314] sm:$0xff]
      %v316 = vld [vmem:[%s314 + $0x8] sm:$0xff]
      %v317 = vld [vmem:[%s314 + $0x10] sm:$0xff]
      %v318 = vld [vmem:[%s314 + $0x18] sm:$0xff]
      %v319 = vld [vmem:[%s314 + $0x20] sm:$0xff]
      %v320 = vld [vmem:[%s314 + $0x28] sm:$0xff]
      %v321 = vld [vmem:[%s314 + $0x30] sm:$0xff]
      %v322 = vld [vmem:[%s314 + $0x38] sm:$0xff]
      %v323 = vld [vmem:[%s314 + $0x40] sm:$0xff]
      %v324 = vld [vmem:[%s314 + $0x48] sm:$0xff]
      %v325 = vld [vmem:[%s314 + $0x50] sm:$0xff]
      %v326 = vld [vmem:[%s314 + $0x58] sm:$0xff]
      %v327 = vld [vmem:[%s314 + $0x60] sm:$0xff]
      %v328 = vld [vmem:[%s314 + $0x68] sm:$0xff]
      %v329 = vld [vmem:[%s314 + $0x70] sm:$0xff]
      %v330 = vld [vmem:[%s314 + $0x78] sm:$0xff]
      %v331 = vld [vmem:[%s314 + $0x80] sm:$0xff]
      %v332 = vld [vmem:[%s314 + $0x88] sm:$0xff]
      %v333 = vpack.c.bf16 %v316, %v315
      %v334 = vpack.c.bf16 %v318, %v317
      %v335 = vpack.c.bf16 %v320, %v319
      %v336 = vpack.c.bf16 %v322, %v321
      %v337 = vpack.c.bf16 %v324, %v323
      %v338 = vpack.c.bf16 %v326, %v325
      %v339 = vpack.c.bf16 %v328, %v327
      %v340 = vpack.c.bf16 %v330, %v329
      %v341 = vpack.c.bf16 %v332, %v331
      %v342 = vld [vmem:[%s1] sm:$0x3]
      %s343 = sadd.s32 %s313, 1
      %s344 = scalar_lea.vmem %s287, %s343
      %v345 = vld [vmem:[%s344] sm:$0xff]
      %v346 = vld [vmem:[%s344 + $0x8] sm:$0xff]
      %v347 = vld [vmem:[%s344 + $0x10] sm:$0xff]
      %v348 = vld [vmem:[%s344 + $0x18] sm:$0xff]
      %v349 = vld [vmem:[%s344 + $0x20] sm:$0xff]
      %v350 = vld [vmem:[%s344 + $0x28] sm:$0xff]
      %v351 = vld [vmem:[%s344 + $0x30] sm:$0xff]
      %v352 = vld [vmem:[%s344 + $0x38] sm:$0xff]
      %v353 = vld [vmem:[%s344 + $0x40] sm:$0xff]
      %v354 = vld [vmem:[%s344 + $0x48] sm:$0xff]
      %v355 = vld [vmem:[%s344 + $0x50] sm:$0xff]
      %v356 = vld [vmem:[%s344 + $0x58] sm:$0xff]
      %v357 = vld [vmem:[%s344 + $0x60] sm:$0xff]
      %v358 = vld [vmem:[%s344 + $0x68] sm:$0xff]
      %v359 = vld [vmem:[%s344 + $0x70] sm:$0xff]
      %v360 = vld [vmem:[%s344 + $0x78] sm:$0xff]
      %v361 = vld [vmem:[%s344 + $0x80] sm:$0xff]
      %v362 = vld [vmem:[%s344 + $0x88] sm:$0xff]
      %v363 = vpack.c.bf16 %v346, %v345
      %v364 = vpack.c.bf16 %v348, %v347
      %v365 = vpack.c.bf16 %v350, %v349
      %v366 = vpack.c.bf16 %v352, %v351
      %v367 = vpack.c.bf16 %v354, %v353
      %v368 = vpack.c.bf16 %v356, %v355
      %v369 = vpack.c.bf16 %v358, %v357
      %v370 = vpack.c.bf16 %v360, %v359
      %v371 = vpack.c.bf16 %v362, %v361
      %s372 = scalar_lea.vmem %s1, 2
      %v373 = vld [vmem:[%s372] sm:$0x3]
      %vm374 = vcmask 31744
      %v376 = vsel %vm374, %v363, 0
      %v379 = vsel %vm374, %v364, 0
      %v382 = vsel %vm374, %v365, 0
      %v385 = vsel %vm374, %v366, 0
      %v388 = vsel %vm374, %v367, 0
      %v391 = vsel %vm374, %v368, 0
      %v394 = vsel %vm374, %v369, 0
      %v397 = vsel %vm374, %v370, 0
      %v400 = vsel %vm374, %v371, 0
      %vm402 = vcmask 1041408
      %v404 = vsel %vm402, %v373, 0
      %406 = vmatprep.subr.bf16.mxu0 0
      %407 = vmatpush1.bf16.msra.mxu0 %v404
      %408 = vmatprep.subr.bf16.mxu0 0
      %409 = vmatpush1.bf16.msra.mxu0 0
      %410 = vmatprep.subr.bf16.mxu0 0
      %411 = vmatpush1.bf16.msra.mxu0 0
      %412 = vmatprep.subr.bf16.mxu0 0
      %413 = vmatpush1.bf16.msra.mxu0 0
      %414 = vmatprep.subr.bf16.mxu0 0
      %415 = vmatpush1.bf16.msra.mxu0 0
      %416 = vmatprep.subr.bf16.mxu0 0
      %417 = vmatpush1.bf16.msra.mxu0 0
      %418 = vmatprep.subr.bf16.mxu0 0
      %419 = vmatpush1.bf16.msra.mxu0 0
      %420 = vmatprep.subr.bf16.mxu0 0
      %421 = vmatpush1.bf16.msra.mxu0 0
      %422 = vmatprep.subr.bf16.mxu0 0
      %423 = vmatpush1.bf16.msra.mxu0 0
      %424 = vmatprep.subr.bf16.mxu0 0
      %425 = vmatpush1.bf16.msra.mxu0 0
      %426 = vmatprep.subr.bf16.mxu0 0
      %427 = vmatpush1.bf16.msra.mxu0 0
      %428 = vmatprep.subr.bf16.mxu0 0
      %429 = vmatpush1.bf16.msra.mxu0 0
      %430 = vmatprep.subr.bf16.mxu0 0
      %431 = vmatpush1.bf16.msra.mxu0 0
      %432 = vmatprep.subr.bf16.mxu0 0
      %433 = vmatpush1.bf16.msra.mxu0 0
      %434 = vmatprep.subr.bf16.mxu0 0
      %435 = vmatpush1.bf16.msra.mxu0 0
      %436 = vmatprep.subr.bf16.mxu0 0
      %437 = vmatpush1.bf16.msra.mxu0 0
      %438 = vmatprep.mubr.bf16.mxu0 0
      %439 = vmatmul.mubr.bf16.gmra.mrb[0].mxu0 %v376
      %v440 = vpop.f32.mrb[0].mxu0
      %v441 = vadd.f32 0.0, %v440
      %v442 = vpop.f32.mrb[0].mxu0
      %v443 = vpop.f32.mrb[0].mxu0
      %v444 = vadd.f32 0.0, %v443
      %v445 = vpop.f32.mrb[0].mxu0
      %446 = vmatprep.mubr.bf16.mxu0 0
      %447 = vmatmul.mubr.bf16.gmra.mrb[0].mxu0 %v379
      %v448 = vpop.f32.mrb[0].mxu0
      %v449 = vadd.f32 0.0, %v448
      %v450 = vpop.f32.mrb[0].mxu0
      %v451 = vpop.f32.mrb[0].mxu0
      %v452 = vadd.f32 0.0, %v451
      %v453 = vpop.f32.mrb[0].mxu0
      %454 = vmatprep.mubr.bf16.mxu0 0
      %455 = vmatmul.mubr.bf16.gmra.mrb[0].mxu0 %v382
      %v456 = vpop.f32.mrb[0].mxu0
      %v457 = vadd.f32 0.0, %v456
      %v458 = vpop.f32.mrb[0].mxu0
      %v459 = vpop.f32.mrb[0].mxu0
      %v460 = vadd.f32 0.0, %v459
      %v461 = vpop.f32.mrb[0].mxu0
      %462 = vmatprep.mubr.bf16.mxu0 0
      %463 = vmatmul.mubr.bf16.gmra.mrb[0].mxu0 %v385
      %v464 = vpop.f32.mrb[0].mxu0
      %v465 = vadd.f32 0.0, %v464
      %v466 = vpop.f32.mrb[0].mxu0
      %v467 = vpop.f32.mrb[0].mxu0
      %v468 = vadd.f32 0.0, %v467
      %v469 = vpop.f32.mrb[0].mxu0
      %470 = vmatprep.mubr.bf16.mxu0 0
      %471 = vmatmul.mubr.bf16.gmra.mrb[0].mxu0 %v388
      %v472 = vpop.f32.mrb[0].mxu0
      %v473 = vadd.f32 0.0, %v472
      %v474 = vpop.f32.mrb[0].mxu0
      %v475 = vpop.f32.mrb[0].mxu0
      %v476 = vadd.f32 0.0, %v475
      %v477 = vpop.f32.mrb[0].mxu0
      %478 = vmatprep.mubr.bf16.mxu0 0
      %479 = vmatmul.mubr.bf16.gmra.mrb[0].mxu0 %v391
      %v480 = vpop.f32.mrb[0].mxu0
      %v481 = vadd.f32 0.0, %v480
      %v482 = vpop.f32.mrb[0].mxu0
      %v483 = vpop.f32.mrb[0].mxu0
      %v484 = vadd.f32 0.0, %v483
      %v485 = vpop.f32.mrb[0].mxu0
      %486 = vmatprep.mubr.bf16.mxu0 0
      %487 = vmatmul.mubr.bf16.gmra.mrb[0].mxu0 %v394
      %v488 = vpop.f32.mrb[0].mxu0
      %v489 = vadd.f32 0.0, %v488
      %v490 = vpop.f32.mrb[0].mxu0
      %v491 = vpop.f32.mrb[0].mxu0
      %v492 = vadd.f32 0.0, %v491
      %v493 = vpop.f32.mrb[0].mxu0
      %494 = vmatprep.mubr.bf16.mxu0 0
      %495 = vmatmul.mubr.bf16.gmra.mrb[0].mxu0 %v397
      %v496 = vpop.f32.mrb[0].mxu0
      %v497 = vadd.f32 0.0, %v496
      %v498 = vpop.f32.mrb[0].mxu0
      %v499 = vpop.f32.mrb[0].mxu0
      %v500 = vadd.f32 0.0, %v499
      %v501 = vpop.f32.mrb[0].mxu0
      %502 = vmatprep.mubr.bf16.mxu0 0
      %503 = vmatmul.mubr.bf16.gmra.mrb[0].mxu0 %v400
      %v504 = vpop.f32.mrb[0].mxu0
      %v505 = vadd.f32 0.0, %v504
      %v506 = vpop.f32.mrb[0].mxu0
      %v507 = vpop.f32.mrb[0].mxu0
      %v508 = vadd.f32 0.0, %v507
      %v509 = vpop.f32.mrb[0].mxu0
      %510 = vdwg.mxu0
      %v512 = vsel %vm374, %v333, 0
      %v515 = vsel %vm374, %v334, 0
      %v518 = vsel %vm374, %v335, 0
      %v521 = vsel %vm374, %v336, 0
      %v524 = vsel %vm374, %v337, 0
      %v527 = vsel %vm374, %v338, 0
      %v530 = vsel %vm374, %v339, 0
      %v533 = vsel %vm374, %v340, 0
      %v536 = vsel %vm374, %v341, 0
      %v539 = vsel %vm402, %v342, 0
      %541 = vmatprep.subr.bf16.mxu0 0
      %542 = vmatpush1.bf16.msra.mxu0 %v539
      %543 = vmatprep.subr.bf16.mxu0 0
      %544 = vmatpush1.bf16.msra.mxu0 0
      %545 = vmatprep.subr.bf16.mxu0 0
      %546 = vmatpush1.bf16.msra.mxu0 0
      %547 = vmatprep.subr.bf16.mxu0 0
      %548 = vmatpush1.bf16.msra.mxu0 0
      %549 = vmatprep.subr.bf16.mxu0 0
      %550 = vmatpush1.bf16.msra.mxu0 0
      %551 = vmatprep.subr.bf16.mxu0 0
      %552 = vmatpush1.bf16.msra.mxu0 0
      %553 = vmatprep.subr.bf16.mxu0 0
      %554 = vmatpush1.bf16.msra.mxu0 0
      %555 = vmatprep.subr.bf16.mxu0 0
      %556 = vmatpush1.bf16.msra.mxu0 0
      %557 = vmatprep.subr.bf16.mxu0 0
      %558 = vmatpush1.bf16.msra.mxu0 0
      %559 = vmatprep.subr.bf16.mxu0 0
      %560 = vmatpush1.bf16.msra.mxu0 0
      %561 = vmatprep.subr.bf16.mxu0 0
      %562 = vmatpush1.bf16.msra.mxu0 0
      %563 = vmatprep.subr.bf16.mxu0 0
      %564 = vmatpush1.bf16.msra.mxu0 0
      %565 = vmatprep.subr.bf16.mxu0 0
      %566 = vmatpush1.bf16.msra.mxu0 0
      %567 = vmatprep.subr.bf16.mxu0 0
      %568 = vmatpush1.bf16.msra.mxu0 0
      %569 = vmatprep.subr.bf16.mxu0 0
      %570 = vmatpush1.bf16.msra.mxu0 0
      %571 = vmatprep.subr.bf16.mxu0 0
      %572 = vmatpush1.bf16.msra.mxu0 0
      %573 = vmatprep.mubr.bf16.mxu0 0
      %574 = vmatmul.mubr.bf16.gmra.mrb[0].mxu0 %v512
      %v575 = vpop.f32.mrb[0].mxu0
      %v576 = vadd.f32 %v441, %v575
      %v577 = vpop.f32.mrb[0].mxu0
      %v578 = vpop.f32.mrb[0].mxu0
      %v579 = vadd.f32 %v444, %v578
      %v580 = vpop.f32.mrb[0].mxu0
      %581 = vmatprep.mubr.bf16.mxu0 0
      %582 = vmatmul.mubr.bf16.gmra.mrb[0].mxu0 %v515
      %v583 = vpop.f32.mrb[0].mxu0
      %v584 = vadd.f32 %v449, %v583
      %v585 = vpop.f32.mrb[0].mxu0
      %v586 = vpop.f32.mrb[0].mxu0
      %v587 = vadd.f32 %v452, %v586
      %v588 = vpop.f32.mrb[0].mxu0
      %589 = vmatprep.mubr.bf16.mxu0 0
      %590 = vmatmul.mubr.bf16.gmra.mrb[0].mxu0 %v518
      %v591 = vpop.f32.mrb[0].mxu0
      %v592 = vadd.f32 %v457, %v591
      %v593 = vpop.f32.mrb[0].mxu0
      %v594 = vpop.f32.mrb[0].mxu0
      %v595 = vadd.f32 %v460, %v594
      %v596 = vpop.f32.mrb[0].mxu0
      %597 = vmatprep.mubr.bf16.mxu0 0
      %598 = vmatmul.mubr.bf16.gmra.mrb[0].mxu0 %v521
      %v599 = vpop.f32.mrb[0].mxu0
      %v600 = vadd.f32 %v465, %v599
      %v601 = vpop.f32.mrb[0].mxu0
      %v602 = vpop.f32.mrb[0].mxu0
      %v603 = vadd.f32 %v468, %v602
      %v604 = vpop.f32.mrb[0].mxu0
      %605 = vmatprep.mubr.bf16.mxu0 0
      %606 = vmatmul.mubr.bf16.gmra.mrb[0].mxu0 %v524
      %v607 = vpop.f32.mrb[0].mxu0
      %v608 = vadd.f32 %v473, %v607
      %v609 = vpop.f32.mrb[0].mxu0
      %v610 = vpop.f32.mrb[0].mxu0
      %v611 = vadd.f32 %v476, %v610
      %v612 = vpop.f32.mrb[0].mxu0
      %613 = vmatprep.mubr.bf16.mxu0 0
      %614 = vmatmul.mubr.bf16.gmra.mrb[0].mxu0 %v527
      %v615 = vpop.f32.mrb[0].mxu0
      %v616 = vadd.f32 %v481, %v615
      %v617 = vpop.f32.mrb[0].mxu0
      %v618 = vpop.f32.mrb[0].mxu0
      %v619 = vadd.f32 %v484, %v618
      %v620 = vpop.f32.mrb[0].mxu0
      %621 = vmatprep.mubr.bf16.mxu0 0
      %622 = vmatmul.mubr.bf16.gmra.mrb[0].mxu0 %v530
      %v623 = vpop.f32.mrb[0].mxu0
      %v624 = vadd.f32 %v489, %v623
      %v625 = vpop.f32.mrb[0].mxu0
      %v626 = vpop.f32.mrb[0].mxu0
      %v627 = vadd.f32 %v492, %v626
      %v628 = vpop.f32.mrb[0].mxu0
      %629 = vmatprep.mubr.bf16.mxu0 0
      %630 = vmatmul.mubr.bf16.gmra.mrb[0].mxu0 %v533
      %v631 = vpop.f32.mrb[0].mxu0
      %v632 = vadd.f32 %v497, %v631
      %v633 = vpop.f32.mrb[0].mxu0
      %v634 = vpop.f32.mrb[0].mxu0
      %v635 = vadd.f32 %v500, %v634
      %v636 = vpop.f32.mrb[0].mxu0
      %637 = vmatprep.mubr.bf16.mxu0 0
      %638 = vmatmul.mubr.bf16.gmra.mrb[0].mxu0 %v536
      %v639 = vpop.f32.mrb[0].mxu0
      %v640 = vadd.f32 %v505, %v639
      %v641 = vpop.f32.mrb[0].mxu0
      %v642 = vpop.f32.mrb[0].mxu0
      %v643 = vadd.f32 %v508, %v642
      %v644 = vpop.f32.mrb[0].mxu0
      %645 = vdwg.mxu0
      %s646 = sadd.s32 %s313, 2
      %s647 = scalar_lea.vmem %s287, %s646
      %v648 = vld [vmem:[%s647] sm:$0xff]
      %v649 = vld [vmem:[%s647 + $0x8] sm:$0xff]
      %v650 = vld [vmem:[%s647 + $0x10] sm:$0xff]
      %v651 = vld [vmem:[%s647 + $0x18] sm:$0xff]
      %v652 = vld [vmem:[%s647 + $0x20] sm:$0xff]
      %v653 = vld [vmem:[%s647 + $0x28] sm:$0xff]
      %v654 = vld [vmem:[%s647 + $0x30] sm:$0xff]
      %v655 = vld [vmem:[%s647 + $0x38] sm:$0xff]
      %v656 = vld [vmem:[%s647 + $0x40] sm:$0xff]
      %v657 = vld [vmem:[%s647 + $0x48] sm:$0xff]
      %v658 = vld [vmem:[%s647 + $0x50] sm:$0xff]
      %v659 = vld [vmem:[%s647 + $0x58] sm:$0xff]
      %v660 = vld [vmem:[%s647 + $0x60] sm:$0xff]
      %v661 = vld [vmem:[%s647 + $0x68] sm:$0xff]
      %v662 = vld [vmem:[%s647 + $0x70] sm:$0xff]
      %v663 = vld [vmem:[%s647 + $0x78] sm:$0xff]
      %v664 = vld [vmem:[%s647 + $0x80] sm:$0xff]
      %v665 = vld [vmem:[%s647 + $0x88] sm:$0xff]
      %v666 = vpack.c.bf16 %v649, %v648
      %v667 = vpack.c.bf16 %v651, %v650
      %v668 = vpack.c.bf16 %v653, %v652
      %v669 = vpack.c.bf16 %v655, %v654
      %v670 = vpack.c.bf16 %v657, %v656
      %v671 = vpack.c.bf16 %v659, %v658
      %v672 = vpack.c.bf16 %v661, %v660
      %v673 = vpack.c.bf16 %v663, %v662
      %v674 = vpack.c.bf16 %v665, %v664
      %s675 = scalar_lea.vmem %s1, 4
      %v676 = vld [vmem:[%s675] sm:$0x3]
      %v678 = vsel %vm374, %v666, 0
      %v681 = vsel %vm374, %v667, 0
      %v684 = vsel %vm374, %v668, 0
      %v687 = vsel %vm374, %v669, 0
      %v690 = vsel %vm374, %v670, 0
      %v693 = vsel %vm374, %v671, 0
      %v696 = vsel %vm374, %v672, 0
      %v699 = vsel %vm374, %v673, 0
      %v702 = vsel %vm374, %v674, 0
      %v705 = vsel %vm402, %v676, 0
      %707 = vmatprep.subr.bf16.mxu0 0
      %708 = vmatpush1.bf16.msra.mxu0 %v705
      %709 = vmatprep.subr.bf16.mxu0 0
      %710 = vmatpush1.bf16.msra.mxu0 0
      %711 = vmatprep.subr.bf16.mxu0 0
      %712 = vmatpush1.bf16.msra.mxu0 0
      %713 = vmatprep.subr.bf16.mxu0 0
      %714 = vmatpush1.bf16.msra.mxu0 0
      %715 = vmatprep.subr.bf16.mxu0 0
      %716 = vmatpush1.bf16.msra.mxu0 0
      %717 = vmatprep.subr.bf16.mxu0 0
      %718 = vmatpush1.bf16.msra.mxu0 0
      %719 = vmatprep.subr.bf16.mxu0 0
      %720 = vmatpush1.bf16.msra.mxu0 0
      %721 = vmatprep.subr.bf16.mxu0 0
      %722 = vmatpush1.bf16.msra.mxu0 0
      %723 = vmatprep.subr.bf16.mxu0 0
      %724 = vmatpush1.bf16.msra.mxu0 0
      %725 = vmatprep.subr.bf16.mxu0 0
      %726 = vmatpush1.bf16.msra.mxu0 0
      %727 = vmatprep.subr.bf16.mxu0 0
      %728 = vmatpush1.bf16.msra.mxu0 0
      %729 = vmatprep.subr.bf16.mxu0 0
      %730 = vmatpush1.bf16.msra.mxu0 0
      %731 = vmatprep.subr.bf16.mxu0 0
      %732 = vmatpush1.bf16.msra.mxu0 0
      %733 = vmatprep.subr.bf16.mxu0 0
      %734 = vmatpush1.bf16.msra.mxu0 0
      %735 = vmatprep.subr.bf16.mxu0 0
      %736 = vmatpush1.bf16.msra.mxu0 0
      %737 = vmatprep.subr.bf16.mxu0 0
      %738 = vmatpush1.bf16.msra.mxu0 0
      %739 = vmatprep.mubr.bf16.mxu0 0
      %740 = vmatmul.mubr.bf16.gmra.mrb[0].mxu0 %v678
      %v741 = vpop.f32.mrb[0].mxu0
      %v742 = vadd.f32 0.0, %v741
      %v743 = vpop.f32.mrb[0].mxu0
      %v744 = vpop.f32.mrb[0].mxu0
      %v745 = vadd.f32 0.0, %v744
      %v746 = vpop.f32.mrb[0].mxu0
      %747 = vmatprep.mubr.bf16.mxu0 0
      %748 = vmatmul.mubr.bf16.gmra.mrb[0].mxu0 %v681
      %v749 = vpop.f32.mrb[0].mxu0
      %v750 = vadd.f32 0.0, %v749
      %v751 = vpop.f32.mrb[0].mxu0
      %v752 = vpop.f32.mrb[0].mxu0
      %v753 = vadd.f32 0.0, %v752
      %v754 = vpop.f32.mrb[0].mxu0
      %755 = vmatprep.mubr.bf16.mxu0 0
      %756 = vmatmul.mubr.bf16.gmra.mrb[0].mxu0 %v684
      %v757 = vpop.f32.mrb[0].mxu0
      %v758 = vadd.f32 0.0, %v757
      %v759 = vpop.f32.mrb[0].mxu0
      %v760 = vpop.f32.mrb[0].mxu0
      %v761 = vadd.f32 0.0, %v760
      %v762 = vpop.f32.mrb[0].mxu0
      %763 = vmatprep.mubr.bf16.mxu0 0
      %764 = vmatmul.mubr.bf16.gmra.mrb[0].mxu0 %v687
      %v765 = vpop.f32.mrb[0].mxu0
      %v766 = vadd.f32 0.0, %v765
      %v767 = vpop.f32.mrb[0].mxu0
      %v768 = vpop.f32.mrb[0].mxu0
      %v769 = vadd.f32 0.0, %v768
      %v770 = vpop.f32.mrb[0].mxu0
      %771 = vmatprep.mubr.bf16.mxu0 0
      %772 = vmatmul.mubr.bf16.gmra.mrb[0].mxu0 %v690
      %v773 = vpop.f32.mrb[0].mxu0
      %v774 = vadd.f32 0.0, %v773
      %v775 = vpop.f32.mrb[0].mxu0
      %v776 = vpop.f32.mrb[0].mxu0
      %v777 = vadd.f32 0.0, %v776
      %v778 = vpop.f32.mrb[0].mxu0
      %779 = vmatprep.mubr.bf16.mxu0 0
      %780 = vmatmul.mubr.bf16.gmra.mrb[0].mxu0 %v693
      %v781 = vpop.f32.mrb[0].mxu0
      %v782 = vadd.f32 0.0, %v781
      %v783 = vpop.f32.mrb[0].mxu0
      %v784 = vpop.f32.mrb[0].mxu0
      %v785 = vadd.f32 0.0, %v784
      %v786 = vpop.f32.mrb[0].mxu0
      %787 = vmatprep.mubr.bf16.mxu0 0
      %788 = vmatmul.mubr.bf16.gmra.mrb[0].mxu0 %v696
      %v789 = vpop.f32.mrb[0].mxu0
      %v790 = vadd.f32 0.0, %v789
      %v791 = vpop.f32.mrb[0].mxu0
      %v792 = vpop.f32.mrb[0].mxu0
      %v793 = vadd.f32 0.0, %v792
      %v794 = vpop.f32.mrb[0].mxu0
      %795 = vmatprep.mubr.bf16.mxu0 0
      %796 = vmatmul.mubr.bf16.gmra.mrb[0].mxu0 %v699
      %v797 = vpop.f32.mrb[0].mxu0
      %v798 = vadd.f32 0.0, %v797
      %v799 = vpop.f32.mrb[0].mxu0
      %v800 = vpop.f32.mrb[0].mxu0
      %v801 = vadd.f32 0.0, %v800
      %v802 = vpop.f32.mrb[0].mxu0
      %803 = vmatprep.mubr.bf16.mxu0 0
      %804 = vmatmul.mubr.bf16.gmra.mrb[0].mxu0 %v702
      %v805 = vpop.f32.mrb[0].mxu0
      %v806 = vadd.f32 0.0, %v805
      %v807 = vpop.f32.mrb[0].mxu0
      %v808 = vpop.f32.mrb[0].mxu0
      %v809 = vadd.f32 0.0, %v808
      %v810 = vpop.f32.mrb[0].mxu0
      %811 = vdwg.mxu0
      %v812 = vadd.f32 %v576, %v742
      %v813 = vadd.f32 %v579, %v745
      %v814 = vadd.f32 %v584, %v750
      %v815 = vadd.f32 %v587, %v753
      %v816 = vadd.f32 %v592, %v758
      %v817 = vadd.f32 %v595, %v761
      %v818 = vadd.f32 %v600, %v766
      %v819 = vadd.f32 %v603, %v769
      %v820 = vadd.f32 %v608, %v774
      %v821 = vadd.f32 %v611, %v777
      %v822 = vadd.f32 %v616, %v782
      %v823 = vadd.f32 %v619, %v785
      %v824 = vadd.f32 %v624, %v790
      %v825 = vadd.f32 %v627, %v793
      %v826 = vadd.f32 %v632, %v798
      %v827 = vadd.f32 %v635, %v801
      %v828 = vadd.f32 %v640, %v806
      %v829 = vadd.f32 %v643, %v809
      %s830 = sadd.s32 %s313, 18
      %s831 = scalar_lea.vmem %s287, %s830
      %v832 = vld [vmem:[%s831] sm:$0xff]
      %v833 = vld [vmem:[%s831 + $0x8] sm:$0xff]
      %v834 = vld [vmem:[%s831 + $0x10] sm:$0xff]
      %v835 = vld [vmem:[%s831 + $0x18] sm:$0xff]
      %v836 = vld [vmem:[%s831 + $0x20] sm:$0xff]
      %v837 = vld [vmem:[%s831 + $0x28] sm:$0xff]
      %v838 = vld [vmem:[%s831 + $0x30] sm:$0xff]
      %v839 = vld [vmem:[%s831 + $0x38] sm:$0xff]
      %v840 = vld [vmem:[%s831 + $0x40] sm:$0xff]
      %v841 = vld [vmem:[%s831 + $0x48] sm:$0xff]
      %v842 = vld [vmem:[%s831 + $0x50] sm:$0xff]
      %v843 = vld [vmem:[%s831 + $0x58] sm:$0xff]
      %v844 = vld [vmem:[%s831 + $0x60] sm:$0xff]
      %v845 = vld [vmem:[%s831 + $0x68] sm:$0xff]
      %v846 = vld [vmem:[%s831 + $0x70] sm:$0xff]
      %v847 = vld [vmem:[%s831 + $0x78] sm:$0xff]
      %v848 = vld [vmem:[%s831 + $0x80] sm:$0xff]
      %v849 = vld [vmem:[%s831 + $0x88] sm:$0xff]
      %v850 = vpack.c.bf16 %v833, %v832
      %v851 = vpack.c.bf16 %v835, %v834
      %v852 = vpack.c.bf16 %v837, %v836
      %v853 = vpack.c.bf16 %v839, %v838
      %v854 = vpack.c.bf16 %v841, %v840
      %v855 = vpack.c.bf16 %v843, %v842
      %v856 = vpack.c.bf16 %v845, %v844
      %v857 = vpack.c.bf16 %v847, %v846
      %v858 = vpack.c.bf16 %v849, %v848
      %s859 = scalar_lea.vmem %s1, 6
      %v860 = vld [vmem:[%s859] sm:$0x3]
      %v862 = vsel %vm374, %v850, 0
      %v865 = vsel %vm374, %v851, 0
      %v868 = vsel %vm374, %v852, 0
      %v871 = vsel %vm374, %v853, 0
      %v874 = vsel %vm374, %v854, 0
      %v877 = vsel %vm374, %v855, 0
      %v880 = vsel %vm374, %v856, 0
      %v883 = vsel %vm374, %v857, 0
      %v886 = vsel %vm374, %v858, 0
      %v889 = vsel %vm402, %v860, 0
      %891 = vmatprep.subr.bf16.mxu0 0
      %892 = vmatpush1.bf16.msra.mxu0 %v889
      %893 = vmatprep.subr.bf16.mxu0 0
      %894 = vmatpush1.bf16.msra.mxu0 0
      %895 = vmatprep.subr.bf16.mxu0 0
      %896 = vmatpush1.bf16.msra.mxu0 0
      %897 = vmatprep.subr.bf16.mxu0 0
      %898 = vmatpush1.bf16.msra.mxu0 0
      %899 = vmatprep.subr.bf16.mxu0 0
      %900 = vmatpush1.bf16.msra.mxu0 0
      %901 = vmatprep.subr.bf16.mxu0 0
      %902 = vmatpush1.bf16.msra.mxu0 0
      %903 = vmatprep.subr.bf16.mxu0 0
      %904 = vmatpush1.bf16.msra.mxu0 0
      %905 = vmatprep.subr.bf16.mxu0 0
      %906 = vmatpush1.bf16.msra.mxu0 0
      %907 = vmatprep.subr.bf16.mxu0 0
      %908 = vmatpush1.bf16.msra.mxu0 0
      %909 = vmatprep.subr.bf16.mxu0 0
      %910 = vmatpush1.bf16.msra.mxu0 0
      %911 = vmatprep.subr.bf16.mxu0 0
      %912 = vmatpush1.bf16.msra.mxu0 0
      %913 = vmatprep.subr.bf16.mxu0 0
      %914 = vmatpush1.bf16.msra.mxu0 0
      %915 = vmatprep.subr.bf16.mxu0 0
      %916 = vmatpush1.bf16.msra.mxu0 0
      %917 = vmatprep.subr.bf16.mxu0 0
      %918 = vmatpush1.bf16.msra.mxu0 0
      %919 = vmatprep.subr.bf16.mxu0 0
      %920 = vmatpush1.bf16.msra.mxu0 0
      %921 = vmatprep.subr.bf16.mxu0 0
      %922 = vmatpush1.bf16.msra.mxu0 0
      %923 = vmatprep.mubr.bf16.mxu0 0
      %924 = vmatmul.mubr.bf16.gmra.mrb[0].mxu0 %v862
      %v925 = vpop.f32.mrb[0].mxu0
      %v926 = vadd.f32 0.0, %v925
      %v927 = vpop.f32.mrb[0].mxu0
      %v928 = vpop.f32.mrb[0].mxu0
      %v929 = vadd.f32 0.0, %v928
      %v930 = vpop.f32.mrb[0].mxu0
      %931 = vmatprep.mubr.bf16.mxu0 0
      %932 = vmatmul.mubr.bf16.gmra.mrb[0].mxu0 %v865
      %v933 = vpop.f32.mrb[0].mxu0
      %v934 = vadd.f32 0.0, %v933
      %v935 = vpop.f32.mrb[0].mxu0
      %v936 = vpop.f32.mrb[0].mxu0
      %v937 = vadd.f32 0.0, %v936
      %v938 = vpop.f32.mrb[0].mxu0
      %939 = vmatprep.mubr.bf16.mxu0 0
      %940 = vmatmul.mubr.bf16.gmra.mrb[0].mxu0 %v868
      %v941 = vpop.f32.mrb[0].mxu0
      %v942 = vadd.f32 0.0, %v941
      %v943 = vpop.f32.mrb[0].mxu0
      %v944 = vpop.f32.mrb[0].mxu0
      %v945 = vadd.f32 0.0, %v944
      %v946 = vpop.f32.mrb[0].mxu0
      %947 = vmatprep.mubr.bf16.mxu0 0
      %948 = vmatmul.mubr.bf16.gmra.mrb[0].mxu0 %v871
      %v949 = vpop.f32.mrb[0].mxu0
      %v950 = vadd.f32 0.0, %v949
      %v951 = vpop.f32.mrb[0].mxu0
      %v952 = vpop.f32.mrb[0].mxu0
      %v953 = vadd.f32 0.0, %v952
      %v954 = vpop.f32.mrb[0].mxu0
      %955 = vmatprep.mubr.bf16.mxu0 0
      %956 = vmatmul.mubr.bf16.gmra.mrb[0].mxu0 %v874
      %v957 = vpop.f32.mrb[0].mxu0
      %v958 = vadd.f32 0.0, %v957
      %v959 = vpop.f32.mrb[0].mxu0
      %v960 = vpop.f32.mrb[0].mxu0
      %v961 = vadd.f32 0.0, %v960
      %v962 = vpop.f32.mrb[0].mxu0
      %963 = vmatprep.mubr.bf16.mxu0 0
      %964 = vmatmul.mubr.bf16.gmra.mrb[0].mxu0 %v877
      %v965 = vpop.f32.mrb[0].mxu0
      %v966 = vadd.f32 0.0, %v965
      %v967 = vpop.f32.mrb[0].mxu0
      %v968 = vpop.f32.mrb[0].mxu0
      %v969 = vadd.f32 0.0, %v968
      %v970 = vpop.f32.mrb[0].mxu0
      %971 = vmatprep.mubr.bf16.mxu0 0
      %972 = vmatmul.mubr.bf16.gmra.mrb[0].mxu0 %v880
      %v973 = vpop.f32.mrb[0].mxu0
      %v974 = vadd.f32 0.0, %v973
      %v975 = vpop.f32.mrb[0].mxu0
      %v976 = vpop.f32.mrb[0].mxu0
      %v977 = vadd.f32 0.0, %v976
      %v978 = vpop.f32.mrb[0].mxu0
      %979 = vmatprep.mubr.bf16.mxu0 0
      %980 = vmatmul.mubr.bf16.gmra.mrb[0].mxu0 %v883
      %v981 = vpop.f32.mrb[0].mxu0
      %v982 = vadd.f32 0.0, %v981
      %v983 = vpop.f32.mrb[0].mxu0
      %v984 = vpop.f32.mrb[0].mxu0
      %v985 = vadd.f32 0.0, %v984
      %v986 = vpop.f32.mrb[0].mxu0
      %987 = vmatprep.mubr.bf16.mxu0 0
      %988 = vmatmul.mubr.bf16.gmra.mrb[0].mxu0 %v886
      %v989 = vpop.f32.mrb[0].mxu0
      %v990 = vadd.f32 0.0, %v989
      %v991 = vpop.f32.mrb[0].mxu0
      %v992 = vpop.f32.mrb[0].mxu0
      %v993 = vadd.f32 0.0, %v992
      %v994 = vpop.f32.mrb[0].mxu0
      %995 = vdwg.mxu0
      %v996 = vadd.f32 %v812, %v926
      %v997 = vadd.f32 %v813, %v929
      %v998 = vadd.f32 %v814, %v934
      %v999 = vadd.f32 %v815, %v937
      %v1000 = vadd.f32 %v816, %v942
      %v1001 = vadd.f32 %v817, %v945
      %v1002 = vadd.f32 %v818, %v950
      %v1003 = vadd.f32 %v819, %v953
      %v1004 = vadd.f32 %v820, %v958
      %v1005 = vadd.f32 %v821, %v961
      %v1006 = vadd.f32 %v822, %v966
      %v1007 = vadd.f32 %v823, %v969
      %v1008 = vadd.f32 %v824, %v974
      %v1009 = vadd.f32 %v825, %v977
      %v1010 = vadd.f32 %v826, %v982
      %v1011 = vadd.f32 %v827, %v985
      %v1012 = vadd.f32 %v828, %v990
      %v1013 = vadd.f32 %v829, %v993
      %s1014 = sadd.s32 %s313, 19
      %s1015 = scalar_lea.vmem %s287, %s1014
      %v1016 = vld [vmem:[%s1015] sm:$0xff]
      %v1017 = vld [vmem:[%s1015 + $0x8] sm:$0xff]
      %v1018 = vld [vmem:[%s1015 + $0x10] sm:$0xff]
      %v1019 = vld [vmem:[%s1015 + $0x18] sm:$0xff]
      %v1020 = vld [vmem:[%s1015 + $0x20] sm:$0xff]
      %v1021 = vld [vmem:[%s1015 + $0x28] sm:$0xff]
      %v1022 = vld [vmem:[%s1015 + $0x30] sm:$0xff]
      %v1023 = vld [vmem:[%s1015 + $0x38] sm:$0xff]
      %v1024 = vld [vmem:[%s1015 + $0x40] sm:$0xff]
      %v1025 = vld [vmem:[%s1015 + $0x48] sm:$0xff]
      %v1026 = vld [vmem:[%s1015 + $0x50] sm:$0xff]
      %v1027 = vld [vmem:[%s1015 + $0x58] sm:$0xff]
      %v1028 = vld [vmem:[%s1015 + $0x60] sm:$0xff]
      %v1029 = vld [vmem:[%s1015 + $0x68] sm:$0xff]
      %v1030 = vld [vmem:[%s1015 + $0x70] sm:$0xff]
      %v1031 = vld [vmem:[%s1015 + $0x78] sm:$0xff]
      %v1032 = vld [vmem:[%s1015 + $0x80] sm:$0xff]
      %v1033 = vld [vmem:[%s1015 + $0x88] sm:$0xff]
      %v1034 = vpack.c.bf16 %v1017, %v1016
      %v1035 = vpack.c.bf16 %v1019, %v1018
      %v1036 = vpack.c.bf16 %v1021, %v1020
      %v1037 = vpack.c.bf16 %v1023, %v1022
      %v1038 = vpack.c.bf16 %v1025, %v1024
      %v1039 = vpack.c.bf16 %v1027, %v1026
      %v1040 = vpack.c.bf16 %v1029, %v1028
      %v1041 = vpack.c.bf16 %v1031, %v1030
      %v1042 = vpack.c.bf16 %v1033, %v1032
      %s1043 = scalar_lea.vmem %s1, 8
      %v1044 = vld [vmem:[%s1043] sm:$0x3]
      %v1046 = vsel %vm374, %v1034, 0
      %v1049 = vsel %vm374, %v1035, 0
      %v1052 = vsel %vm374, %v1036, 0
      %v1055 = vsel %vm374, %v1037, 0
      %v1058 = vsel %vm374, %v1038, 0
      %v1061 = vsel %vm374, %v1039, 0
      %v1064 = vsel %vm374, %v1040, 0
      %v1067 = vsel %vm374, %v1041, 0
      %v1070 = vsel %vm374, %v1042, 0
      %v1073 = vsel %vm402, %v1044, 0
      %1075 = vmatprep.subr.bf16.mxu0 0
      %1076 = vmatpush1.bf16.msra.mxu0 %v1073
      %1077 = vmatprep.subr.bf16.mxu0 0
      %1078 = vmatpush1.bf16.msra.mxu0 0
      %1079 = vmatprep.subr.bf16.mxu0 0
      %1080 = vmatpush1.bf16.msra.mxu0 0
      %1081 = vmatprep.subr.bf16.mxu0 0
      %1082 = vmatpush1.bf16.msra.mxu0 0
      %1083 = vmatprep.subr.bf16.mxu0 0
      %1084 = vmatpush1.bf16.msra.mxu0 0
      %1085 = vmatprep.subr.bf16.mxu0 0
      %1086 = vmatpush1.bf16.msra.mxu0 0
      %1087 = vmatprep.subr.bf16.mxu0 0
      %1088 = vmatpush1.bf16.msra.mxu0 0
      %1089 = vmatprep.subr.bf16.mxu0 0
      %1090 = vmatpush1.bf16.msra.mxu0 0
      %1091 = vmatprep.subr.bf16.mxu0 0
      %1092 = vmatpush1.bf16.msra.mxu0 0
      %1093 = vmatprep.subr.bf16.mxu0 0
      %1094 = vmatpush1.bf16.msra.mxu0 0
      %1095 = vmatprep.subr.bf16.mxu0 0
      %1096 = vmatpush1.bf16.msra.mxu0 0
      %1097 = vmatprep.subr.bf16.mxu0 0
      %1098 = vmatpush1.bf16.msra.mxu0 0
      %1099 = vmatprep.subr.bf16.mxu0 0
      %1100 = vmatpush1.bf16.msra.mxu0 0
      %1101 = vmatprep.subr.bf16.mxu0 0
      %1102 = vmatpush1.bf16.msra.mxu0 0
      %1103 = vmatprep.subr.bf16.mxu0 0
      %1104 = vmatpush1.bf16.msra.mxu0 0
      %1105 = vmatprep.subr.bf16.mxu0 0
      %1106 = vmatpush1.bf16.msra.mxu0 0
      %1107 = vmatprep.mubr.bf16.mxu0 0
      %1108 = vmatmul.mubr.bf16.gmra.mrb[0].mxu0 %v1046
      %v1109 = vpop.f32.mrb[0].mxu0
      %v1110 = vadd.f32 0.0, %v1109
      %v1111 = vpop.f32.mrb[0].mxu0
      %v1112 = vpop.f32.mrb[0].mxu0
      %v1113 = vadd.f32 0.0, %v1112
      %v1114 = vpop.f32.mrb[0].mxu0
      %1115 = vmatprep.mubr.bf16.mxu0 0
      %1116 = vmatmul.mubr.bf16.gmra.mrb[0].mxu0 %v1049
      %v1117 = vpop.f32.mrb[0].mxu0
      %v1118 = vadd.f32 0.0, %v1117
      %v1119 = vpop.f32.mrb[0].mxu0
      %v1120 = vpop.f32.mrb[0].mxu0
      %v1121 = vadd.f32 0.0, %v1120
      %v1122 = vpop.f32.mrb[0].mxu0
      %1123 = vmatprep.mubr.bf16.mxu0 0
      %1124 = vmatmul.mubr.bf16.gmra.mrb[0].mxu0 %v1052
      %v1125 = vpop.f32.mrb[0].mxu0
      %v1126 = vadd.f32 0.0, %v1125
      %v1127 = vpop.f32.mrb[0].mxu0
      %v1128 = vpop.f32.mrb[0].mxu0
      %v1129 = vadd.f32 0.0, %v1128
      %v1130 = vpop.f32.mrb[0].mxu0
      %1131 = vmatprep.mubr.bf16.mxu0 0
      %1132 = vmatmul.mubr.bf16.gmra.mrb[0].mxu0 %v1055
      %v1133 = vpop.f32.mrb[0].mxu0
      %v1134 = vadd.f32 0.0, %v1133
      %v1135 = vpop.f32.mrb[0].mxu0
      %v1136 = vpop.f32.mrb[0].mxu0
      %v1137 = vadd.f32 0.0, %v1136
      %v1138 = vpop.f32.mrb[0].mxu0
      %1139 = vmatprep.mubr.bf16.mxu0 0
      %1140 = vmatmul.mubr.bf16.gmra.mrb[0].mxu0 %v1058
      %v1141 = vpop.f32.mrb[0].mxu0
      %v1142 = vadd.f32 0.0, %v1141
      %v1143 = vpop.f32.mrb[0].mxu0
      %v1144 = vpop.f32.mrb[0].mxu0
      %v1145 = vadd.f32 0.0, %v1144
      %v1146 = vpop.f32.mrb[0].mxu0
      %1147 = vmatprep.mubr.bf16.mxu0 0
      %1148 = vmatmul.mubr.bf16.gmra.mrb[0].mxu0 %v1061
      %v1149 = vpop.f32.mrb[0].mxu0
      %v1150 = vadd.f32 0.0, %v1149
      %v1151 = vpop.f32.mrb[0].mxu0
      %v1152 = vpop.f32.mrb[0].mxu0
      %v1153 = vadd.f32 0.0, %v1152
      %v1154 = vpop.f32.mrb[0].mxu0
      %1155 = vmatprep.mubr.bf16.mxu0 0
      %1156 = vmatmul.mubr.bf16.gmra.mrb[0].mxu0 %v1064
      %v1157 = vpop.f32.mrb[0].mxu0
      %v1158 = vadd.f32 0.0, %v1157
      %v1159 = vpop.f32.mrb[0].mxu0
      %v1160 = vpop.f32.mrb[0].mxu0
      %v1161 = vadd.f32 0.0, %v1160
      %v1162 = vpop.f32.mrb[0].mxu0
      %1163 = vmatprep.mubr.bf16.mxu0 0
      %1164 = vmatmul.mubr.bf16.gmra.mrb[0].mxu0 %v1067
      %v1165 = vpop.f32.mrb[0].mxu0
      %v1166 = vadd.f32 0.0, %v1165
      %v1167 = vpop.f32.mrb[0].mxu0
      %v1168 = vpop.f32.mrb[0].mxu0
      %v1169 = vadd.f32 0.0, %v1168
      %v1170 = vpop.f32.mrb[0].mxu0
      %1171 = vmatprep.mubr.bf16.mxu0 0
      %1172 = vmatmul.mubr.bf16.gmra.mrb[0].mxu0 %v1070
      %v1173 = vpop.f32.mrb[0].mxu0
      %v1174 = vadd.f32 0.0, %v1173
      %v1175 = vpop.f32.mrb[0].mxu0
      %v1176 = vpop.f32.mrb[0].mxu0
      %v1177 = vadd.f32 0.0, %v1176
      %v1178 = vpop.f32.mrb[0].mxu0
      %1179 = vdwg.mxu0
      %v1180 = vadd.f32 %v996, %v1110
      %v1181 = vadd.f32 %v997, %v1113
      %v1182 = vadd.f32 %v998, %v1118
      %v1183 = vadd.f32 %v999, %v1121
      %v1184 = vadd.f32 %v1000, %v1126
      %v1185 = vadd.f32 %v1001, %v1129
      %v1186 = vadd.f32 %v1002, %v1134
      %v1187 = vadd.f32 %v1003, %v1137
      %v1188 = vadd.f32 %v1004, %v1142
      %v1189 = vadd.f32 %v1005, %v1145
      %v1190 = vadd.f32 %v1006, %v1150
      %v1191 = vadd.f32 %v1007, %v1153
      %v1192 = vadd.f32 %v1008, %v1158
      %v1193 = vadd.f32 %v1009, %v1161
      %v1194 = vadd.f32 %v1010, %v1166
      %v1195 = vadd.f32 %v1011, %v1169
      %v1196 = vadd.f32 %v1012, %v1174
      %v1197 = vadd.f32 %v1013, %v1177
      %s1198 = sadd.s32 %s313, 20
      %s1199 = scalar_lea.vmem %s287, %s1198
      %v1200 = vld [vmem:[%s1199] sm:$0xff]
      %v1201 = vld [vmem:[%s1199 + $0x8] sm:$0xff]
      %v1202 = vld [vmem:[%s1199 + $0x10] sm:$0xff]
      %v1203 = vld [vmem:[%s1199 + $0x18] sm:$0xff]
      %v1204 = vld [vmem:[%s1199 + $0x20] sm:$0xff]
      %v1205 = vld [vmem:[%s1199 + $0x28] sm:$0xff]
      %v1206 = vld [vmem:[%s1199 + $0x30] sm:$0xff]
      %v1207 = vld [vmem:[%s1199 + $0x38] sm:$0xff]
      %v1208 = vld [vmem:[%s1199 + $0x40] sm:$0xff]
      %v1209 = vld [vmem:[%s1199 + $0x48] sm:$0xff]
      %v1210 = vld [vmem:[%s1199 + $0x50] sm:$0xff]
      %v1211 = vld [vmem:[%s1199 + $0x58] sm:$0xff]
      %v1212 = vld [vmem:[%s1199 + $0x60] sm:$0xff]
      %v1213 = vld [vmem:[%s1199 + $0x68] sm:$0xff]
      %v1214 = vld [vmem:[%s1199 + $0x70] sm:$0xff]
      %v1215 = vld [vmem:[%s1199 + $0x78] sm:$0xff]
      %v1216 = vld [vmem:[%s1199 + $0x80] sm:$0xff]
      %v1217 = vld [vmem:[%s1199 + $0x88] sm:$0xff]
      %v1218 = vpack.c.bf16 %v1201, %v1200
      %v1219 = vpack.c.bf16 %v1203, %v1202
      %v1220 = vpack.c.bf16 %v1205, %v1204
      %v1221 = vpack.c.bf16 %v1207, %v1206
      %v1222 = vpack.c.bf16 %v1209, %v1208
      %v1223 = vpack.c.bf16 %v1211, %v1210
      %v1224 = vpack.c.bf16 %v1213, %v1212
      %v1225 = vpack.c.bf16 %v1215, %v1214
      %v1226 = vpack.c.bf16 %v1217, %v1216
      %s1227 = scalar_lea.vmem %s1, 10
      %v1228 = vld [vmem:[%s1227] sm:$0x3]
      %v1230 = vsel %vm374, %v1218, 0
      %v1233 = vsel %vm374, %v1219, 0
      %v1236 = vsel %vm374, %v1220, 0
      %v1239 = vsel %vm374, %v1221, 0
      %v1242 = vsel %vm374, %v1222, 0
      %v1245 = vsel %vm374, %v1223, 0
      %v1248 = vsel %vm374, %v1224, 0
      %v1251 = vsel %vm374, %v1225, 0
      %v1254 = vsel %vm374, %v1226, 0
      %v1257 = vsel %vm402, %v1228, 0
      %1259 = vmatprep.subr.bf16.mxu0 0
      %1260 = vmatpush1.bf16.msra.mxu0 %v1257
      %1261 = vmatprep.subr.bf16.mxu0 0
      %1262 = vmatpush1.bf16.msra.mxu0 0
      %1263 = vmatprep.subr.bf16.mxu0 0
      %1264 = vmatpush1.bf16.msra.mxu0 0
      %1265 = vmatprep.subr.bf16.mxu0 0
      %1266 = vmatpush1.bf16.msra.mxu0 0
      %1267 = vmatprep.subr.bf16.mxu0 0
      %1268 = vmatpush1.bf16.msra.mxu0 0
      %1269 = vmatprep.subr.bf16.mxu0 0
      %1270 = vmatpush1.bf16.msra.mxu0 0
      %1271 = vmatprep.subr.bf16.mxu0 0
      %1272 = vmatpush1.bf16.msra.mxu0 0
      %1273 = vmatprep.subr.bf16.mxu0 0
      %1274 = vmatpush1.bf16.msra.mxu0 0
      %1275 = vmatprep.subr.bf16.mxu0 0
      %1276 = vmatpush1.bf16.msra.mxu0 0
      %1277 = vmatprep.subr.bf16.mxu0 0
      %1278 = vmatpush1.bf16.msra.mxu0 0
      %1279 = vmatprep.subr.bf16.mxu0 0
      %1280 = vmatpush1.bf16.msra.mxu0 0
      %1281 = vmatprep.subr.bf16.mxu0 0
      %1282 = vmatpush1.bf16.msra.mxu0 0
      %1283 = vmatprep.subr.bf16.mxu0 0
      %1284 = vmatpush1.bf16.msra.mxu0 0
      %1285 = vmatprep.subr.bf16.mxu0 0
      %1286 = vmatpush1.bf16.msra.mxu0 0
      %1287 = vmatprep.subr.bf16.mxu0 0
      %1288 = vmatpush1.bf16.msra.mxu0 0
      %1289 = vmatprep.subr.bf16.mxu0 0
      %1290 = vmatpush1.bf16.msra.mxu0 0
      %1291 = vmatprep.mubr.bf16.mxu0 0
      %1292 = vmatmul.mubr.bf16.gmra.mrb[0].mxu0 %v1230
      %v1293 = vpop.f32.mrb[0].mxu0
      %v1294 = vadd.f32 0.0, %v1293
      %v1295 = vpop.f32.mrb[0].mxu0
      %v1296 = vpop.f32.mrb[0].mxu0
      %v1297 = vadd.f32 0.0, %v1296
      %v1298 = vpop.f32.mrb[0].mxu0
      %1299 = vmatprep.mubr.bf16.mxu0 0
      %1300 = vmatmul.mubr.bf16.gmra.mrb[0].mxu0 %v1233
      %v1301 = vpop.f32.mrb[0].mxu0
      %v1302 = vadd.f32 0.0, %v1301
      %v1303 = vpop.f32.mrb[0].mxu0
      %v1304 = vpop.f32.mrb[0].mxu0
      %v1305 = vadd.f32 0.0, %v1304
      %v1306 = vpop.f32.mrb[0].mxu0
      %1307 = vmatprep.mubr.bf16.mxu0 0
      %1308 = vmatmul.mubr.bf16.gmra.mrb[0].mxu0 %v1236
      %v1309 = vpop.f32.mrb[0].mxu0
      %v1310 = vadd.f32 0.0, %v1309
      %v1311 = vpop.f32.mrb[0].mxu0
      %v1312 = vpop.f32.mrb[0].mxu0
      %v1313 = vadd.f32 0.0, %v1312
      %v1314 = vpop.f32.mrb[0].mxu0
      %1315 = vmatprep.mubr.bf16.mxu0 0
      %1316 = vmatmul.mubr.bf16.gmra.mrb[0].mxu0 %v1239
      %v1317 = vpop.f32.mrb[0].mxu0
      %v1318 = vadd.f32 0.0, %v1317
      %v1319 = vpop.f32.mrb[0].mxu0
      %v1320 = vpop.f32.mrb[0].mxu0
      %v1321 = vadd.f32 0.0, %v1320
      %v1322 = vpop.f32.mrb[0].mxu0
      %1323 = vmatprep.mubr.bf16.mxu0 0
      %1324 = vmatmul.mubr.bf16.gmra.mrb[0].mxu0 %v1242
      %v1325 = vpop.f32.mrb[0].mxu0
      %v1326 = vadd.f32 0.0, %v1325
      %v1327 = vpop.f32.mrb[0].mxu0
      %v1328 = vpop.f32.mrb[0].mxu0
      %v1329 = vadd.f32 0.0, %v1328
      %v1330 = vpop.f32.mrb[0].mxu0
      %1331 = vmatprep.mubr.bf16.mxu0 0
      %1332 = vmatmul.mubr.bf16.gmra.mrb[0].mxu0 %v1245
      %v1333 = vpop.f32.mrb[0].mxu0
      %v1334 = vadd.f32 0.0, %v1333
      %v1335 = vpop.f32.mrb[0].mxu0
      %v1336 = vpop.f32.mrb[0].mxu0
      %v1337 = vadd.f32 0.0, %v1336
      %v1338 = vpop.f32.mrb[0].mxu0
      %1339 = vmatprep.mubr.bf16.mxu0 0
      %1340 = vmatmul.mubr.bf16.gmra.mrb[0].mxu0 %v1248
      %v1341 = vpop.f32.mrb[0].mxu0
      %v1342 = vadd.f32 0.0, %v1341
      %v1343 = vpop.f32.mrb[0].mxu0
      %v1344 = vpop.f32.mrb[0].mxu0
      %v1345 = vadd.f32 0.0, %v1344
      %v1346 = vpop.f32.mrb[0].mxu0
      %1347 = vmatprep.mubr.bf16.mxu0 0
      %1348 = vmatmul.mubr.bf16.gmra.mrb[0].mxu0 %v1251
      %v1349 = vpop.f32.mrb[0].mxu0
      %v1350 = vadd.f32 0.0, %v1349
      %v1351 = vpop.f32.mrb[0].mxu0
      %v1352 = vpop.f32.mrb[0].mxu0
      %v1353 = vadd.f32 0.0, %v1352
      %v1354 = vpop.f32.mrb[0].mxu0
      %1355 = vmatprep.mubr.bf16.mxu0 0
      %1356 = vmatmul.mubr.bf16.gmra.mrb[0].mxu0 %v1254
      %v1357 = vpop.f32.mrb[0].mxu0
      %v1358 = vadd.f32 0.0, %v1357
      %v1359 = vpop.f32.mrb[0].mxu0
      %v1360 = vpop.f32.mrb[0].mxu0
      %v1361 = vadd.f32 0.0, %v1360
      %v1362 = vpop.f32.mrb[0].mxu0
      %1363 = vdwg.mxu0
      %v1364 = vadd.f32 %v1180, %v1294
      %v1365 = vadd.f32 %v1181, %v1297
      %v1366 = vadd.f32 %v1182, %v1302
      %v1367 = vadd.f32 %v1183, %v1305
      %v1368 = vadd.f32 %v1184, %v1310
      %v1369 = vadd.f32 %v1185, %v1313
      %v1370 = vadd.f32 %v1186, %v1318
      %v1371 = vadd.f32 %v1187, %v1321
      %v1372 = vadd.f32 %v1188, %v1326
      %v1373 = vadd.f32 %v1189, %v1329
      %v1374 = vadd.f32 %v1190, %v1334
      %v1375 = vadd.f32 %v1191, %v1337
      %v1376 = vadd.f32 %v1192, %v1342
      %v1377 = vadd.f32 %v1193, %v1345
      %v1378 = vadd.f32 %v1194, %v1350
      %v1379 = vadd.f32 %v1195, %v1353
      %v1380 = vadd.f32 %v1196, %v1358
      %v1381 = vadd.f32 %v1197, %v1361
      %s1382 = sadd.s32 %s313, 36
      %s1383 = scalar_lea.vmem %s287, %s1382
      %v1384 = vld [vmem:[%s1383] sm:$0xff]
      %v1385 = vld [vmem:[%s1383 + $0x8] sm:$0xff]
      %v1386 = vld [vmem:[%s1383 + $0x10] sm:$0xff]
      %v1387 = vld [vmem:[%s1383 + $0x18] sm:$0xff]
      %v1388 = vld [vmem:[%s1383 + $0x20] sm:$0xff]
      %v1389 = vld [vmem:[%s1383 + $0x28] sm:$0xff]
      %v1390 = vld [vmem:[%s1383 + $0x30] sm:$0xff]
      %v1391 = vld [vmem:[%s1383 + $0x38] sm:$0xff]
      %v1392 = vld [vmem:[%s1383 + $0x40] sm:$0xff]
      %v1393 = vld [vmem:[%s1383 + $0x48] sm:$0xff]
      %v1394 = vld [vmem:[%s1383 + $0x50] sm:$0xff]
      %v1395 = vld [vmem:[%s1383 + $0x58] sm:$0xff]
      %v1396 = vld [vmem:[%s1383 + $0x60] sm:$0xff]
      %v1397 = vld [vmem:[%s1383 + $0x68] sm:$0xff]
      %v1398 = vld [vmem:[%s1383 + $0x70] sm:$0xff]
      %v1399 = vld [vmem:[%s1383 + $0x78] sm:$0xff]
      %v1400 = vld [vmem:[%s1383 + $0x80] sm:$0xff]
      %v1401 = vld [vmem:[%s1383 + $0x88] sm:$0xff]
      %v1402 = vpack.c.bf16 %v1385, %v1384
      %v1403 = vpack.c.bf16 %v1387, %v1386
      %v1404 = vpack.c.bf16 %v1389, %v1388
      %v1405 = vpack.c.bf16 %v1391, %v1390
      %v1406 = vpack.c.bf16 %v1393, %v1392
      %v1407 = vpack.c.bf16 %v1395, %v1394
      %v1408 = vpack.c.bf16 %v1397, %v1396
      %v1409 = vpack.c.bf16 %v1399, %v1398
      %v1410 = vpack.c.bf16 %v1401, %v1400
      %s1411 = scalar_lea.vmem %s1, 12
      %v1412 = vld [vmem:[%s1411] sm:$0x3]
      %v1414 = vsel %vm374, %v1402, 0
      %v1417 = vsel %vm374, %v1403, 0
      %v1420 = vsel %vm374, %v1404, 0
      %v1423 = vsel %vm374, %v1405, 0
      %v1426 = vsel %vm374, %v1406, 0
      %v1429 = vsel %vm374, %v1407, 0
      %v1432 = vsel %vm374, %v1408, 0
      %v1435 = vsel %vm374, %v1409, 0
      %v1438 = vsel %vm374, %v1410, 0
      %v1441 = vsel %vm402, %v1412, 0
      %1443 = vmatprep.subr.bf16.mxu0 0
      %1444 = vmatpush1.bf16.msra.mxu0 %v1441
      %1445 = vmatprep.subr.bf16.mxu0 0
      %1446 = vmatpush1.bf16.msra.mxu0 0
      %1447 = vmatprep.subr.bf16.mxu0 0
      %1448 = vmatpush1.bf16.msra.mxu0 0
      %1449 = vmatprep.subr.bf16.mxu0 0
      %1450 = vmatpush1.bf16.msra.mxu0 0
      %1451 = vmatprep.subr.bf16.mxu0 0
      %1452 = vmatpush1.bf16.msra.mxu0 0
      %1453 = vmatprep.subr.bf16.mxu0 0
      %1454 = vmatpush1.bf16.msra.mxu0 0
      %1455 = vmatprep.subr.bf16.mxu0 0
      %1456 = vmatpush1.bf16.msra.mxu0 0
      %1457 = vmatprep.subr.bf16.mxu0 0
      %1458 = vmatpush1.bf16.msra.mxu0 0
      %1459 = vmatprep.subr.bf16.mxu0 0
      %1460 = vmatpush1.bf16.msra.mxu0 0
      %1461 = vmatprep.subr.bf16.mxu0 0
      %1462 = vmatpush1.bf16.msra.mxu0 0
      %1463 = vmatprep.subr.bf16.mxu0 0
      %1464 = vmatpush1.bf16.msra.mxu0 0
      %1465 = vmatprep.subr.bf16.mxu0 0
      %1466 = vmatpush1.bf16.msra.mxu0 0
      %1467 = vmatprep.subr.bf16.mxu0 0
      %1468 = vmatpush1.bf16.msra.mxu0 0
      %1469 = vmatprep.subr.bf16.mxu0 0
      %1470 = vmatpush1.bf16.msra.mxu0 0
      %1471 = vmatprep.subr.bf16.mxu0 0
      %1472 = vmatpush1.bf16.msra.mxu0 0
      %1473 = vmatprep.subr.bf16.mxu0 0
      %1474 = vmatpush1.bf16.msra.mxu0 0
      %1475 = vmatprep.mubr.bf16.mxu0 0
      %1476 = vmatmul.mubr.bf16.gmra.mrb[0].mxu0 %v1414
      %v1477 = vpop.f32.mrb[0].mxu0
      %v1478 = vadd.f32 0.0, %v1477
      %v1479 = vpop.f32.mrb[0].mxu0
      %v1480 = vpop.f32.mrb[0].mxu0
      %v1481 = vadd.f32 0.0, %v1480
      %v1482 = vpop.f32.mrb[0].mxu0
      %1483 = vmatprep.mubr.bf16.mxu0 0
      %1484 = vmatmul.mubr.bf16.gmra.mrb[0].mxu0 %v1417
      %v1485 = vpop.f32.mrb[0].mxu0
      %v1486 = vadd.f32 0.0, %v1485
      %v1487 = vpop.f32.mrb[0].mxu0
      %v1488 = vpop.f32.mrb[0].mxu0
      %v1489 = vadd.f32 0.0, %v1488
      %v1490 = vpop.f32.mrb[0].mxu0
      %1491 = vmatprep.mubr.bf16.mxu0 0
      %1492 = vmatmul.mubr.bf16.gmra.mrb[0].mxu0 %v1420
      %v1493 = vpop.f32.mrb[0].mxu0
      %v1494 = vadd.f32 0.0, %v1493
      %v1495 = vpop.f32.mrb[0].mxu0
      %v1496 = vpop.f32.mrb[0].mxu0
      %v1497 = vadd.f32 0.0, %v1496
      %v1498 = vpop.f32.mrb[0].mxu0
      %1499 = vmatprep.mubr.bf16.mxu0 0
      %1500 = vmatmul.mubr.bf16.gmra.mrb[0].mxu0 %v1423
      %v1501 = vpop.f32.mrb[0].mxu0
      %v1502 = vadd.f32 0.0, %v1501
      %v1503 = vpop.f32.mrb[0].mxu0
      %v1504 = vpop.f32.mrb[0].mxu0
      %v1505 = vadd.f32 0.0, %v1504
      %v1506 = vpop.f32.mrb[0].mxu0
      %1507 = vmatprep.mubr.bf16.mxu0 0
      %1508 = vmatmul.mubr.bf16.gmra.mrb[0].mxu0 %v1426
      %v1509 = vpop.f32.mrb[0].mxu0
      %v1510 = vadd.f32 0.0, %v1509
      %v1511 = vpop.f32.mrb[0].mxu0
      %v1512 = vpop.f32.mrb[0].mxu0
      %v1513 = vadd.f32 0.0, %v1512
      %v1514 = vpop.f32.mrb[0].mxu0
      %1515 = vmatprep.mubr.bf16.mxu0 0
      %1516 = vmatmul.mubr.bf16.gmra.mrb[0].mxu0 %v1429
      %v1517 = vpop.f32.mrb[0].mxu0
      %v1518 = vadd.f32 0.0, %v1517
      %v1519 = vpop.f32.mrb[0].mxu0
      %v1520 = vpop.f32.mrb[0].mxu0
      %v1521 = vadd.f32 0.0, %v1520
      %v1522 = vpop.f32.mrb[0].mxu0
      %1523 = vmatprep.mubr.bf16.mxu0 0
      %1524 = vmatmul.mubr.bf16.gmra.mrb[0].mxu0 %v1432
      %v1525 = vpop.f32.mrb[0].mxu0
      %v1526 = vadd.f32 0.0, %v1525
      %v1527 = vpop.f32.mrb[0].mxu0
      %v1528 = vpop.f32.mrb[0].mxu0
      %v1529 = vadd.f32 0.0, %v1528
      %v1530 = vpop.f32.mrb[0].mxu0
      %1531 = vmatprep.mubr.bf16.mxu0 0
      %1532 = vmatmul.mubr.bf16.gmra.mrb[0].mxu0 %v1435
      %v1533 = vpop.f32.mrb[0].mxu0
      %v1534 = vadd.f32 0.0, %v1533
      %v1535 = vpop.f32.mrb[0].mxu0
      %v1536 = vpop.f32.mrb[0].mxu0
      %v1537 = vadd.f32 0.0, %v1536
      %v1538 = vpop.f32.mrb[0].mxu0
      %1539 = vmatprep.mubr.bf16.mxu0 0
      %1540 = vmatmul.mubr.bf16.gmra.mrb[0].mxu0 %v1438
      %v1541 = vpop.f32.mrb[0].mxu0
      %v1542 = vadd.f32 0.0, %v1541
      %v1543 = vpop.f32.mrb[0].mxu0
      %v1544 = vpop.f32.mrb[0].mxu0
      %v1545 = vadd.f32 0.0, %v1544
      %v1546 = vpop.f32.mrb[0].mxu0
      %1547 = vdwg.mxu0
      %v1548 = vadd.f32 %v1364, %v1478
      %v1549 = vadd.f32 %v1365, %v1481
      %v1550 = vadd.f32 %v1366, %v1486
      %v1551 = vadd.f32 %v1367, %v1489
      %v1552 = vadd.f32 %v1368, %v1494
      %v1553 = vadd.f32 %v1369, %v1497
      %v1554 = vadd.f32 %v1370, %v1502
      %v1555 = vadd.f32 %v1371, %v1505
      %v1556 = vadd.f32 %v1372, %v1510
      %v1557 = vadd.f32 %v1373, %v1513
      %v1558 = vadd.f32 %v1374, %v1518
      %v1559 = vadd.f32 %v1375, %v1521
      %v1560 = vadd.f32 %v1376, %v1526
      %v1561 = vadd.f32 %v1377, %v1529
      %v1562 = vadd.f32 %v1378, %v1534
      %v1563 = vadd.f32 %v1379, %v1537
      %v1564 = vadd.f32 %v1380, %v1542
      %v1565 = vadd.f32 %v1381, %v1545
      %s1566 = sadd.s32 %s313, 37
      %s1567 = scalar_lea.vmem %s287, %s1566
      %v1568 = vld [vmem:[%s1567] sm:$0xff]
      %v1569 = vld [vmem:[%s1567 + $0x8] sm:$0xff]
      %v1570 = vld [vmem:[%s1567 + $0x10] sm:$0xff]
      %v1571 = vld [vmem:[%s1567 + $0x18] sm:$0xff]
      %v1572 = vld [vmem:[%s1567 + $0x20] sm:$0xff]
      %v1573 = vld [vmem:[%s1567 + $0x28] sm:$0xff]
      %v1574 = vld [vmem:[%s1567 + $0x30] sm:$0xff]
      %v1575 = vld [vmem:[%s1567 + $0x38] sm:$0xff]
      %v1576 = vld [vmem:[%s1567 + $0x40] sm:$0xff]
      %v1577 = vld [vmem:[%s1567 + $0x48] sm:$0xff]
      %v1578 = vld [vmem:[%s1567 + $0x50] sm:$0xff]
      %v1579 = vld [vmem:[%s1567 + $0x58] sm:$0xff]
      %v1580 = vld [vmem:[%s1567 + $0x60] sm:$0xff]
      %v1581 = vld [vmem:[%s1567 + $0x68] sm:$0xff]
      %v1582 = vld [vmem:[%s1567 + $0x70] sm:$0xff]
      %v1583 = vld [vmem:[%s1567 + $0x78] sm:$0xff]
      %v1584 = vld [vmem:[%s1567 + $0x80] sm:$0xff]
      %v1585 = vld [vmem:[%s1567 + $0x88] sm:$0xff]
      %v1586 = vpack.c.bf16 %v1569, %v1568
      %v1587 = vpack.c.bf16 %v1571, %v1570
      %v1588 = vpack.c.bf16 %v1573, %v1572
      %v1589 = vpack.c.bf16 %v1575, %v1574
      %v1590 = vpack.c.bf16 %v1577, %v1576
      %v1591 = vpack.c.bf16 %v1579, %v1578
      %v1592 = vpack.c.bf16 %v1581, %v1580
      %v1593 = vpack.c.bf16 %v1583, %v1582
      %v1594 = vpack.c.bf16 %v1585, %v1584
      %s1595 = scalar_lea.vmem %s1, 14
      %v1596 = vld [vmem:[%s1595] sm:$0x3]
      %v1598 = vsel %vm374, %v1586, 0
      %v1601 = vsel %vm374, %v1587, 0
      %v1604 = vsel %vm374, %v1588, 0
      %v1607 = vsel %vm374, %v1589, 0
      %v1610 = vsel %vm374, %v1590, 0
      %v1613 = vsel %vm374, %v1591, 0
      %v1616 = vsel %vm374, %v1592, 0
      %v1619 = vsel %vm374, %v1593, 0
      %v1622 = vsel %vm374, %v1594, 0
      %v1625 = vsel %vm402, %v1596, 0
      %1627 = vmatprep.subr.bf16.mxu0 0
      %1628 = vmatpush1.bf16.msra.mxu0 %v1625
      %1629 = vmatprep.subr.bf16.mxu0 0
      %1630 = vmatpush1.bf16.msra.mxu0 0
      %1631 = vmatprep.subr.bf16.mxu0 0
      %1632 = vmatpush1.bf16.msra.mxu0 0
      %1633 = vmatprep.subr.bf16.mxu0 0
      %1634 = vmatpush1.bf16.msra.mxu0 0
      %1635 = vmatprep.subr.bf16.mxu0 0
      %1636 = vmatpush1.bf16.msra.mxu0 0
      %1637 = vmatprep.subr.bf16.mxu0 0
      %1638 = vmatpush1.bf16.msra.mxu0 0
      %1639 = vmatprep.subr.bf16.mxu0 0
      %1640 = vmatpush1.bf16.msra.mxu0 0
      %1641 = vmatprep.subr.bf16.mxu0 0
      %1642 = vmatpush1.bf16.msra.mxu0 0
      %1643 = vmatprep.subr.bf16.mxu0 0
      %1644 = vmatpush1.bf16.msra.mxu0 0
      %1645 = vmatprep.subr.bf16.mxu0 0
      %1646 = vmatpush1.bf16.msra.mxu0 0
      %1647 = vmatprep.subr.bf16.mxu0 0
      %1648 = vmatpush1.bf16.msra.mxu0 0
      %1649 = vmatprep.subr.bf16.mxu0 0
      %1650 = vmatpush1.bf16.msra.mxu0 0
      %1651 = vmatprep.subr.bf16.mxu0 0
      %1652 = vmatpush1.bf16.msra.mxu0 0
      %1653 = vmatprep.subr.bf16.mxu0 0
      %1654 = vmatpush1.bf16.msra.mxu0 0
      %1655 = vmatprep.subr.bf16.mxu0 0
      %1656 = vmatpush1.bf16.msra.mxu0 0
      %1657 = vmatprep.subr.bf16.mxu0 0
      %1658 = vmatpush1.bf16.msra.mxu0 0
      %1659 = vmatprep.mubr.bf16.mxu0 0
      %1660 = vmatmul.mubr.bf16.gmra.mrb[0].mxu0 %v1598
      %v1661 = vpop.f32.mrb[0].mxu0
      %v1662 = vadd.f32 0.0, %v1661
      %v1663 = vpop.f32.mrb[0].mxu0
      %v1664 = vpop.f32.mrb[0].mxu0
      %v1665 = vadd.f32 0.0, %v1664
      %v1666 = vpop.f32.mrb[0].mxu0
      %1667 = vmatprep.mubr.bf16.mxu0 0
      %1668 = vmatmul.mubr.bf16.gmra.mrb[0].mxu0 %v1601
      %v1669 = vpop.f32.mrb[0].mxu0
      %v1670 = vadd.f32 0.0, %v1669
      %v1671 = vpop.f32.mrb[0].mxu0
      %v1672 = vpop.f32.mrb[0].mxu0
      %v1673 = vadd.f32 0.0, %v1672
      %v1674 = vpop.f32.mrb[0].mxu0
      %1675 = vmatprep.mubr.bf16.mxu0 0
      %1676 = vmatmul.mubr.bf16.gmra.mrb[0].mxu0 %v1604
      %v1677 = vpop.f32.mrb[0].mxu0
      %v1678 = vadd.f32 0.0, %v1677
      %v1679 = vpop.f32.mrb[0].mxu0
      %v1680 = vpop.f32.mrb[0].mxu0
      %v1681 = vadd.f32 0.0, %v1680
      %v1682 = vpop.f32.mrb[0].mxu0
      %1683 = vmatprep.mubr.bf16.mxu0 0
      %1684 = vmatmul.mubr.bf16.gmra.mrb[0].mxu0 %v1607
      %v1685 = vpop.f32.mrb[0].mxu0
      %v1686 = vadd.f32 0.0, %v1685
      %v1687 = vpop.f32.mrb[0].mxu0
      %v1688 = vpop.f32.mrb[0].mxu0
      %v1689 = vadd.f32 0.0, %v1688
      %v1690 = vpop.f32.mrb[0].mxu0
      %1691 = vmatprep.mubr.bf16.mxu0 0
      %1692 = vmatmul.mubr.bf16.gmra.mrb[0].mxu0 %v1610
      %v1693 = vpop.f32.mrb[0].mxu0
      %v1694 = vadd.f32 0.0, %v1693
      %v1695 = vpop.f32.mrb[0].mxu0
      %v1696 = vpop.f32.mrb[0].mxu0
      %v1697 = vadd.f32 0.0, %v1696
      %v1698 = vpop.f32.mrb[0].mxu0
      %1699 = vmatprep.mubr.bf16.mxu0 0
      %1700 = vmatmul.mubr.bf16.gmra.mrb[0].mxu0 %v1613
      %v1701 = vpop.f32.mrb[0].mxu0
      %v1702 = vadd.f32 0.0, %v1701
      %v1703 = vpop.f32.mrb[0].mxu0
      %v1704 = vpop.f32.mrb[0].mxu0
      %v1705 = vadd.f32 0.0, %v1704
      %v1706 = vpop.f32.mrb[0].mxu0
      %1707 = vmatprep.mubr.bf16.mxu0 0
      %1708 = vmatmul.mubr.bf16.gmra.mrb[0].mxu0 %v1616
      %v1709 = vpop.f32.mrb[0].mxu0
      %v1710 = vadd.f32 0.0, %v1709
      %v1711 = vpop.f32.mrb[0].mxu0
      %v1712 = vpop.f32.mrb[0].mxu0
      %v1713 = vadd.f32 0.0, %v1712
      %v1714 = vpop.f32.mrb[0].mxu0
      %1715 = vmatprep.mubr.bf16.mxu0 0
      %1716 = vmatmul.mubr.bf16.gmra.mrb[0].mxu0 %v1619
      %v1717 = vpop.f32.mrb[0].mxu0
      %v1718 = vadd.f32 0.0, %v1717
      %v1719 = vpop.f32.mrb[0].mxu0
      %v1720 = vpop.f32.mrb[0].mxu0
      %v1721 = vadd.f32 0.0, %v1720
      %v1722 = vpop.f32.mrb[0].mxu0
      %1723 = vmatprep.mubr.bf16.mxu0 0
      %1724 = vmatmul.mubr.bf16.gmra.mrb[0].mxu0 %v1622
      %v1725 = vpop.f32.mrb[0].mxu0
      %v1726 = vadd.f32 0.0, %v1725
      %v1727 = vpop.f32.mrb[0].mxu0
      %v1728 = vpop.f32.mrb[0].mxu0
      %v1729 = vadd.f32 0.0, %v1728
      %v1730 = vpop.f32.mrb[0].mxu0
      %1731 = vdwg.mxu0
      %v1732 = vadd.f32 %v1548, %v1662
      %v1733 = vadd.f32 %v1549, %v1665
      %v1734 = vadd.f32 %v1550, %v1670
      %v1735 = vadd.f32 %v1551, %v1673
      %v1736 = vadd.f32 %v1552, %v1678
      %v1737 = vadd.f32 %v1553, %v1681
      %v1738 = vadd.f32 %v1554, %v1686
      %v1739 = vadd.f32 %v1555, %v1689
      %v1740 = vadd.f32 %v1556, %v1694
      %v1741 = vadd.f32 %v1557, %v1697
      %v1742 = vadd.f32 %v1558, %v1702
      %v1743 = vadd.f32 %v1559, %v1705
      %v1744 = vadd.f32 %v1560, %v1710
      %v1745 = vadd.f32 %v1561, %v1713
      %v1746 = vadd.f32 %v1562, %v1718
      %v1747 = vadd.f32 %v1563, %v1721
      %v1748 = vadd.f32 %v1564, %v1726
      %v1749 = vadd.f32 %v1565, %v1729
      %s1750 = sadd.s32 %s313, 38
      %s1751 = scalar_lea.vmem %s287, %s1750
      %v1752 = vld [vmem:[%s1751] sm:$0xff]
      %v1753 = vld [vmem:[%s1751 + $0x8] sm:$0xff]
      %v1754 = vld [vmem:[%s1751 + $0x10] sm:$0xff]
      %v1755 = vld [vmem:[%s1751 + $0x18] sm:$0xff]
      %v1756 = vld [vmem:[%s1751 + $0x20] sm:$0xff]
      %v1757 = vld [vmem:[%s1751 + $0x28] sm:$0xff]
      %v1758 = vld [vmem:[%s1751 + $0x30] sm:$0xff]
      %v1759 = vld [vmem:[%s1751 + $0x38] sm:$0xff]
      %v1760 = vld [vmem:[%s1751 + $0x40] sm:$0xff]
      %v1761 = vld [vmem:[%s1751 + $0x48] sm:$0xff]
      %v1762 = vld [vmem:[%s1751 + $0x50] sm:$0xff]
      %v1763 = vld [vmem:[%s1751 + $0x58] sm:$0xff]
      %v1764 = vld [vmem:[%s1751 + $0x60] sm:$0xff]
      %v1765 = vld [vmem:[%s1751 + $0x68] sm:$0xff]
      %v1766 = vld [vmem:[%s1751 + $0x70] sm:$0xff]
      %v1767 = vld [vmem:[%s1751 + $0x78] sm:$0xff]
      %v1768 = vld [vmem:[%s1751 + $0x80] sm:$0xff]
      %v1769 = vld [vmem:[%s1751 + $0x88] sm:$0xff]
      %v1770 = vpack.c.bf16 %v1753, %v1752
      %v1771 = vpack.c.bf16 %v1755, %v1754
      %v1772 = vpack.c.bf16 %v1757, %v1756
      %v1773 = vpack.c.bf16 %v1759, %v1758
      %v1774 = vpack.c.bf16 %v1761, %v1760
      %v1775 = vpack.c.bf16 %v1763, %v1762
      %v1776 = vpack.c.bf16 %v1765, %v1764
      %v1777 = vpack.c.bf16 %v1767, %v1766
      %v1778 = vpack.c.bf16 %v1769, %v1768
      %s1779 = scalar_lea.vmem %s1, 16
      %v1780 = vld [vmem:[%s1779] sm:$0x3]
      %v1782 = vsel %vm374, %v1770, 0
      %v1785 = vsel %vm374, %v1771, 0
      %v1788 = vsel %vm374, %v1772, 0
      %v1791 = vsel %vm374, %v1773, 0
      %v1794 = vsel %vm374, %v1774, 0
      %v1797 = vsel %vm374, %v1775, 0
      %v1800 = vsel %vm374, %v1776, 0
      %v1803 = vsel %vm374, %v1777, 0
      %v1806 = vsel %vm374, %v1778, 0
      %v1809 = vsel %vm402, %v1780, 0
      %1811 = vmatprep.subr.bf16.mxu0 0
      %1812 = vmatpush1.bf16.msra.mxu0 %v1809
      %1813 = vmatprep.subr.bf16.mxu0 0
      %1814 = vmatpush1.bf16.msra.mxu0 0
      %1815 = vmatprep.subr.bf16.mxu0 0
      %1816 = vmatpush1.bf16.msra.mxu0 0
      %1817 = vmatprep.subr.bf16.mxu0 0
      %1818 = vmatpush1.bf16.msra.mxu0 0
      %1819 = vmatprep.subr.bf16.mxu0 0
      %1820 = vmatpush1.bf16.msra.mxu0 0
      %1821 = vmatprep.subr.bf16.mxu0 0
      %1822 = vmatpush1.bf16.msra.mxu0 0
      %1823 = vmatprep.subr.bf16.mxu0 0
      %1824 = vmatpush1.bf16.msra.mxu0 0
      %1825 = vmatprep.subr.bf16.mxu0 0
      %1826 = vmatpush1.bf16.msra.mxu0 0
      %1827 = vmatprep.subr.bf16.mxu0 0
      %1828 = vmatpush1.bf16.msra.mxu0 0
      %1829 = vmatprep.subr.bf16.mxu0 0
      %1830 = vmatpush1.bf16.msra.mxu0 0
      %1831 = vmatprep.subr.bf16.mxu0 0
      %1832 = vmatpush1.bf16.msra.mxu0 0
      %1833 = vmatprep.subr.bf16.mxu0 0
      %1834 = vmatpush1.bf16.msra.mxu0 0
      %1835 = vmatprep.subr.bf16.mxu0 0
      %1836 = vmatpush1.bf16.msra.mxu0 0
      %1837 = vmatprep.subr.bf16.mxu0 0
      %1838 = vmatpush1.bf16.msra.mxu0 0
      %1839 = vmatprep.subr.bf16.mxu0 0
      %1840 = vmatpush1.bf16.msra.mxu0 0
      %1841 = vmatprep.subr.bf16.mxu0 0
      %1842 = vmatpush1.bf16.msra.mxu0 0
      %1843 = vmatprep.mubr.bf16.mxu0 0
      %1844 = vmatmul.mubr.bf16.gmra.mrb[0].mxu0 %v1782
      %v1845 = vpop.f32.mrb[0].mxu0
      %v1846 = vadd.f32 0.0, %v1845
      %v1847 = vpop.f32.mrb[0].mxu0
      %v1848 = vpop.f32.mrb[0].mxu0
      %v1849 = vadd.f32 0.0, %v1848
      %v1850 = vpop.f32.mrb[0].mxu0
      %1851 = vmatprep.mubr.bf16.mxu0 0
      %1852 = vmatmul.mubr.bf16.gmra.mrb[0].mxu0 %v1785
      %v1853 = vpop.f32.mrb[0].mxu0
      %v1854 = vadd.f32 0.0, %v1853
      %v1855 = vpop.f32.mrb[0].mxu0
      %v1856 = vpop.f32.mrb[0].mxu0
      %v1857 = vadd.f32 0.0, %v1856
      %v1858 = vpop.f32.mrb[0].mxu0
      %1859 = vmatprep.mubr.bf16.mxu0 0
      %1860 = vmatmul.mubr.bf16.gmra.mrb[0].mxu0 %v1788
      %v1861 = vpop.f32.mrb[0].mxu0
      %v1862 = vadd.f32 0.0, %v1861
      %v1863 = vpop.f32.mrb[0].mxu0
      %v1864 = vpop.f32.mrb[0].mxu0
      %v1865 = vadd.f32 0.0, %v1864
      %v1866 = vpop.f32.mrb[0].mxu0
      %1867 = vmatprep.mubr.bf16.mxu0 0
      %1868 = vmatmul.mubr.bf16.gmra.mrb[0].mxu0 %v1791
      %v1869 = vpop.f32.mrb[0].mxu0
      %v1870 = vadd.f32 0.0, %v1869
      %v1871 = vpop.f32.mrb[0].mxu0
      %v1872 = vpop.f32.mrb[0].mxu0
      %v1873 = vadd.f32 0.0, %v1872
      %v1874 = vpop.f32.mrb[0].mxu0
      %1875 = vmatprep.mubr.bf16.mxu0 0
      %1876 = vmatmul.mubr.bf16.gmra.mrb[0].mxu0 %v1794
      %v1877 = vpop.f32.mrb[0].mxu0
      %v1878 = vadd.f32 0.0, %v1877
      %v1879 = vpop.f32.mrb[0].mxu0
      %v1880 = vpop.f32.mrb[0].mxu0
      %v1881 = vadd.f32 0.0, %v1880
      %v1882 = vpop.f32.mrb[0].mxu0
      %1883 = vmatprep.mubr.bf16.mxu0 0
      %1884 = vmatmul.mubr.bf16.gmra.mrb[0].mxu0 %v1797
      %v1885 = vpop.f32.mrb[0].mxu0
      %v1886 = vadd.f32 0.0, %v1885
      %v1887 = vpop.f32.mrb[0].mxu0
      %v1888 = vpop.f32.mrb[0].mxu0
      %v1889 = vadd.f32 0.0, %v1888
      %v1890 = vpop.f32.mrb[0].mxu0
      %1891 = vmatprep.mubr.bf16.mxu0 0
      %1892 = vmatmul.mubr.bf16.gmra.mrb[0].mxu0 %v1800
      %v1893 = vpop.f32.mrb[0].mxu0
      %v1894 = vadd.f32 0.0, %v1893
      %v1895 = vpop.f32.mrb[0].mxu0
      %v1896 = vpop.f32.mrb[0].mxu0
      %v1897 = vadd.f32 0.0, %v1896
      %v1898 = vpop.f32.mrb[0].mxu0
      %1899 = vmatprep.mubr.bf16.mxu0 0
      %1900 = vmatmul.mubr.bf16.gmra.mrb[0].mxu0 %v1803
      %v1901 = vpop.f32.mrb[0].mxu0
      %v1902 = vadd.f32 0.0, %v1901
      %v1903 = vpop.f32.mrb[0].mxu0
      %v1904 = vpop.f32.mrb[0].mxu0
      %v1905 = vadd.f32 0.0, %v1904
      %v1906 = vpop.f32.mrb[0].mxu0
      %1907 = vmatprep.mubr.bf16.mxu0 0
      %1908 = vmatmul.mubr.bf16.gmra.mrb[0].mxu0 %v1806
      %v1909 = vpop.f32.mrb[0].mxu0
      %v1910 = vadd.f32 0.0, %v1909
      %v1911 = vpop.f32.mrb[0].mxu0
      %v1912 = vpop.f32.mrb[0].mxu0
      %v1913 = vadd.f32 0.0, %v1912
      %v1914 = vpop.f32.mrb[0].mxu0
      %1915 = vdwg.mxu0
      %v1916 = vadd.f32 %v1732, %v1846
      %v1917 = vadd.f32 %v1733, %v1849
      %v1918 = vadd.f32 %v1734, %v1854
      %v1919 = vadd.f32 %v1735, %v1857
      %v1920 = vadd.f32 %v1736, %v1862
      %v1921 = vadd.f32 %v1737, %v1865
      %v1922 = vadd.f32 %v1738, %v1870
      %v1923 = vadd.f32 %v1739, %v1873
      %v1924 = vadd.f32 %v1740, %v1878
      %v1925 = vadd.f32 %v1741, %v1881
      %v1926 = vadd.f32 %v1742, %v1886
      %v1927 = vadd.f32 %v1743, %v1889
      %v1928 = vadd.f32 %v1744, %v1894
      %v1929 = vadd.f32 %v1745, %v1897
      %v1930 = vadd.f32 %v1746, %v1902
      %v1931 = vadd.f32 %v1747, %v1905
      %v1932 = vadd.f32 %v1748, %v1910
      %v1933 = vadd.f32 %v1749, %v1913
      %v1934 = vld [vmem:[%s2] sm:$0x1]
      %v1936 = vlaneseq
      %v1937 = vshrl.u32 %v1936, 7
      %v1938 = vsub.s32 0, %v1937
      %v1939 = vrot.slane %v1934, %v1938
      %v1941 = vadd.f32 %v1916, %v1939
      %v1942 = vadd.f32 %v1917, %v1939
      %v1943 = vadd.f32 %v1918, %v1939
      %v1944 = vadd.f32 %v1919, %v1939
      %v1945 = vadd.f32 %v1920, %v1939
      %v1946 = vadd.f32 %v1921, %v1939
      %v1947 = vadd.f32 %v1922, %v1939
      %v1948 = vadd.f32 %v1923, %v1939
      %v1949 = vadd.f32 %v1924, %v1939
      %v1950 = vadd.f32 %v1925, %v1939
      %v1951 = vadd.f32 %v1926, %v1939
      %v1952 = vadd.f32 %v1927, %v1939
      %v1953 = vadd.f32 %v1928, %v1939
      %v1954 = vadd.f32 %v1929, %v1939
      %v1955 = vadd.f32 %v1930, %v1939
      %v1956 = vadd.f32 %v1931, %v1939
      %v1957 = vadd.f32 %v1932, %v1939
      %v1958 = vadd.f32 %v1933, %v1939
      %1959 = vst [vmem:[%s296] sm:$0xff] %v1941
      %1960 = vst [vmem:[%s296 + $0x8] sm:$0xff] %v1942
      %1961 = vst [vmem:[%s296 + $0x10] sm:$0xff] %v1943
      %1962 = vst [vmem:[%s296 + $0x18] sm:$0xff] %v1944
      %1963 = vst [vmem:[%s296 + $0x20] sm:$0xff] %v1945
      %1964 = vst [vmem:[%s296 + $0x28] sm:$0xff] %v1946
      %1965 = vst [vmem:[%s296 + $0x30] sm:$0xff] %v1947
      %1966 = vst [vmem:[%s296 + $0x38] sm:$0xff] %v1948
      %1967 = vst [vmem:[%s296 + $0x40] sm:$0xff] %v1949
      %1968 = vst [vmem:[%s296 + $0x48] sm:$0xff] %v1950
      %1969 = vst [vmem:[%s296 + $0x50] sm:$0xff] %v1951
      %1970 = vst [vmem:[%s296 + $0x58] sm:$0xff] %v1952
      %1971 = vst [vmem:[%s296 + $0x60] sm:$0xff] %v1953
      %1972 = vst [vmem:[%s296 + $0x68] sm:$0xff] %v1954
      %1973 = vst [vmem:[%s296 + $0x70] sm:$0xff] %v1955
      %1974 = vst [vmem:[%s296 + $0x78] sm:$0xff] %v1956
      %1975 = vst [vmem:[%s296 + $0x80] sm:$0xff] %v1957
      %1976 = vst [vmem:[%s296 + $0x88] sm:$0xff] %v1958
      %v1977 = vld [vmem:[%s3] sm:$0xff]
      %v1978 = vld [vmem:[%s3 + $0x8] sm:$0xff]
      %v1979 = vld [vmem:[%s3 + $0x10] sm:$0xff]
      %v1980 = vld [vmem:[%s3 + $0x18] sm:$0xff]
      %v1981 = vld [vmem:[%s3 + $0x20] sm:$0xff]
      %v1982 = vld [vmem:[%s3 + $0x28] sm:$0xff]
      %v1983 = vld [vmem:[%s3 + $0x30] sm:$0xff]
      %v1984 = vld [vmem:[%s3 + $0x38] sm:$0xff]
      %v1985 = vld [vmem:[%s3 + $0x40] sm:$0xff]
      %v1986 = vld [vmem:[%s3 + $0x48] sm:$0xff]
      %v1987 = vld [vmem:[%s3 + $0x50] sm:$0xff]
      %v1988 = vld [vmem:[%s3 + $0x58] sm:$0xff]
      %v1989 = vld [vmem:[%s3 + $0x60] sm:$0xff]
      %v1990 = vld [vmem:[%s3 + $0x68] sm:$0xff]
      %v1991 = vld [vmem:[%s3 + $0x70] sm:$0xff]
      %v1992 = vld [vmem:[%s3 + $0x78] sm:$0xff]
      %v1993 = vld [vmem:[%s3 + $0x80] sm:$0xff]
      %v1994 = vld [vmem:[%s3 + $0x88] sm:$0xff]
      %1996 = vset.pattern.permute.xlu0 0
      %1997 = vperm.xlu0 %1996, %v1977
      %v1998 = vpop.permute.xlu0 %1997
      %2001 = vset.pattern.permute.xlu0 0
      %2002 = vperm.xlu0 %2001, %v1978
      %v2003 = vpop.permute.xlu0 %2002
      %2006 = vset.pattern.permute.xlu0 0
      %2007 = vperm.xlu0 %2006, %v1979
      %v2008 = vpop.permute.xlu0 %2007
      %2011 = vset.pattern.permute.xlu0 0
      %2012 = vperm.xlu0 %2011, %v1980
      %v2013 = vpop.permute.xlu0 %2012
      %2016 = vset.pattern.permute.xlu0 0
      %2017 = vperm.xlu0 %2016, %v1981
      %v2018 = vpop.permute.xlu0 %2017
      %2021 = vset.pattern.permute.xlu0 0
      %2022 = vperm.xlu0 %2021, %v1982
      %v2023 = vpop.permute.xlu0 %2022
      %2026 = vset.pattern.permute.xlu0 0
      %2027 = vperm.xlu0 %2026, %v1983
      %v2028 = vpop.permute.xlu0 %2027
      %2031 = vset.pattern.permute.xlu0 0
      %2032 = vperm.xlu0 %2031, %v1984
      %v2033 = vpop.permute.xlu0 %2032
      %2036 = vset.pattern.permute.xlu0 0
      %2037 = vperm.xlu0 %2036, %v1985
      %v2038 = vpop.permute.xlu0 %2037
      %2041 = vset.pattern.permute.xlu0 0
      %2042 = vperm.xlu0 %2041, %v1986
      %v2043 = vpop.permute.xlu0 %2042
      %2046 = vset.pattern.permute.xlu0 0
      %2047 = vperm.xlu0 %2046, %v1987
      %v2048 = vpop.permute.xlu0 %2047
      %2051 = vset.pattern.permute.xlu0 0
      %2052 = vperm.xlu0 %2051, %v1988
      %v2053 = vpop.permute.xlu0 %2052
      %2056 = vset.pattern.permute.xlu0 0
      %2057 = vperm.xlu0 %2056, %v1989
      %v2058 = vpop.permute.xlu0 %2057
      %2061 = vset.pattern.permute.xlu0 0
      %2062 = vperm.xlu0 %2061, %v1990
      %v2063 = vpop.permute.xlu0 %2062
      %2066 = vset.pattern.permute.xlu0 0
      %2067 = vperm.xlu0 %2066, %v1991
      %v2068 = vpop.permute.xlu0 %2067
      %2071 = vset.pattern.permute.xlu0 0
      %2072 = vperm.xlu0 %2071, %v1992
      %v2073 = vpop.permute.xlu0 %2072
      %2076 = vset.pattern.permute.xlu0 0
      %2077 = vperm.xlu0 %2076, %v1993
      %v2078 = vpop.permute.xlu0 %2077
      %2081 = vset.pattern.permute.xlu0 0
      %2082 = vperm.xlu0 %2081, %v1994
      %v2083 = vpop.permute.xlu0 %2082
      %v2085 = vmul.f32 %v1941, %v1998
      %v2086 = vmul.f32 %v1942, %v2003
      %v2087 = vmul.f32 %v1943, %v2008
      %v2088 = vmul.f32 %v1944, %v2013
      %v2089 = vmul.f32 %v1945, %v2018
      %v2090 = vmul.f32 %v1946, %v2023
      %v2091 = vmul.f32 %v1947, %v2028
      %v2092 = vmul.f32 %v1948, %v2033
      %v2093 = vmul.f32 %v1949, %v2038
      %v2094 = vmul.f32 %v1950, %v2043
      %v2095 = vmul.f32 %v1951, %v2048
      %v2096 = vmul.f32 %v1952, %v2053
      %v2097 = vmul.f32 %v1953, %v2058
      %v2098 = vmul.f32 %v1954, %v2063
      %v2099 = vmul.f32 %v1955, %v2068
      %v2100 = vmul.f32 %v1956, %v2073
      %v2101 = vmul.f32 %v1957, %v2078
      %v2102 = vmul.f32 %v1958, %v2083
      %v2103 = vadd.f32 %v2085, %v2086
      %v2104 = vadd.f32 %v2103, %v2087
      %v2105 = vadd.f32 %v2104, %v2088
      %v2106 = vadd.f32 %v2105, %v2089
      %v2107 = vadd.f32 %v2106, %v2090
      %v2108 = vadd.f32 %v2107, %v2091
      %v2109 = vadd.f32 %v2108, %v2092
      %v2110 = vadd.f32 %v2109, %v2093
      %v2111 = vadd.f32 %v2110, %v2094
      %v2112 = vadd.f32 %v2111, %v2095
      %v2113 = vadd.f32 %v2112, %v2096
      %v2114 = vadd.f32 %v2113, %v2097
      %v2115 = vadd.f32 %v2114, %v2098
      %v2116 = vadd.f32 %v2115, %v2099
      %v2117 = vadd.f32 %v2116, %v2100
      %v2118 = vadd.f32 %v2117, %v2101
      %v2119 = vadd.f32 %v2118, %v2102
      %v2120 = vrot.slane %v2119, 4
      %v2121 = vadd.f32 %v2119, %v2120
      %v2122 = vrot.slane %v2121, 2
      %v2123 = vadd.f32 %v2121, %v2122
      %v2124 = vrot.slane %v2123, 1
      %v2125 = vadd.f32 %v2123, %v2124
      %2126 = vst [vmem:[%s304] sm:$0x1] %v2125
      %v2127 = vmul.f32 %v2085, %v2085
      %v2128 = vmul.f32 %v2086, %v2086
      %v2129 = vmul.f32 %v2087, %v2087
      %v2130 = vmul.f32 %v2088, %v2088
      %v2131 = vmul.f32 %v2089, %v2089
      %v2132 = vmul.f32 %v2090, %v2090
      %v2133 = vmul.f32 %v2091, %v2091
      %v2134 = vmul.f32 %v2092, %v2092
      %v2135 = vmul.f32 %v2093, %v2093
      %v2136 = vmul.f32 %v2094, %v2094
      %v2137 = vmul.f32 %v2095, %v2095
      %v2138 = vmul.f32 %v2096, %v2096
      %v2139 = vmul.f32 %v2097, %v2097
      %v2140 = vmul.f32 %v2098, %v2098
      %v2141 = vmul.f32 %v2099, %v2099
      %v2142 = vmul.f32 %v2100, %v2100
      %v2143 = vmul.f32 %v2101, %v2101
      %v2144 = vmul.f32 %v2102, %v2102
      %v2145 = vadd.f32 %v2127, %v2128
      %v2146 = vadd.f32 %v2145, %v2129
      %v2147 = vadd.f32 %v2146, %v2130
      %v2148 = vadd.f32 %v2147, %v2131
      %v2149 = vadd.f32 %v2148, %v2132
      %v2150 = vadd.f32 %v2149, %v2133
      %v2151 = vadd.f32 %v2150, %v2134
      %v2152 = vadd.f32 %v2151, %v2135
      %v2153 = vadd.f32 %v2152, %v2136
      %v2154 = vadd.f32 %v2153, %v2137
      %v2155 = vadd.f32 %v2154, %v2138
      %v2156 = vadd.f32 %v2155, %v2139
      %v2157 = vadd.f32 %v2156, %v2140
      %v2158 = vadd.f32 %v2157, %v2141
      %v2159 = vadd.f32 %v2158, %v2142
      %v2160 = vadd.f32 %v2159, %v2143
      %v2161 = vadd.f32 %v2160, %v2144
      %v2162 = vrot.slane %v2161, 4
      %v2163 = vadd.f32 %v2161, %v2162
      %v2164 = vrot.slane %v2163, 2
      %v2165 = vadd.f32 %v2163, %v2164
      %v2166 = vrot.slane %v2165, 1
      %v2167 = vadd.f32 %v2165, %v2166
      %2168 = vst [vmem:[%s311] sm:$0x1] %v2167
      %s2169 = smul.u32 18, %s23
      %p2170 = scmp.lt.s32.totalorder %s22, 1
      %s2171 = scalar_select %p2170, %s22, 1
      %p2172 = scmp.lt.s32.totalorder %s2169, 35
      %s2173 = scalar_select %p2172, %s2169, 35
      %s2174 = smul.addr %s2171, 36
      %s2175 = sadd.s32 %s2173, %s2174
      %s2176 = smul.addr %s2175, 8
      %s2177 = scalar_lea.vmem %s4, %s2176
      %p2178 = scmp.lt.s32.totalorder %s22, 1
      %s2179 = scalar_select %p2178, %s22, 1
      %p2180 = scmp.lt.s32.totalorder %s23, 1
      %s2181 = scalar_select %p2180, %s23, 1
      %s2182 = smul.addr %s2179, 2
      %s2183 = sadd.s32 %s2181, %s2182
      %s2184 = scalar_lea.vmem %s5, %s2183
      %p2185 = scmp.lt.s32.totalorder %s22, 1
      %s2186 = scalar_select %p2185, %s22, 1
      %p2187 = scmp.lt.s32.totalorder %s23, 1
      %s2188 = scalar_select %p2187, %s23, 1
      %s2189 = smul.addr %s2186, 2
      %s2190 = sadd.s32 %s2188, %s2189
      %s2191 = scalar_lea.vmem %s6, %s2190
      // Predicated region
      $region37: #{middle_block.4} parent=35 // pred_check
        %p2192 = pneg %p139
      $region38: #{middle_block.4} parent=35 // pred_check_branch
        %2194 = sbr.rel (%p2192) target = $region40
      $region39: #{middle_block.4} parent=35 // pred_region
        %s2195 = smul.u32 18, %s23
      $region40: #{middle_block.4} parent=35 // pred_fallthru
        _
      // Predicated region
      $region41: #{middle_block.4} parent=35 // pred_check
        %p2196 = pneg %p167
      $region42: #{middle_block.4} parent=35 // pred_check_branch
        %2198 = sbr.rel (%p2196) target = $region44
      $region43: #{middle_block.4} parent=35 // pred_region
        _
      $region44: #{middle_block.4} parent=35 // pred_fallthru
        _
      // Predicated region
      $region45: #{middle_block.4} parent=35 // pred_check
        %p2199 = pneg %p195
      $region46: #{middle_block.4} parent=35 // pred_check_branch
        %2201 = sbr.rel (%p2199) target = $region48
      $region47: #{middle_block.4} parent=35 // pred_region
        _
      $region48: #{middle_block.4} parent=35 // pred_fallthru
        _
    $region36: #{middle_block.4} parent=5 // pred_fallthru
      _
    %p2202 = scmp.le.s32.totalorder 2, %s13
    // Predicated region
    $region49: #{middle_block.4} parent=5 // pred_check
      %p2203 = pneg %p2202
    $region50: #{middle_block.4} parent=5 // pred_check_branch
      %2205 = sbr.rel (%p2203) target = $region52
    $region51: #{middle_block.4} parent=5 // pred_region
      %s2206 = ssub.s32 %s13, 2
      // Predicated region
      $region53: #{middle_block.4} parent=51 // pred_check
        %p2207 = pneg %p145
      $region54: #{middle_block.4} parent=51 // pred_check_branch
        %2209 = sbr.rel (%p2207) target = $region56
      $region55: #{middle_block.4} parent=51 // pred_region
        %s2210 = smul.u32 18, %s25
        %p2211 = scmp.lt.s32.totalorder %s24, 1
        %s2212 = scalar_select %p2211, %s24, 1
        %p2213 = scmp.lt.s32.totalorder %s2210, 35
        %s2214 = scalar_select %p2213, %s2210, 35
        %s2215 = smul.addr %s2212, 36
        %s2216 = sadd.s32 %s2214, %s2215
        %s2217 = smul.addr %s2216, 8
        %s2218 = scalar_lea.vmem %s4, %s2217
      $region56: #{middle_block.4} parent=51 // pred_fallthru
        _
      // Predicated region
      $region57: #{middle_block.4} parent=51 // pred_check
        %p2219 = pneg %p173
      $region58: #{middle_block.4} parent=51 // pred_check_branch
        %2221 = sbr.rel (%p2219) target = $region60
      $region59: #{middle_block.4} parent=51 // pred_region
        %p2222 = scmp.lt.s32.totalorder %s24, 1
        %s2223 = scalar_select %p2222, %s24, 1
        %p2224 = scmp.lt.s32.totalorder %s25, 1
        %s2225 = scalar_select %p2224, %s25, 1
        %s2226 = smul.addr %s2223, 2
        %s2227 = sadd.s32 %s2225, %s2226
        %s2228 = scalar_lea.vmem %s5, %s2227
      $region60: #{middle_block.4} parent=51 // pred_fallthru
        _
      // Predicated region
      $region61: #{middle_block.4} parent=51 // pred_check
        %p2229 = pneg %p201
      $region62: #{middle_block.4} parent=51 // pred_check_branch
        %2231 = sbr.rel (%p2229) target = $region64
      $region63: #{middle_block.4} parent=51 // pred_region
        %p2232 = scmp.lt.s32.totalorder %s24, 1
        %s2233 = scalar_select %p2232, %s24, 1
        %p2234 = scmp.lt.s32.totalorder %s25, 1
        %s2235 = scalar_select %p2234, %s25, 1
        %s2236 = smul.addr %s2233, 2
        %s2237 = sadd.s32 %s2235, %s2236
        %s2238 = scalar_lea.vmem %s6, %s2237
      $region64: #{middle_block.4} parent=51 // pred_fallthru
        _
    $region52: #{middle_block.4} parent=5 // pred_fallthru
      _
  $region6: #{middle_block.4} parent=0 // loop_footer
    %s17 = sadd.s32 1, %s13
  $region7: #{middle_block.4} parent=0 // loop_footer_branch
    %12 = sbr.rel target = $region3
  $region8: #{middle_block.4} parent=0 // loop_exit
    _

// kernel: middle_block.6
$region0: #{middle_block.6}
  #allocation0 [shape = 'u32[]', space=smem, size = 0x4, offset = 0x4, fixed_abs, tag = 'smem constant byte address 0x4 - core index']
  #allocation1 [shape = 'u32[144,128]{1,0:T(1,128)}', space=vmem, size = 0x12000, scoped, tag = 'internal scratch']
  %s0 = inlined_call_operand.vmem [shape: f32[2,342,8], index: 0, kind: input, shape index: {}]
  %s1 = inlined_call_operand.vmem [shape: bf16[9,8,128], index: 1, kind: input, shape index: {}]
  %s2 = inlined_call_operand.vmem [shape: f32[1,128], index: 2, kind: input, shape index: {}]
  %s3 = inlined_call_operand.vmem [shape: f32[144,1], index: 3, kind: input, shape index: {}]
  %s4 = inlined_call_operand.vmem [shape: f32[2,288,128], index: 4, kind: output, shape index: {0}]
  %s5 = inlined_call_operand.vmem [shape: f32[2,2,1,128], index: 5, kind: output, shape index: {1}]
  %s6 = inlined_call_operand.vmem [shape: f32[2,2,1,128], index: 6, kind: output, shape index: {2}]
  %7 = xla_tuple %s4, %s5, %s6
  %s8 = sld [smem:[#allocation0]]
  $region65: #{middle_block.6} parent=0
    _
  %s10 = ssub.s32 1, %s8
  %s11 = scalar_select 0, %s10, %s8
  loop: start=0, step=1, limit=6
  $region2: #{middle_block.6} parent=0 // loop_pre_header
    _
  $region3: #{middle_block.6} parent=0 // loop_header
    %s13 = sphi 0, %s17
    %p14 = scmp.ge.s32.totalorder %s13, 6
    %s20 = sphi 0, %s32
    %s21 = sphi 0, %s28
    %s22 = sphi 0, %s20
    %s23 = sphi 0, %s21
    %s24 = sphi 0, %s22
    %s25 = sphi 0, %s23
    %s35 = sphi 0, %s37
    %s38 = sphi 0, %s35
    %s39 = sphi 0, %s38
    %s55 = sphi 0, %s39
    %s59 = sphi 0, %s59
    %s61 = sphi 0, %s59
    %s62 = sphi 0, %s61
    %s76 = sphi 0, %s62
    %s80 = sphi 0, %s80
    %s82 = sphi 0, %s80
    %s83 = sphi 0, %s82
    %s97 = sphi 0, %s83
    %s101 = sphi 0, %s101
    %s103 = sphi 0, %s101
    %s104 = sphi 0, %s103
    %s118 = sphi 0, %s104
    %s126 = sphi 0, %s128
    %s129 = sphi 0, %s126
    %s130 = sphi 0, %s129
    %s146 = sphi 0, %s130
    %s154 = sphi 0, %s156
    %s157 = sphi 0, %s154
    %s158 = sphi 0, %s157
    %s174 = sphi 0, %s158
    %s182 = sphi 0, %s184
    %s185 = sphi 0, %s182
    %s186 = sphi 0, %s185
    %s202 = sphi 0, %s186
  $region4: #{middle_block.6} parent=0 // loop_header_branch
    %16 = sbr.rel (%p14) target = $region8
  $region5: #{middle_block.6} parent=0 // loop_body
    %s18 = ssub.s32 %s13, 1
    %s19 = ssub.s32 %s13, 2
    %s26 = sadd.s32 1, %s21
    %p27 = scmp.ge.s32.totalorder %s26, 2
    %s28 = scalar_select %p27, 0, %s26
    %s29 = sadd.s32 1, %s20
    %s30 = scalar_select %p27, %s29, %s20
    %p31 = scmp.ge.s32.totalorder %s30, 2
    %s32 = scalar_select %p31, 0, %s30
    %s33 = ssub.s32 %s20, %s32
    %p34 = scmp.eq.s32.totalorder %s33, 0
    %s36 = sadd.s32 %s35, 1
    %s37 = scalar_select %p34, %s35, %s36
    %p40 = pneg %p34
    %p41 = scmp.eq.s32.totalorder %s13, 3
    %p42 = por %p40, %p41
    %p43 = scmp.ne.s32.totalorder %s35, %s38
    %p44 = scmp.eq.s32.totalorder %s13, 0
    %p45 = por %p43, %p44
    %p46 = scmp.ne.s32.totalorder %s35, %s38
    %p47 = scmp.eq.s32.totalorder %s18, 3
    %p48 = por %p46, %p47
    %p49 = scmp.ne.s32.totalorder %s38, %s39
    %p50 = scmp.eq.s32.totalorder %s18, 0
    %p51 = por %p49, %p50
    %p52 = scmp.ne.s32.totalorder %s38, %s39
    %p53 = scmp.eq.s32.totalorder %s19, 3
    %p54 = por %p52, %p53
    %p56 = scmp.ne.s32.totalorder %s39, %s55
    %p57 = scmp.eq.s32.totalorder %s19, 0
    %p58 = por %p56, %p57
    %s60 = sadd.s32 %s59, 1
    %p63 = scmp.eq.s32.totalorder %s13, 3
    %p64 = scmp.ne.s32.totalorder %s59, %s61
    %p65 = scmp.eq.s32.totalorder %s13, 0
    %p66 = por %p64, %p65
    %p67 = scmp.ne.s32.totalorder %s59, %s61
    %p68 = scmp.eq.s32.totalorder %s18, 3
    %p69 = por %p67, %p68
    %p70 = scmp.ne.s32.totalorder %s61, %s62
    %p71 = scmp.eq.s32.totalorder %s18, 0
    %p72 = por %p70, %p71
    %p73 = scmp.ne.s32.totalorder %s61, %s62
    %p74 = scmp.eq.s32.totalorder %s19, 3
    %p75 = por %p73, %p74
    %p77 = scmp.ne.s32.totalorder %s62, %s76
    %p78 = scmp.eq.s32.totalorder %s19, 0
    %p79 = por %p77, %p78
    %s81 = sadd.s32 %s80, 1
    %p84 = scmp.eq.s32.totalorder %s13, 3
    %p85 = scmp.ne.s32.totalorder %s80, %s82
    %p86 = scmp.eq.s32.totalorder %s13, 0
    %p87 = por %p85, %p86
    %p88 = scmp.ne.s32.totalorder %s80, %s82
    %p89 = scmp.eq.s32.totalorder %s18, 3
    %p90 = por %p88, %p89
    %p91 = scmp.ne.s32.totalorder %s82, %s83
    %p92 = scmp.eq.s32.totalorder %s18, 0
    %p93 = por %p91, %p92
    %p94 = scmp.ne.s32.totalorder %s82, %s83
    %p95 = scmp.eq.s32.totalorder %s19, 3
    %p96 = por %p94, %p95
    %p98 = scmp.ne.s32.totalorder %s83, %s97
    %p99 = scmp.eq.s32.totalorder %s19, 0
    %p100 = por %p98, %p99
    %s102 = sadd.s32 %s101, 1
    %p105 = scmp.eq.s32.totalorder %s13, 3
    %p106 = scmp.ne.s32.totalorder %s101, %s103
    %p107 = scmp.eq.s32.totalorder %s13, 0
    %p108 = por %p106, %p107
    %p109 = scmp.ne.s32.totalorder %s101, %s103
    %p110 = scmp.eq.s32.totalorder %s18, 3
    %p111 = por %p109, %p110
    %p112 = scmp.ne.s32.totalorder %s103, %s104
    %p113 = scmp.eq.s32.totalorder %s18, 0
    %p114 = por %p112, %p113
    %p115 = scmp.ne.s32.totalorder %s103, %s104
    %p116 = scmp.eq.s32.totalorder %s19, 3
    %p117 = por %p115, %p116
    %p119 = scmp.ne.s32.totalorder %s104, %s118
    %p120 = scmp.eq.s32.totalorder %s19, 0
    %p121 = por %p119, %p120
    %s122 = ssub.s32 %s20, %s32
    %s123 = ssub.s32 %s21, %s28
    %s124 = sor.u32 %s122, %s123
    %p125 = scmp.eq.s32.totalorder %s124, 0
    %s127 = sadd.s32 %s126, 1
    %s128 = scalar_select %p125, %s126, %s127
    %p131 = pneg %p125
    %p132 = scmp.eq.s32.totalorder %s13, 3
    %p133 = por %p131, %p132
    %p134 = scmp.ne.s32.totalorder %s126, %s129
    %p135 = scmp.eq.s32.totalorder %s13, 0
    %p136 = por %p134, %p135
    %p137 = scmp.ne.s32.totalorder %s126, %s129
    %p138 = scmp.eq.s32.totalorder %s18, 3
    %p139 = por %p137, %p138
    %p140 = scmp.ne.s32.totalorder %s129, %s130
    %p141 = scmp.eq.s32.totalorder %s18, 0
    %p142 = por %p140, %p141
    %p143 = scmp.ne.s32.totalorder %s129, %s130
    %p144 = scmp.eq.s32.totalorder %s19, 3
    %p145 = por %p143, %p144
    %p147 = scmp.ne.s32.totalorder %s130, %s146
    %p148 = scmp.eq.s32.totalorder %s19, 0
    %p149 = por %p147, %p148
    %s150 = ssub.s32 %s20, %s32
    %s151 = ssub.s32 %s21, %s28
    %s152 = sor.u32 %s150, %s151
    %p153 = scmp.eq.s32.totalorder %s152, 0
    %s155 = sadd.s32 %s154, 1
    %s156 = scalar_select %p153, %s154, %s155
    %p159 = pneg %p153
    %p160 = scmp.eq.s32.totalorder %s13, 3
    %p161 = por %p159, %p160
    %p162 = scmp.ne.s32.totalorder %s154, %s157
    %p163 = scmp.eq.s32.totalorder %s13, 0
    %p164 = por %p162, %p163
    %p165 = scmp.ne.s32.totalorder %s154, %s157
    %p166 = scmp.eq.s32.totalorder %s18, 3
    %p167 = por %p165, %p166
    %p168 = scmp.ne.s32.totalorder %s157, %s158
    %p169 = scmp.eq.s32.totalorder %s18, 0
    %p170 = por %p168, %p169
    %p171 = scmp.ne.s32.totalorder %s157, %s158
    %p172 = scmp.eq.s32.totalorder %s19, 3
    %p173 = por %p171, %p172
    %p175 = scmp.ne.s32.totalorder %s158, %s174
    %p176 = scmp.eq.s32.totalorder %s19, 0
    %p177 = por %p175, %p176
    %s178 = ssub.s32 %s20, %s32
    %s179 = ssub.s32 %s21, %s28
    %s180 = sor.u32 %s178, %s179
    %p181 = scmp.eq.s32.totalorder %s180, 0
    %s183 = sadd.s32 %s182, 1
    %s184 = scalar_select %p181, %s182, %s183
    %p187 = pneg %p181
    %p188 = scmp.eq.s32.totalorder %s13, 3
    %p189 = por %p187, %p188
    %p190 = scmp.ne.s32.totalorder %s182, %s185
    %p191 = scmp.eq.s32.totalorder %s13, 0
    %p192 = por %p190, %p191
    %p193 = scmp.ne.s32.totalorder %s182, %s185
    %p194 = scmp.eq.s32.totalorder %s18, 3
    %p195 = por %p193, %p194
    %p196 = scmp.ne.s32.totalorder %s185, %s186
    %p197 = scmp.eq.s32.totalorder %s18, 0
    %p198 = por %p196, %p197
    %p199 = scmp.ne.s32.totalorder %s185, %s186
    %p200 = scmp.eq.s32.totalorder %s19, 3
    %p201 = por %p199, %p200
    %p203 = scmp.ne.s32.totalorder %s186, %s202
    %p204 = scmp.eq.s32.totalorder %s19, 0
    %p205 = por %p203, %p204
    %p206 = scmp.le.s32.totalorder 1, %s13
    %p207 = scmp.lt.s32.totalorder %s13, 5
    %p208 = pnand %p206, %p207
    %p209 = pneg %p208
    // Predicated region
    $region9: #{middle_block.6} parent=5 // pred_check
      _
    $region10: #{middle_block.6} parent=5 // pred_check_branch
      %211 = sbr.rel (%p208) target = $region12
    $region11: #{middle_block.6} parent=5 // pred_region
      %s212 = ssub.s32 %s13, 1
      // Predicated region
      $region13: #{middle_block.6} parent=11 // pred_check
        %p213 = pneg %p72
      $region14: #{middle_block.6} parent=11 // pred_check_branch
        %215 = sbr.rel (%p213) target = $region16
      $region15: #{middle_block.6} parent=11 // pred_region
        _
      $region16: #{middle_block.6} parent=11 // pred_fallthru
        _
      // Predicated region
      $region17: #{middle_block.6} parent=11 // pred_check
        %p216 = pneg %p93
      $region18: #{middle_block.6} parent=11 // pred_check_branch
        %218 = sbr.rel (%p216) target = $region20
      $region19: #{middle_block.6} parent=11 // pred_region
        _
      $region20: #{middle_block.6} parent=11 // pred_fallthru
        _
      // Predicated region
      $region21: #{middle_block.6} parent=11 // pred_check
        %p219 = pneg %p114
      $region22: #{middle_block.6} parent=11 // pred_check_branch
        %221 = sbr.rel (%p219) target = $region24
      $region23: #{middle_block.6} parent=11 // pred_region
        _
      $region24: #{middle_block.6} parent=11 // pred_fallthru
        _
    $region12: #{middle_block.6} parent=5 // pred_fallthru
      _
    %p222 = scmp.lt.s32.totalorder %s13, 4
    // Predicated region
    $region25: #{middle_block.6} parent=5 // pred_check
      %p223 = pneg %p222
    $region26: #{middle_block.6} parent=5 // pred_check_branch
      %225 = sbr.rel (%p223) target = $region28
    $region27: #{middle_block.6} parent=5 // pred_region
      // Predicated region
      $region29: #{middle_block.6} parent=27 // pred_check
        %p226 = pneg %p45
      $region30: #{middle_block.6} parent=27 // pred_check_branch
        %228 = sbr.rel (%p226) target = $region32
      $region31: #{middle_block.6} parent=27 // pred_region
        %p229 = scmp.lt.s32.totalorder %s20, 1
        %s230 = scalar_select %p229, %s20, 1
        %s231 = smul.addr %s230, 43
        %s232 = smul.addr %s231, 8
        %s233 = scalar_lea.vmem %s0, %s232
      $region32: #{middle_block.6} parent=27 // pred_fallthru
        _
    $region28: #{middle_block.6} parent=5 // pred_fallthru
      _
    %p234 = scmp.le.s32.totalorder 1, %s13
    %p235 = scmp.lt.s32.totalorder %s13, 5
    %p236 = pnand %p234, %p235
    %p237 = pneg %p236
    // Predicated region
    $region33: #{middle_block.6} parent=5 // pred_check
      _
    $region34: #{middle_block.6} parent=5 // pred_check_branch
      %239 = sbr.rel (%p236) target = $region36
    $region35: #{middle_block.6} parent=5 // pred_region
      %s240 = ssub.s32 %s13, 1
      %p241 = scmp.lt.s32.totalorder %s22, 1
      %s242 = scalar_select %p241, %s22, 1
      %s243 = smul.addr %s242, 43
      %s244 = smul.addr %s243, 8
      %s245 = scalar_lea.vmem %s0, %s244
      %p246 = pneg %p51
      %p247 = pneg %p48
      %p248 = pneg %p72
      %p249 = pneg %p69
      %p250 = pneg %p93
      %p251 = pneg %p90
      %p252 = pneg %p114
      %p253 = pneg %p111
      %p254 = pneg %p142
      %p255 = pneg %p139
      %s256 = smul.u32 18, %s23
      %p257 = scmp.lt.s32.totalorder %s22, 1
      %s258 = scalar_select %p257, %s22, 1
      %p259 = scmp.lt.s32.totalorder %s256, 35
      %s260 = scalar_select %p259, %s256, 35
      %s261 = smul.addr %s258, 36
      %s262 = sadd.s32 %s260, %s261
      %s263 = smul.addr %s262, 8
      %s264 = scalar_lea.vmem %s4, %s263
      %p265 = pneg %p170
      %p266 = pneg %p167
      %p267 = scmp.lt.s32.totalorder %s22, 1
      %s268 = scalar_select %p267, %s22, 1
      %p269 = scmp.lt.s32.totalorder %s23, 1
      %s270 = scalar_select %p269, %s23, 1
      %s271 = smul.addr %s268, 2
      %s272 = sadd.s32 %s270, %s271
      %s273 = scalar_lea.vmem %s5, %s272
      %p274 = pneg %p198
      %p275 = pneg %p195
      %p276 = scmp.lt.s32.totalorder %s22, 1
      %s277 = scalar_select %p276, %s22, 1
      %p278 = scmp.lt.s32.totalorder %s23, 1
      %s279 = scalar_select %p278, %s23, 1
      %s280 = smul.addr %s277, 2
      %s281 = sadd.s32 %s279, %s280
      %s282 = scalar_lea.vmem %s6, %s281
      %p283 = scmp.lt.s32.totalorder %s22, 1
      %s284 = scalar_select %p283, %s22, 1
      %s285 = smul.addr %s284, 43
      %s286 = smul.addr %s285, 8
      %s287 = scalar_lea.vmem %s0, %s286
      %s288 = smul.u32 18, %s23
      %p289 = scmp.lt.s32.totalorder %s22, 1
      %s290 = scalar_select %p289, %s22, 1
      %p291 = scmp.lt.s32.totalorder %s288, 35
      %s292 = scalar_select %p291, %s288, 35
      %s293 = smul.addr %s290, 36
      %s294 = sadd.s32 %s292, %s293
      %s295 = smul.addr %s294, 8
      %s296 = scalar_lea.vmem %s4, %s295
      %s297 = smul.u32 18, %s23
      %p298 = scmp.lt.s32.totalorder %s22, 1
      %s299 = scalar_select %p298, %s22, 1
      %p300 = scmp.lt.s32.totalorder %s23, 1
      %s301 = scalar_select %p300, %s23, 1
      %s302 = smul.addr %s299, 2
      %s303 = sadd.s32 %s301, %s302
      %s304 = scalar_lea.vmem %s5, %s303
      %p305 = scmp.lt.s32.totalorder %s22, 1
      %s306 = scalar_select %p305, %s22, 1
      %p307 = scmp.lt.s32.totalorder %s23, 1
      %s308 = scalar_select %p307, %s23, 1
      %s309 = smul.addr %s306, 2
      %s310 = sadd.s32 %s308, %s309
      %s311 = scalar_lea.vmem %s6, %s310
      %s313 = smul.u32 %s23, 144
      %s314 = scalar_lea.vmem %s287, %s313
      %v315 = vld [vmem:[%s314] sm:$0xff]
      %v316 = vld [vmem:[%s314 + $0x8] sm:$0xff]
      %v317 = vld [vmem:[%s314 + $0x10] sm:$0xff]
      %v318 = vld [vmem:[%s314 + $0x18] sm:$0xff]
      %v319 = vld [vmem:[%s314 + $0x20] sm:$0xff]
      %v320 = vld [vmem:[%s314 + $0x28] sm:$0xff]
      %v321 = vld [vmem:[%s314 + $0x30] sm:$0xff]
      %v322 = vld [vmem:[%s314 + $0x38] sm:$0xff]
      %v323 = vld [vmem:[%s314 + $0x40] sm:$0xff]
      %v324 = vld [vmem:[%s314 + $0x48] sm:$0xff]
      %v325 = vld [vmem:[%s314 + $0x50] sm:$0xff]
      %v326 = vld [vmem:[%s314 + $0x58] sm:$0xff]
      %v327 = vld [vmem:[%s314 + $0x60] sm:$0xff]
      %v328 = vld [vmem:[%s314 + $0x68] sm:$0xff]
      %v329 = vld [vmem:[%s314 + $0x70] sm:$0xff]
      %v330 = vld [vmem:[%s314 + $0x78] sm:$0xff]
      %v331 = vld [vmem:[%s314 + $0x80] sm:$0xff]
      %v332 = vld [vmem:[%s314 + $0x88] sm:$0xff]
      %v333 = vpack.c.bf16 %v316, %v315
      %v334 = vpack.c.bf16 %v318, %v317
      %v335 = vpack.c.bf16 %v320, %v319
      %v336 = vpack.c.bf16 %v322, %v321
      %v337 = vpack.c.bf16 %v324, %v323
      %v338 = vpack.c.bf16 %v326, %v325
      %v339 = vpack.c.bf16 %v328, %v327
      %v340 = vpack.c.bf16 %v330, %v329
      %v341 = vpack.c.bf16 %v332, %v331
      %v342 = vld [vmem:[%s1] sm:$0xf]
      %s343 = sadd.s32 %s313, 1
      %s344 = scalar_lea.vmem %s287, %s343
      %v345 = vld [vmem:[%s344] sm:$0xff]
      %v346 = vld [vmem:[%s344 + $0x8] sm:$0xff]
      %v347 = vld [vmem:[%s344 + $0x10] sm:$0xff]
      %v348 = vld [vmem:[%s344 + $0x18] sm:$0xff]
      %v349 = vld [vmem:[%s344 + $0x20] sm:$0xff]
      %v350 = vld [vmem:[%s344 + $0x28] sm:$0xff]
      %v351 = vld [vmem:[%s344 + $0x30] sm:$0xff]
      %v352 = vld [vmem:[%s344 + $0x38] sm:$0xff]
      %v353 = vld [vmem:[%s344 + $0x40] sm:$0xff]
      %v354 = vld [vmem:[%s344 + $0x48] sm:$0xff]
      %v355 = vld [vmem:[%s344 + $0x50] sm:$0xff]
      %v356 = vld [vmem:[%s344 + $0x58] sm:$0xff]
      %v357 = vld [vmem:[%s344 + $0x60] sm:$0xff]
      %v358 = vld [vmem:[%s344 + $0x68] sm:$0xff]
      %v359 = vld [vmem:[%s344 + $0x70] sm:$0xff]
      %v360 = vld [vmem:[%s344 + $0x78] sm:$0xff]
      %v361 = vld [vmem:[%s344 + $0x80] sm:$0xff]
      %v362 = vld [vmem:[%s344 + $0x88] sm:$0xff]
      %v363 = vpack.c.bf16 %v346, %v345
      %v364 = vpack.c.bf16 %v348, %v347
      %v365 = vpack.c.bf16 %v350, %v349
      %v366 = vpack.c.bf16 %v352, %v351
      %v367 = vpack.c.bf16 %v354, %v353
      %v368 = vpack.c.bf16 %v356, %v355
      %v369 = vpack.c.bf16 %v358, %v357
      %v370 = vpack.c.bf16 %v360, %v359
      %v371 = vpack.c.bf16 %v362, %v361
      %s372 = scalar_lea.vmem %s1, 4
      %v373 = vld [vmem:[%s372] sm:$0xf]
      %vm374 = vcmask 64512
      %v376 = vsel %vm374, %v363, 0
      %v379 = vsel %vm374, %v364, 0
      %v382 = vsel %vm374, %v365, 0
      %v385 = vsel %vm374, %v366, 0
      %v388 = vsel %vm374, %v367, 0
      %v391 = vsel %vm374, %v368, 0
      %v394 = vsel %vm374, %v369, 0
      %v397 = vsel %vm374, %v370, 0
      %v400 = vsel %vm374, %v371, 0
      %vm402 = vcmask 1043456
      %v404 = vsel %vm402, %v373, 0
      %406 = vmatprep.subr.bf16.mxu0 0
      %407 = vmatpush1.bf16.msra.mxu0 %v404
      %408 = vmatprep.subr.bf16.mxu0 0
      %409 = vmatpush1.bf16.msra.mxu0 0
      %410 = vmatprep.subr.bf16.mxu0 0
      %411 = vmatpush1.bf16.msra.mxu0 0
      %412 = vmatprep.subr.bf16.mxu0 0
      %413 = vmatpush1.bf16.msra.mxu0 0
      %414 = vmatprep.subr.bf16.mxu0 0
      %415 = vmatpush1.bf16.msra.mxu0 0
      %416 = vmatprep.subr.bf16.mxu0 0
      %417 = vmatpush1.bf16.msra.mxu0 0
      %418 = vmatprep.subr.bf16.mxu0 0
      %419 = vmatpush1.bf16.msra.mxu0 0
      %420 = vmatprep.subr.bf16.mxu0 0
      %421 = vmatpush1.bf16.msra.mxu0 0
      %422 = vmatprep.subr.bf16.mxu0 0
      %423 = vmatpush1.bf16.msra.mxu0 0
      %424 = vmatprep.subr.bf16.mxu0 0
      %425 = vmatpush1.bf16.msra.mxu0 0
      %426 = vmatprep.subr.bf16.mxu0 0
      %427 = vmatpush1.bf16.msra.mxu0 0
      %428 = vmatprep.subr.bf16.mxu0 0
      %429 = vmatpush1.bf16.msra.mxu0 0
      %430 = vmatprep.subr.bf16.mxu0 0
      %431 = vmatpush1.bf16.msra.mxu0 0
      %432 = vmatprep.subr.bf16.mxu0 0
      %433 = vmatpush1.bf16.msra.mxu0 0
      %434 = vmatprep.subr.bf16.mxu0 0
      %435 = vmatpush1.bf16.msra.mxu0 0
      %436 = vmatprep.subr.bf16.mxu0 0
      %437 = vmatpush1.bf16.msra.mxu0 0
      %438 = vmatprep.mubr.bf16.mxu0 0
      %439 = vmatmul.mubr.bf16.gmra.mrb[0].mxu0 %v376
      %v440 = vpop.f32.mrb[0].mxu0
      %v441 = vadd.f32 0.0, %v440
      %v442 = vpop.f32.mrb[0].mxu0
      %v443 = vpop.f32.mrb[0].mxu0
      %v444 = vadd.f32 0.0, %v443
      %v445 = vpop.f32.mrb[0].mxu0
      %446 = vmatprep.mubr.bf16.mxu0 0
      %447 = vmatmul.mubr.bf16.gmra.mrb[0].mxu0 %v379
      %v448 = vpop.f32.mrb[0].mxu0
      %v449 = vadd.f32 0.0, %v448
      %v450 = vpop.f32.mrb[0].mxu0
      %v451 = vpop.f32.mrb[0].mxu0
      %v452 = vadd.f32 0.0, %v451
      %v453 = vpop.f32.mrb[0].mxu0
      %454 = vmatprep.mubr.bf16.mxu0 0
      %455 = vmatmul.mubr.bf16.gmra.mrb[0].mxu0 %v382
      %v456 = vpop.f32.mrb[0].mxu0
      %v457 = vadd.f32 0.0, %v456
      %v458 = vpop.f32.mrb[0].mxu0
      %v459 = vpop.f32.mrb[0].mxu0
      %v460 = vadd.f32 0.0, %v459
      %v461 = vpop.f32.mrb[0].mxu0
      %462 = vmatprep.mubr.bf16.mxu0 0
      %463 = vmatmul.mubr.bf16.gmra.mrb[0].mxu0 %v385
      %v464 = vpop.f32.mrb[0].mxu0
      %v465 = vadd.f32 0.0, %v464
      %v466 = vpop.f32.mrb[0].mxu0
      %v467 = vpop.f32.mrb[0].mxu0
      %v468 = vadd.f32 0.0, %v467
      %v469 = vpop.f32.mrb[0].mxu0
      %470 = vmatprep.mubr.bf16.mxu0 0
      %471 = vmatmul.mubr.bf16.gmra.mrb[0].mxu0 %v388
      %v472 = vpop.f32.mrb[0].mxu0
      %v473 = vadd.f32 0.0, %v472
      %v474 = vpop.f32.mrb[0].mxu0
      %v475 = vpop.f32.mrb[0].mxu0
      %v476 = vadd.f32 0.0, %v475
      %v477 = vpop.f32.mrb[0].mxu0
      %478 = vmatprep.mubr.bf16.mxu0 0
      %479 = vmatmul.mubr.bf16.gmra.mrb[0].mxu0 %v391
      %v480 = vpop.f32.mrb[0].mxu0
      %v481 = vadd.f32 0.0, %v480
      %v482 = vpop.f32.mrb[0].mxu0
      %v483 = vpop.f32.mrb[0].mxu0
      %v484 = vadd.f32 0.0, %v483
      %v485 = vpop.f32.mrb[0].mxu0
      %486 = vmatprep.mubr.bf16.mxu0 0
      %487 = vmatmul.mubr.bf16.gmra.mrb[0].mxu0 %v394
      %v488 = vpop.f32.mrb[0].mxu0
      %v489 = vadd.f32 0.0, %v488
      %v490 = vpop.f32.mrb[0].mxu0
      %v491 = vpop.f32.mrb[0].mxu0
      %v492 = vadd.f32 0.0, %v491
      %v493 = vpop.f32.mrb[0].mxu0
      %494 = vmatprep.mubr.bf16.mxu0 0
      %495 = vmatmul.mubr.bf16.gmra.mrb[0].mxu0 %v397
      %v496 = vpop.f32.mrb[0].mxu0
      %v497 = vadd.f32 0.0, %v496
      %v498 = vpop.f32.mrb[0].mxu0
      %v499 = vpop.f32.mrb[0].mxu0
      %v500 = vadd.f32 0.0, %v499
      %v501 = vpop.f32.mrb[0].mxu0
      %502 = vmatprep.mubr.bf16.mxu0 0
      %503 = vmatmul.mubr.bf16.gmra.mrb[0].mxu0 %v400
      %v504 = vpop.f32.mrb[0].mxu0
      %v505 = vadd.f32 0.0, %v504
      %v506 = vpop.f32.mrb[0].mxu0
      %v507 = vpop.f32.mrb[0].mxu0
      %v508 = vadd.f32 0.0, %v507
      %v509 = vpop.f32.mrb[0].mxu0
      %510 = vdwg.mxu0
      %v512 = vsel %vm374, %v333, 0
      %v515 = vsel %vm374, %v334, 0
      %v518 = vsel %vm374, %v335, 0
      %v521 = vsel %vm374, %v336, 0
      %v524 = vsel %vm374, %v337, 0
      %v527 = vsel %vm374, %v338, 0
      %v530 = vsel %vm374, %v339, 0
      %v533 = vsel %vm374, %v340, 0
      %v536 = vsel %vm374, %v341, 0
      %v539 = vsel %vm402, %v342, 0
      %541 = vmatprep.subr.bf16.mxu0 0
      %542 = vmatpush1.bf16.msra.mxu0 %v539
      %543 = vmatprep.subr.bf16.mxu0 0
      %544 = vmatpush1.bf16.msra.mxu0 0
      %545 = vmatprep.subr.bf16.mxu0 0
      %546 = vmatpush1.bf16.msra.mxu0 0
      %547 = vmatprep.subr.bf16.mxu0 0
      %548 = vmatpush1.bf16.msra.mxu0 0
      %549 = vmatprep.subr.bf16.mxu0 0
      %550 = vmatpush1.bf16.msra.mxu0 0
      %551 = vmatprep.subr.bf16.mxu0 0
      %552 = vmatpush1.bf16.msra.mxu0 0
      %553 = vmatprep.subr.bf16.mxu0 0
      %554 = vmatpush1.bf16.msra.mxu0 0
      %555 = vmatprep.subr.bf16.mxu0 0
      %556 = vmatpush1.bf16.msra.mxu0 0
      %557 = vmatprep.subr.bf16.mxu0 0
      %558 = vmatpush1.bf16.msra.mxu0 0
      %559 = vmatprep.subr.bf16.mxu0 0
      %560 = vmatpush1.bf16.msra.mxu0 0
      %561 = vmatprep.subr.bf16.mxu0 0
      %562 = vmatpush1.bf16.msra.mxu0 0
      %563 = vmatprep.subr.bf16.mxu0 0
      %564 = vmatpush1.bf16.msra.mxu0 0
      %565 = vmatprep.subr.bf16.mxu0 0
      %566 = vmatpush1.bf16.msra.mxu0 0
      %567 = vmatprep.subr.bf16.mxu0 0
      %568 = vmatpush1.bf16.msra.mxu0 0
      %569 = vmatprep.subr.bf16.mxu0 0
      %570 = vmatpush1.bf16.msra.mxu0 0
      %571 = vmatprep.subr.bf16.mxu0 0
      %572 = vmatpush1.bf16.msra.mxu0 0
      %573 = vmatprep.mubr.bf16.mxu0 0
      %574 = vmatmul.mubr.bf16.gmra.mrb[0].mxu0 %v512
      %v575 = vpop.f32.mrb[0].mxu0
      %v576 = vadd.f32 %v441, %v575
      %v577 = vpop.f32.mrb[0].mxu0
      %v578 = vpop.f32.mrb[0].mxu0
      %v579 = vadd.f32 %v444, %v578
      %v580 = vpop.f32.mrb[0].mxu0
      %581 = vmatprep.mubr.bf16.mxu0 0
      %582 = vmatmul.mubr.bf16.gmra.mrb[0].mxu0 %v515
      %v583 = vpop.f32.mrb[0].mxu0
      %v584 = vadd.f32 %v449, %v583
      %v585 = vpop.f32.mrb[0].mxu0
      %v586 = vpop.f32.mrb[0].mxu0
      %v587 = vadd.f32 %v452, %v586
      %v588 = vpop.f32.mrb[0].mxu0
      %589 = vmatprep.mubr.bf16.mxu0 0
      %590 = vmatmul.mubr.bf16.gmra.mrb[0].mxu0 %v518
      %v591 = vpop.f32.mrb[0].mxu0
      %v592 = vadd.f32 %v457, %v591
      %v593 = vpop.f32.mrb[0].mxu0
      %v594 = vpop.f32.mrb[0].mxu0
      %v595 = vadd.f32 %v460, %v594
      %v596 = vpop.f32.mrb[0].mxu0
      %597 = vmatprep.mubr.bf16.mxu0 0
      %598 = vmatmul.mubr.bf16.gmra.mrb[0].mxu0 %v521
      %v599 = vpop.f32.mrb[0].mxu0
      %v600 = vadd.f32 %v465, %v599
      %v601 = vpop.f32.mrb[0].mxu0
      %v602 = vpop.f32.mrb[0].mxu0
      %v603 = vadd.f32 %v468, %v602
      %v604 = vpop.f32.mrb[0].mxu0
      %605 = vmatprep.mubr.bf16.mxu0 0
      %606 = vmatmul.mubr.bf16.gmra.mrb[0].mxu0 %v524
      %v607 = vpop.f32.mrb[0].mxu0
      %v608 = vadd.f32 %v473, %v607
      %v609 = vpop.f32.mrb[0].mxu0
      %v610 = vpop.f32.mrb[0].mxu0
      %v611 = vadd.f32 %v476, %v610
      %v612 = vpop.f32.mrb[0].mxu0
      %613 = vmatprep.mubr.bf16.mxu0 0
      %614 = vmatmul.mubr.bf16.gmra.mrb[0].mxu0 %v527
      %v615 = vpop.f32.mrb[0].mxu0
      %v616 = vadd.f32 %v481, %v615
      %v617 = vpop.f32.mrb[0].mxu0
      %v618 = vpop.f32.mrb[0].mxu0
      %v619 = vadd.f32 %v484, %v618
      %v620 = vpop.f32.mrb[0].mxu0
      %621 = vmatprep.mubr.bf16.mxu0 0
      %622 = vmatmul.mubr.bf16.gmra.mrb[0].mxu0 %v530
      %v623 = vpop.f32.mrb[0].mxu0
      %v624 = vadd.f32 %v489, %v623
      %v625 = vpop.f32.mrb[0].mxu0
      %v626 = vpop.f32.mrb[0].mxu0
      %v627 = vadd.f32 %v492, %v626
      %v628 = vpop.f32.mrb[0].mxu0
      %629 = vmatprep.mubr.bf16.mxu0 0
      %630 = vmatmul.mubr.bf16.gmra.mrb[0].mxu0 %v533
      %v631 = vpop.f32.mrb[0].mxu0
      %v632 = vadd.f32 %v497, %v631
      %v633 = vpop.f32.mrb[0].mxu0
      %v634 = vpop.f32.mrb[0].mxu0
      %v635 = vadd.f32 %v500, %v634
      %v636 = vpop.f32.mrb[0].mxu0
      %637 = vmatprep.mubr.bf16.mxu0 0
      %638 = vmatmul.mubr.bf16.gmra.mrb[0].mxu0 %v536
      %v639 = vpop.f32.mrb[0].mxu0
      %v640 = vadd.f32 %v505, %v639
      %v641 = vpop.f32.mrb[0].mxu0
      %v642 = vpop.f32.mrb[0].mxu0
      %v643 = vadd.f32 %v508, %v642
      %v644 = vpop.f32.mrb[0].mxu0
      %645 = vdwg.mxu0
      %s646 = sadd.s32 %s313, 2
      %s647 = scalar_lea.vmem %s287, %s646
      %v648 = vld [vmem:[%s647] sm:$0xff]
      %v649 = vld [vmem:[%s647 + $0x8] sm:$0xff]
      %v650 = vld [vmem:[%s647 + $0x10] sm:$0xff]
      %v651 = vld [vmem:[%s647 + $0x18] sm:$0xff]
      %v652 = vld [vmem:[%s647 + $0x20] sm:$0xff]
      %v653 = vld [vmem:[%s647 + $0x28] sm:$0xff]
      %v654 = vld [vmem:[%s647 + $0x30] sm:$0xff]
      %v655 = vld [vmem:[%s647 + $0x38] sm:$0xff]
      %v656 = vld [vmem:[%s647 + $0x40] sm:$0xff]
      %v657 = vld [vmem:[%s647 + $0x48] sm:$0xff]
      %v658 = vld [vmem:[%s647 + $0x50] sm:$0xff]
      %v659 = vld [vmem:[%s647 + $0x58] sm:$0xff]
      %v660 = vld [vmem:[%s647 + $0x60] sm:$0xff]
      %v661 = vld [vmem:[%s647 + $0x68] sm:$0xff]
      %v662 = vld [vmem:[%s647 + $0x70] sm:$0xff]
      %v663 = vld [vmem:[%s647 + $0x78] sm:$0xff]
      %v664 = vld [vmem:[%s647 + $0x80] sm:$0xff]
      %v665 = vld [vmem:[%s647 + $0x88] sm:$0xff]
      %v666 = vpack.c.bf16 %v649, %v648
      %v667 = vpack.c.bf16 %v651, %v650
      %v668 = vpack.c.bf16 %v653, %v652
      %v669 = vpack.c.bf16 %v655, %v654
      %v670 = vpack.c.bf16 %v657, %v656
      %v671 = vpack.c.bf16 %v659, %v658
      %v672 = vpack.c.bf16 %v661, %v660
      %v673 = vpack.c.bf16 %v663, %v662
      %v674 = vpack.c.bf16 %v665, %v664
      %s675 = scalar_lea.vmem %s1, 8
      %v676 = vld [vmem:[%s675] sm:$0xf]
      %v678 = vsel %vm374, %v666, 0
      %v681 = vsel %vm374, %v667, 0
      %v684 = vsel %vm374, %v668, 0
      %v687 = vsel %vm374, %v669, 0
      %v690 = vsel %vm374, %v670, 0
      %v693 = vsel %vm374, %v671, 0
      %v696 = vsel %vm374, %v672, 0
      %v699 = vsel %vm374, %v673, 0
      %v702 = vsel %vm374, %v674, 0
      %v705 = vsel %vm402, %v676, 0
      %707 = vmatprep.subr.bf16.mxu0 0
      %708 = vmatpush1.bf16.msra.mxu0 %v705
      %709 = vmatprep.subr.bf16.mxu0 0
      %710 = vmatpush1.bf16.msra.mxu0 0
      %711 = vmatprep.subr.bf16.mxu0 0
      %712 = vmatpush1.bf16.msra.mxu0 0
      %713 = vmatprep.subr.bf16.mxu0 0
      %714 = vmatpush1.bf16.msra.mxu0 0
      %715 = vmatprep.subr.bf16.mxu0 0
      %716 = vmatpush1.bf16.msra.mxu0 0
      %717 = vmatprep.subr.bf16.mxu0 0
      %718 = vmatpush1.bf16.msra.mxu0 0
      %719 = vmatprep.subr.bf16.mxu0 0
      %720 = vmatpush1.bf16.msra.mxu0 0
      %721 = vmatprep.subr.bf16.mxu0 0
      %722 = vmatpush1.bf16.msra.mxu0 0
      %723 = vmatprep.subr.bf16.mxu0 0
      %724 = vmatpush1.bf16.msra.mxu0 0
      %725 = vmatprep.subr.bf16.mxu0 0
      %726 = vmatpush1.bf16.msra.mxu0 0
      %727 = vmatprep.subr.bf16.mxu0 0
      %728 = vmatpush1.bf16.msra.mxu0 0
      %729 = vmatprep.subr.bf16.mxu0 0
      %730 = vmatpush1.bf16.msra.mxu0 0
      %731 = vmatprep.subr.bf16.mxu0 0
      %732 = vmatpush1.bf16.msra.mxu0 0
      %733 = vmatprep.subr.bf16.mxu0 0
      %734 = vmatpush1.bf16.msra.mxu0 0
      %735 = vmatprep.subr.bf16.mxu0 0
      %736 = vmatpush1.bf16.msra.mxu0 0
      %737 = vmatprep.subr.bf16.mxu0 0
      %738 = vmatpush1.bf16.msra.mxu0 0
      %739 = vmatprep.mubr.bf16.mxu0 0
      %740 = vmatmul.mubr.bf16.gmra.mrb[0].mxu0 %v678
      %v741 = vpop.f32.mrb[0].mxu0
      %v742 = vadd.f32 0.0, %v741
      %v743 = vpop.f32.mrb[0].mxu0
      %v744 = vpop.f32.mrb[0].mxu0
      %v745 = vadd.f32 0.0, %v744
      %v746 = vpop.f32.mrb[0].mxu0
      %747 = vmatprep.mubr.bf16.mxu0 0
      %748 = vmatmul.mubr.bf16.gmra.mrb[0].mxu0 %v681
      %v749 = vpop.f32.mrb[0].mxu0
      %v750 = vadd.f32 0.0, %v749
      %v751 = vpop.f32.mrb[0].mxu0
      %v752 = vpop.f32.mrb[0].mxu0
      %v753 = vadd.f32 0.0, %v752
      %v754 = vpop.f32.mrb[0].mxu0
      %755 = vmatprep.mubr.bf16.mxu0 0
      %756 = vmatmul.mubr.bf16.gmra.mrb[0].mxu0 %v684
      %v757 = vpop.f32.mrb[0].mxu0
      %v758 = vadd.f32 0.0, %v757
      %v759 = vpop.f32.mrb[0].mxu0
      %v760 = vpop.f32.mrb[0].mxu0
      %v761 = vadd.f32 0.0, %v760
      %v762 = vpop.f32.mrb[0].mxu0
      %763 = vmatprep.mubr.bf16.mxu0 0
      %764 = vmatmul.mubr.bf16.gmra.mrb[0].mxu0 %v687
      %v765 = vpop.f32.mrb[0].mxu0
      %v766 = vadd.f32 0.0, %v765
      %v767 = vpop.f32.mrb[0].mxu0
      %v768 = vpop.f32.mrb[0].mxu0
      %v769 = vadd.f32 0.0, %v768
      %v770 = vpop.f32.mrb[0].mxu0
      %771 = vmatprep.mubr.bf16.mxu0 0
      %772 = vmatmul.mubr.bf16.gmra.mrb[0].mxu0 %v690
      %v773 = vpop.f32.mrb[0].mxu0
      %v774 = vadd.f32 0.0, %v773
      %v775 = vpop.f32.mrb[0].mxu0
      %v776 = vpop.f32.mrb[0].mxu0
      %v777 = vadd.f32 0.0, %v776
      %v778 = vpop.f32.mrb[0].mxu0
      %779 = vmatprep.mubr.bf16.mxu0 0
      %780 = vmatmul.mubr.bf16.gmra.mrb[0].mxu0 %v693
      %v781 = vpop.f32.mrb[0].mxu0
      %v782 = vadd.f32 0.0, %v781
      %v783 = vpop.f32.mrb[0].mxu0
      %v784 = vpop.f32.mrb[0].mxu0
      %v785 = vadd.f32 0.0, %v784
      %v786 = vpop.f32.mrb[0].mxu0
      %787 = vmatprep.mubr.bf16.mxu0 0
      %788 = vmatmul.mubr.bf16.gmra.mrb[0].mxu0 %v696
      %v789 = vpop.f32.mrb[0].mxu0
      %v790 = vadd.f32 0.0, %v789
      %v791 = vpop.f32.mrb[0].mxu0
      %v792 = vpop.f32.mrb[0].mxu0
      %v793 = vadd.f32 0.0, %v792
      %v794 = vpop.f32.mrb[0].mxu0
      %795 = vmatprep.mubr.bf16.mxu0 0
      %796 = vmatmul.mubr.bf16.gmra.mrb[0].mxu0 %v699
      %v797 = vpop.f32.mrb[0].mxu0
      %v798 = vadd.f32 0.0, %v797
      %v799 = vpop.f32.mrb[0].mxu0
      %v800 = vpop.f32.mrb[0].mxu0
      %v801 = vadd.f32 0.0, %v800
      %v802 = vpop.f32.mrb[0].mxu0
      %803 = vmatprep.mubr.bf16.mxu0 0
      %804 = vmatmul.mubr.bf16.gmra.mrb[0].mxu0 %v702
      %v805 = vpop.f32.mrb[0].mxu0
      %v806 = vadd.f32 0.0, %v805
      %v807 = vpop.f32.mrb[0].mxu0
      %v808 = vpop.f32.mrb[0].mxu0
      %v809 = vadd.f32 0.0, %v808
      %v810 = vpop.f32.mrb[0].mxu0
      %811 = vdwg.mxu0
      %v812 = vadd.f32 %v576, %v742
      %v813 = vadd.f32 %v579, %v745
      %v814 = vadd.f32 %v584, %v750
      %v815 = vadd.f32 %v587, %v753
      %v816 = vadd.f32 %v592, %v758
      %v817 = vadd.f32 %v595, %v761
      %v818 = vadd.f32 %v600, %v766
      %v819 = vadd.f32 %v603, %v769
      %v820 = vadd.f32 %v608, %v774
      %v821 = vadd.f32 %v611, %v777
      %v822 = vadd.f32 %v616, %v782
      %v823 = vadd.f32 %v619, %v785
      %v824 = vadd.f32 %v624, %v790
      %v825 = vadd.f32 %v627, %v793
      %v826 = vadd.f32 %v632, %v798
      %v827 = vadd.f32 %v635, %v801
      %v828 = vadd.f32 %v640, %v806
      %v829 = vadd.f32 %v643, %v809
      %s830 = sadd.s32 %s313, 18
      %s831 = scalar_lea.vmem %s287, %s830
      %v832 = vld [vmem:[%s831] sm:$0xff]
      %v833 = vld [vmem:[%s831 + $0x8] sm:$0xff]
      %v834 = vld [vmem:[%s831 + $0x10] sm:$0xff]
      %v835 = vld [vmem:[%s831 + $0x18] sm:$0xff]
      %v836 = vld [vmem:[%s831 + $0x20] sm:$0xff]
      %v837 = vld [vmem:[%s831 + $0x28] sm:$0xff]
      %v838 = vld [vmem:[%s831 + $0x30] sm:$0xff]
      %v839 = vld [vmem:[%s831 + $0x38] sm:$0xff]
      %v840 = vld [vmem:[%s831 + $0x40] sm:$0xff]
      %v841 = vld [vmem:[%s831 + $0x48] sm:$0xff]
      %v842 = vld [vmem:[%s831 + $0x50] sm:$0xff]
      %v843 = vld [vmem:[%s831 + $0x58] sm:$0xff]
      %v844 = vld [vmem:[%s831 + $0x60] sm:$0xff]
      %v845 = vld [vmem:[%s831 + $0x68] sm:$0xff]
      %v846 = vld [vmem:[%s831 + $0x70] sm:$0xff]
      %v847 = vld [vmem:[%s831 + $0x78] sm:$0xff]
      %v848 = vld [vmem:[%s831 + $0x80] sm:$0xff]
      %v849 = vld [vmem:[%s831 + $0x88] sm:$0xff]
      %v850 = vpack.c.bf16 %v833, %v832
      %v851 = vpack.c.bf16 %v835, %v834
      %v852 = vpack.c.bf16 %v837, %v836
      %v853 = vpack.c.bf16 %v839, %v838
      %v854 = vpack.c.bf16 %v841, %v840
      %v855 = vpack.c.bf16 %v843, %v842
      %v856 = vpack.c.bf16 %v845, %v844
      %v857 = vpack.c.bf16 %v847, %v846
      %v858 = vpack.c.bf16 %v849, %v848
      %s859 = scalar_lea.vmem %s1, 12
      %v860 = vld [vmem:[%s859] sm:$0xf]
      %v862 = vsel %vm374, %v850, 0
      %v865 = vsel %vm374, %v851, 0
      %v868 = vsel %vm374, %v852, 0
      %v871 = vsel %vm374, %v853, 0
      %v874 = vsel %vm374, %v854, 0
      %v877 = vsel %vm374, %v855, 0
      %v880 = vsel %vm374, %v856, 0
      %v883 = vsel %vm374, %v857, 0
      %v886 = vsel %vm374, %v858, 0
      %v889 = vsel %vm402, %v860, 0
      %891 = vmatprep.subr.bf16.mxu0 0
      %892 = vmatpush1.bf16.msra.mxu0 %v889
      %893 = vmatprep.subr.bf16.mxu0 0
      %894 = vmatpush1.bf16.msra.mxu0 0
      %895 = vmatprep.subr.bf16.mxu0 0
      %896 = vmatpush1.bf16.msra.mxu0 0
      %897 = vmatprep.subr.bf16.mxu0 0
      %898 = vmatpush1.bf16.msra.mxu0 0
      %899 = vmatprep.subr.bf16.mxu0 0
      %900 = vmatpush1.bf16.msra.mxu0 0
      %901 = vmatprep.subr.bf16.mxu0 0
      %902 = vmatpush1.bf16.msra.mxu0 0
      %903 = vmatprep.subr.bf16.mxu0 0
      %904 = vmatpush1.bf16.msra.mxu0 0
      %905 = vmatprep.subr.bf16.mxu0 0
      %906 = vmatpush1.bf16.msra.mxu0 0
      %907 = vmatprep.subr.bf16.mxu0 0
      %908 = vmatpush1.bf16.msra.mxu0 0
      %909 = vmatprep.subr.bf16.mxu0 0
      %910 = vmatpush1.bf16.msra.mxu0 0
      %911 = vmatprep.subr.bf16.mxu0 0
      %912 = vmatpush1.bf16.msra.mxu0 0
      %913 = vmatprep.subr.bf16.mxu0 0
      %914 = vmatpush1.bf16.msra.mxu0 0
      %915 = vmatprep.subr.bf16.mxu0 0
      %916 = vmatpush1.bf16.msra.mxu0 0
      %917 = vmatprep.subr.bf16.mxu0 0
      %918 = vmatpush1.bf16.msra.mxu0 0
      %919 = vmatprep.subr.bf16.mxu0 0
      %920 = vmatpush1.bf16.msra.mxu0 0
      %921 = vmatprep.subr.bf16.mxu0 0
      %922 = vmatpush1.bf16.msra.mxu0 0
      %923 = vmatprep.mubr.bf16.mxu0 0
      %924 = vmatmul.mubr.bf16.gmra.mrb[0].mxu0 %v862
      %v925 = vpop.f32.mrb[0].mxu0
      %v926 = vadd.f32 0.0, %v925
      %v927 = vpop.f32.mrb[0].mxu0
      %v928 = vpop.f32.mrb[0].mxu0
      %v929 = vadd.f32 0.0, %v928
      %v930 = vpop.f32.mrb[0].mxu0
      %931 = vmatprep.mubr.bf16.mxu0 0
      %932 = vmatmul.mubr.bf16.gmra.mrb[0].mxu0 %v865
      %v933 = vpop.f32.mrb[0].mxu0
      %v934 = vadd.f32 0.0, %v933
      %v935 = vpop.f32.mrb[0].mxu0
      %v936 = vpop.f32.mrb[0].mxu0
      %v937 = vadd.f32 0.0, %v936
      %v938 = vpop.f32.mrb[0].mxu0
      %939 = vmatprep.mubr.bf16.mxu0 0
      %940 = vmatmul.mubr.bf16.gmra.mrb[0].mxu0 %v868
      %v941 = vpop.f32.mrb[0].mxu0
      %v942 = vadd.f32 0.0, %v941
      %v943 = vpop.f32.mrb[0].mxu0
      %v944 = vpop.f32.mrb[0].mxu0
      %v945 = vadd.f32 0.0, %v944
      %v946 = vpop.f32.mrb[0].mxu0
      %947 = vmatprep.mubr.bf16.mxu0 0
      %948 = vmatmul.mubr.bf16.gmra.mrb[0].mxu0 %v871
      %v949 = vpop.f32.mrb[0].mxu0
      %v950 = vadd.f32 0.0, %v949
      %v951 = vpop.f32.mrb[0].mxu0
      %v952 = vpop.f32.mrb[0].mxu0
      %v953 = vadd.f32 0.0, %v952
      %v954 = vpop.f32.mrb[0].mxu0
      %955 = vmatprep.mubr.bf16.mxu0 0
      %956 = vmatmul.mubr.bf16.gmra.mrb[0].mxu0 %v874
      %v957 = vpop.f32.mrb[0].mxu0
      %v958 = vadd.f32 0.0, %v957
      %v959 = vpop.f32.mrb[0].mxu0
      %v960 = vpop.f32.mrb[0].mxu0
      %v961 = vadd.f32 0.0, %v960
      %v962 = vpop.f32.mrb[0].mxu0
      %963 = vmatprep.mubr.bf16.mxu0 0
      %964 = vmatmul.mubr.bf16.gmra.mrb[0].mxu0 %v877
      %v965 = vpop.f32.mrb[0].mxu0
      %v966 = vadd.f32 0.0, %v965
      %v967 = vpop.f32.mrb[0].mxu0
      %v968 = vpop.f32.mrb[0].mxu0
      %v969 = vadd.f32 0.0, %v968
      %v970 = vpop.f32.mrb[0].mxu0
      %971 = vmatprep.mubr.bf16.mxu0 0
      %972 = vmatmul.mubr.bf16.gmra.mrb[0].mxu0 %v880
      %v973 = vpop.f32.mrb[0].mxu0
      %v974 = vadd.f32 0.0, %v973
      %v975 = vpop.f32.mrb[0].mxu0
      %v976 = vpop.f32.mrb[0].mxu0
      %v977 = vadd.f32 0.0, %v976
      %v978 = vpop.f32.mrb[0].mxu0
      %979 = vmatprep.mubr.bf16.mxu0 0
      %980 = vmatmul.mubr.bf16.gmra.mrb[0].mxu0 %v883
      %v981 = vpop.f32.mrb[0].mxu0
      %v982 = vadd.f32 0.0, %v981
      %v983 = vpop.f32.mrb[0].mxu0
      %v984 = vpop.f32.mrb[0].mxu0
      %v985 = vadd.f32 0.0, %v984
      %v986 = vpop.f32.mrb[0].mxu0
      %987 = vmatprep.mubr.bf16.mxu0 0
      %988 = vmatmul.mubr.bf16.gmra.mrb[0].mxu0 %v886
      %v989 = vpop.f32.mrb[0].mxu0
      %v990 = vadd.f32 0.0, %v989
      %v991 = vpop.f32.mrb[0].mxu0
      %v992 = vpop.f32.mrb[0].mxu0
      %v993 = vadd.f32 0.0, %v992
      %v994 = vpop.f32.mrb[0].mxu0
      %995 = vdwg.mxu0
      %v996 = vadd.f32 %v812, %v926
      %v997 = vadd.f32 %v813, %v929
      %v998 = vadd.f32 %v814, %v934
      %v999 = vadd.f32 %v815, %v937
      %v1000 = vadd.f32 %v816, %v942
      %v1001 = vadd.f32 %v817, %v945
      %v1002 = vadd.f32 %v818, %v950
      %v1003 = vadd.f32 %v819, %v953
      %v1004 = vadd.f32 %v820, %v958
      %v1005 = vadd.f32 %v821, %v961
      %v1006 = vadd.f32 %v822, %v966
      %v1007 = vadd.f32 %v823, %v969
      %v1008 = vadd.f32 %v824, %v974
      %v1009 = vadd.f32 %v825, %v977
      %v1010 = vadd.f32 %v826, %v982
      %v1011 = vadd.f32 %v827, %v985
      %v1012 = vadd.f32 %v828, %v990
      %v1013 = vadd.f32 %v829, %v993
      %s1014 = sadd.s32 %s313, 19
      %s1015 = scalar_lea.vmem %s287, %s1014
      %v1016 = vld [vmem:[%s1015] sm:$0xff]
      %v1017 = vld [vmem:[%s1015 + $0x8] sm:$0xff]
      %v1018 = vld [vmem:[%s1015 + $0x10] sm:$0xff]
      %v1019 = vld [vmem:[%s1015 + $0x18] sm:$0xff]
      %v1020 = vld [vmem:[%s1015 + $0x20] sm:$0xff]
      %v1021 = vld [vmem:[%s1015 + $0x28] sm:$0xff]
      %v1022 = vld [vmem:[%s1015 + $0x30] sm:$0xff]
      %v1023 = vld [vmem:[%s1015 + $0x38] sm:$0xff]
      %v1024 = vld [vmem:[%s1015 + $0x40] sm:$0xff]
      %v1025 = vld [vmem:[%s1015 + $0x48] sm:$0xff]
      %v1026 = vld [vmem:[%s1015 + $0x50] sm:$0xff]
      %v1027 = vld [vmem:[%s1015 + $0x58] sm:$0xff]
      %v1028 = vld [vmem:[%s1015 + $0x60] sm:$0xff]
      %v1029 = vld [vmem:[%s1015 + $0x68] sm:$0xff]
      %v1030 = vld [vmem:[%s1015 + $0x70] sm:$0xff]
      %v1031 = vld [vmem:[%s1015 + $0x78] sm:$0xff]
      %v1032 = vld [vmem:[%s1015 + $0x80] sm:$0xff]
      %v1033 = vld [vmem:[%s1015 + $0x88] sm:$0xff]
      %v1034 = vpack.c.bf16 %v1017, %v1016
      %v1035 = vpack.c.bf16 %v1019, %v1018
      %v1036 = vpack.c.bf16 %v1021, %v1020
      %v1037 = vpack.c.bf16 %v1023, %v1022
      %v1038 = vpack.c.bf16 %v1025, %v1024
      %v1039 = vpack.c.bf16 %v1027, %v1026
      %v1040 = vpack.c.bf16 %v1029, %v1028
      %v1041 = vpack.c.bf16 %v1031, %v1030
      %v1042 = vpack.c.bf16 %v1033, %v1032
      %s1043 = scalar_lea.vmem %s1, 16
      %v1044 = vld [vmem:[%s1043] sm:$0xf]
      %v1046 = vsel %vm374, %v1034, 0
      %v1049 = vsel %vm374, %v1035, 0
      %v1052 = vsel %vm374, %v1036, 0
      %v1055 = vsel %vm374, %v1037, 0
      %v1058 = vsel %vm374, %v1038, 0
      %v1061 = vsel %vm374, %v1039, 0
      %v1064 = vsel %vm374, %v1040, 0
      %v1067 = vsel %vm374, %v1041, 0
      %v1070 = vsel %vm374, %v1042, 0
      %v1073 = vsel %vm402, %v1044, 0
      %1075 = vmatprep.subr.bf16.mxu0 0
      %1076 = vmatpush1.bf16.msra.mxu0 %v1073
      %1077 = vmatprep.subr.bf16.mxu0 0
      %1078 = vmatpush1.bf16.msra.mxu0 0
      %1079 = vmatprep.subr.bf16.mxu0 0
      %1080 = vmatpush1.bf16.msra.mxu0 0
      %1081 = vmatprep.subr.bf16.mxu0 0
      %1082 = vmatpush1.bf16.msra.mxu0 0
      %1083 = vmatprep.subr.bf16.mxu0 0
      %1084 = vmatpush1.bf16.msra.mxu0 0
      %1085 = vmatprep.subr.bf16.mxu0 0
      %1086 = vmatpush1.bf16.msra.mxu0 0
      %1087 = vmatprep.subr.bf16.mxu0 0
      %1088 = vmatpush1.bf16.msra.mxu0 0
      %1089 = vmatprep.subr.bf16.mxu0 0
      %1090 = vmatpush1.bf16.msra.mxu0 0
      %1091 = vmatprep.subr.bf16.mxu0 0
      %1092 = vmatpush1.bf16.msra.mxu0 0
      %1093 = vmatprep.subr.bf16.mxu0 0
      %1094 = vmatpush1.bf16.msra.mxu0 0
      %1095 = vmatprep.subr.bf16.mxu0 0
      %1096 = vmatpush1.bf16.msra.mxu0 0
      %1097 = vmatprep.subr.bf16.mxu0 0
      %1098 = vmatpush1.bf16.msra.mxu0 0
      %1099 = vmatprep.subr.bf16.mxu0 0
      %1100 = vmatpush1.bf16.msra.mxu0 0
      %1101 = vmatprep.subr.bf16.mxu0 0
      %1102 = vmatpush1.bf16.msra.mxu0 0
      %1103 = vmatprep.subr.bf16.mxu0 0
      %1104 = vmatpush1.bf16.msra.mxu0 0
      %1105 = vmatprep.subr.bf16.mxu0 0
      %1106 = vmatpush1.bf16.msra.mxu0 0
      %1107 = vmatprep.mubr.bf16.mxu0 0
      %1108 = vmatmul.mubr.bf16.gmra.mrb[0].mxu0 %v1046
      %v1109 = vpop.f32.mrb[0].mxu0
      %v1110 = vadd.f32 0.0, %v1109
      %v1111 = vpop.f32.mrb[0].mxu0
      %v1112 = vpop.f32.mrb[0].mxu0
      %v1113 = vadd.f32 0.0, %v1112
      %v1114 = vpop.f32.mrb[0].mxu0
      %1115 = vmatprep.mubr.bf16.mxu0 0
      %1116 = vmatmul.mubr.bf16.gmra.mrb[0].mxu0 %v1049
      %v1117 = vpop.f32.mrb[0].mxu0
      %v1118 = vadd.f32 0.0, %v1117
      %v1119 = vpop.f32.mrb[0].mxu0
      %v1120 = vpop.f32.mrb[0].mxu0
      %v1121 = vadd.f32 0.0, %v1120
      %v1122 = vpop.f32.mrb[0].mxu0
      %1123 = vmatprep.mubr.bf16.mxu0 0
      %1124 = vmatmul.mubr.bf16.gmra.mrb[0].mxu0 %v1052
      %v1125 = vpop.f32.mrb[0].mxu0
      %v1126 = vadd.f32 0.0, %v1125
      %v1127 = vpop.f32.mrb[0].mxu0
      %v1128 = vpop.f32.mrb[0].mxu0
      %v1129 = vadd.f32 0.0, %v1128
      %v1130 = vpop.f32.mrb[0].mxu0
      %1131 = vmatprep.mubr.bf16.mxu0 0
      %1132 = vmatmul.mubr.bf16.gmra.mrb[0].mxu0 %v1055
      %v1133 = vpop.f32.mrb[0].mxu0
      %v1134 = vadd.f32 0.0, %v1133
      %v1135 = vpop.f32.mrb[0].mxu0
      %v1136 = vpop.f32.mrb[0].mxu0
      %v1137 = vadd.f32 0.0, %v1136
      %v1138 = vpop.f32.mrb[0].mxu0
      %1139 = vmatprep.mubr.bf16.mxu0 0
      %1140 = vmatmul.mubr.bf16.gmra.mrb[0].mxu0 %v1058
      %v1141 = vpop.f32.mrb[0].mxu0
      %v1142 = vadd.f32 0.0, %v1141
      %v1143 = vpop.f32.mrb[0].mxu0
      %v1144 = vpop.f32.mrb[0].mxu0
      %v1145 = vadd.f32 0.0, %v1144
      %v1146 = vpop.f32.mrb[0].mxu0
      %1147 = vmatprep.mubr.bf16.mxu0 0
      %1148 = vmatmul.mubr.bf16.gmra.mrb[0].mxu0 %v1061
      %v1149 = vpop.f32.mrb[0].mxu0
      %v1150 = vadd.f32 0.0, %v1149
      %v1151 = vpop.f32.mrb[0].mxu0
      %v1152 = vpop.f32.mrb[0].mxu0
      %v1153 = vadd.f32 0.0, %v1152
      %v1154 = vpop.f32.mrb[0].mxu0
      %1155 = vmatprep.mubr.bf16.mxu0 0
      %1156 = vmatmul.mubr.bf16.gmra.mrb[0].mxu0 %v1064
      %v1157 = vpop.f32.mrb[0].mxu0
      %v1158 = vadd.f32 0.0, %v1157
      %v1159 = vpop.f32.mrb[0].mxu0
      %v1160 = vpop.f32.mrb[0].mxu0
      %v1161 = vadd.f32 0.0, %v1160
      %v1162 = vpop.f32.mrb[0].mxu0
      %1163 = vmatprep.mubr.bf16.mxu0 0
      %1164 = vmatmul.mubr.bf16.gmra.mrb[0].mxu0 %v1067
      %v1165 = vpop.f32.mrb[0].mxu0
      %v1166 = vadd.f32 0.0, %v1165
      %v1167 = vpop.f32.mrb[0].mxu0
      %v1168 = vpop.f32.mrb[0].mxu0
      %v1169 = vadd.f32 0.0, %v1168
      %v1170 = vpop.f32.mrb[0].mxu0
      %1171 = vmatprep.mubr.bf16.mxu0 0
      %1172 = vmatmul.mubr.bf16.gmra.mrb[0].mxu0 %v1070
      %v1173 = vpop.f32.mrb[0].mxu0
      %v1174 = vadd.f32 0.0, %v1173
      %v1175 = vpop.f32.mrb[0].mxu0
      %v1176 = vpop.f32.mrb[0].mxu0
      %v1177 = vadd.f32 0.0, %v1176
      %v1178 = vpop.f32.mrb[0].mxu0
      %1179 = vdwg.mxu0
      %v1180 = vadd.f32 %v996, %v1110
      %v1181 = vadd.f32 %v997, %v1113
      %v1182 = vadd.f32 %v998, %v1118
      %v1183 = vadd.f32 %v999, %v1121
      %v1184 = vadd.f32 %v1000, %v1126
      %v1185 = vadd.f32 %v1001, %v1129
      %v1186 = vadd.f32 %v1002, %v1134
      %v1187 = vadd.f32 %v1003, %v1137
      %v1188 = vadd.f32 %v1004, %v1142
      %v1189 = vadd.f32 %v1005, %v1145
      %v1190 = vadd.f32 %v1006, %v1150
      %v1191 = vadd.f32 %v1007, %v1153
      %v1192 = vadd.f32 %v1008, %v1158
      %v1193 = vadd.f32 %v1009, %v1161
      %v1194 = vadd.f32 %v1010, %v1166
      %v1195 = vadd.f32 %v1011, %v1169
      %v1196 = vadd.f32 %v1012, %v1174
      %v1197 = vadd.f32 %v1013, %v1177
      %s1198 = sadd.s32 %s313, 20
      %s1199 = scalar_lea.vmem %s287, %s1198
      %v1200 = vld [vmem:[%s1199] sm:$0xff]
      %v1201 = vld [vmem:[%s1199 + $0x8] sm:$0xff]
      %v1202 = vld [vmem:[%s1199 + $0x10] sm:$0xff]
      %v1203 = vld [vmem:[%s1199 + $0x18] sm:$0xff]
      %v1204 = vld [vmem:[%s1199 + $0x20] sm:$0xff]
      %v1205 = vld [vmem:[%s1199 + $0x28] sm:$0xff]
      %v1206 = vld [vmem:[%s1199 + $0x30] sm:$0xff]
      %v1207 = vld [vmem:[%s1199 + $0x38] sm:$0xff]
      %v1208 = vld [vmem:[%s1199 + $0x40] sm:$0xff]
      %v1209 = vld [vmem:[%s1199 + $0x48] sm:$0xff]
      %v1210 = vld [vmem:[%s1199 + $0x50] sm:$0xff]
      %v1211 = vld [vmem:[%s1199 + $0x58] sm:$0xff]
      %v1212 = vld [vmem:[%s1199 + $0x60] sm:$0xff]
      %v1213 = vld [vmem:[%s1199 + $0x68] sm:$0xff]
      %v1214 = vld [vmem:[%s1199 + $0x70] sm:$0xff]
      %v1215 = vld [vmem:[%s1199 + $0x78] sm:$0xff]
      %v1216 = vld [vmem:[%s1199 + $0x80] sm:$0xff]
      %v1217 = vld [vmem:[%s1199 + $0x88] sm:$0xff]
      %v1218 = vpack.c.bf16 %v1201, %v1200
      %v1219 = vpack.c.bf16 %v1203, %v1202
      %v1220 = vpack.c.bf16 %v1205, %v1204
      %v1221 = vpack.c.bf16 %v1207, %v1206
      %v1222 = vpack.c.bf16 %v1209, %v1208
      %v1223 = vpack.c.bf16 %v1211, %v1210
      %v1224 = vpack.c.bf16 %v1213, %v1212
      %v1225 = vpack.c.bf16 %v1215, %v1214
      %v1226 = vpack.c.bf16 %v1217, %v1216
      %s1227 = scalar_lea.vmem %s1, 20
      %v1228 = vld [vmem:[%s1227] sm:$0xf]
      %v1230 = vsel %vm374, %v1218, 0
      %v1233 = vsel %vm374, %v1219, 0
      %v1236 = vsel %vm374, %v1220, 0
      %v1239 = vsel %vm374, %v1221, 0
      %v1242 = vsel %vm374, %v1222, 0
      %v1245 = vsel %vm374, %v1223, 0
      %v1248 = vsel %vm374, %v1224, 0
      %v1251 = vsel %vm374, %v1225, 0
      %v1254 = vsel %vm374, %v1226, 0
      %v1257 = vsel %vm402, %v1228, 0
      %1259 = vmatprep.subr.bf16.mxu0 0
      %1260 = vmatpush1.bf16.msra.mxu0 %v1257
      %1261 = vmatprep.subr.bf16.mxu0 0
      %1262 = vmatpush1.bf16.msra.mxu0 0
      %1263 = vmatprep.subr.bf16.mxu0 0
      %1264 = vmatpush1.bf16.msra.mxu0 0
      %1265 = vmatprep.subr.bf16.mxu0 0
      %1266 = vmatpush1.bf16.msra.mxu0 0
      %1267 = vmatprep.subr.bf16.mxu0 0
      %1268 = vmatpush1.bf16.msra.mxu0 0
      %1269 = vmatprep.subr.bf16.mxu0 0
      %1270 = vmatpush1.bf16.msra.mxu0 0
      %1271 = vmatprep.subr.bf16.mxu0 0
      %1272 = vmatpush1.bf16.msra.mxu0 0
      %1273 = vmatprep.subr.bf16.mxu0 0
      %1274 = vmatpush1.bf16.msra.mxu0 0
      %1275 = vmatprep.subr.bf16.mxu0 0
      %1276 = vmatpush1.bf16.msra.mxu0 0
      %1277 = vmatprep.subr.bf16.mxu0 0
      %1278 = vmatpush1.bf16.msra.mxu0 0
      %1279 = vmatprep.subr.bf16.mxu0 0
      %1280 = vmatpush1.bf16.msra.mxu0 0
      %1281 = vmatprep.subr.bf16.mxu0 0
      %1282 = vmatpush1.bf16.msra.mxu0 0
      %1283 = vmatprep.subr.bf16.mxu0 0
      %1284 = vmatpush1.bf16.msra.mxu0 0
      %1285 = vmatprep.subr.bf16.mxu0 0
      %1286 = vmatpush1.bf16.msra.mxu0 0
      %1287 = vmatprep.subr.bf16.mxu0 0
      %1288 = vmatpush1.bf16.msra.mxu0 0
      %1289 = vmatprep.subr.bf16.mxu0 0
      %1290 = vmatpush1.bf16.msra.mxu0 0
      %1291 = vmatprep.mubr.bf16.mxu0 0
      %1292 = vmatmul.mubr.bf16.gmra.mrb[0].mxu0 %v1230
      %v1293 = vpop.f32.mrb[0].mxu0
      %v1294 = vadd.f32 0.0, %v1293
      %v1295 = vpop.f32.mrb[0].mxu0
      %v1296 = vpop.f32.mrb[0].mxu0
      %v1297 = vadd.f32 0.0, %v1296
      %v1298 = vpop.f32.mrb[0].mxu0
      %1299 = vmatprep.mubr.bf16.mxu0 0
      %1300 = vmatmul.mubr.bf16.gmra.mrb[0].mxu0 %v1233
      %v1301 = vpop.f32.mrb[0].mxu0
      %v1302 = vadd.f32 0.0, %v1301
      %v1303 = vpop.f32.mrb[0].mxu0
      %v1304 = vpop.f32.mrb[0].mxu0
      %v1305 = vadd.f32 0.0, %v1304
      %v1306 = vpop.f32.mrb[0].mxu0
      %1307 = vmatprep.mubr.bf16.mxu0 0
      %1308 = vmatmul.mubr.bf16.gmra.mrb[0].mxu0 %v1236
      %v1309 = vpop.f32.mrb[0].mxu0
      %v1310 = vadd.f32 0.0, %v1309
      %v1311 = vpop.f32.mrb[0].mxu0
      %v1312 = vpop.f32.mrb[0].mxu0
      %v1313 = vadd.f32 0.0, %v1312
      %v1314 = vpop.f32.mrb[0].mxu0
      %1315 = vmatprep.mubr.bf16.mxu0 0
      %1316 = vmatmul.mubr.bf16.gmra.mrb[0].mxu0 %v1239
      %v1317 = vpop.f32.mrb[0].mxu0
      %v1318 = vadd.f32 0.0, %v1317
      %v1319 = vpop.f32.mrb[0].mxu0
      %v1320 = vpop.f32.mrb[0].mxu0
      %v1321 = vadd.f32 0.0, %v1320
      %v1322 = vpop.f32.mrb[0].mxu0
      %1323 = vmatprep.mubr.bf16.mxu0 0
      %1324 = vmatmul.mubr.bf16.gmra.mrb[0].mxu0 %v1242
      %v1325 = vpop.f32.mrb[0].mxu0
      %v1326 = vadd.f32 0.0, %v1325
      %v1327 = vpop.f32.mrb[0].mxu0
      %v1328 = vpop.f32.mrb[0].mxu0
      %v1329 = vadd.f32 0.0, %v1328
      %v1330 = vpop.f32.mrb[0].mxu0
      %1331 = vmatprep.mubr.bf16.mxu0 0
      %1332 = vmatmul.mubr.bf16.gmra.mrb[0].mxu0 %v1245
      %v1333 = vpop.f32.mrb[0].mxu0
      %v1334 = vadd.f32 0.0, %v1333
      %v1335 = vpop.f32.mrb[0].mxu0
      %v1336 = vpop.f32.mrb[0].mxu0
      %v1337 = vadd.f32 0.0, %v1336
      %v1338 = vpop.f32.mrb[0].mxu0
      %1339 = vmatprep.mubr.bf16.mxu0 0
      %1340 = vmatmul.mubr.bf16.gmra.mrb[0].mxu0 %v1248
      %v1341 = vpop.f32.mrb[0].mxu0
      %v1342 = vadd.f32 0.0, %v1341
      %v1343 = vpop.f32.mrb[0].mxu0
      %v1344 = vpop.f32.mrb[0].mxu0
      %v1345 = vadd.f32 0.0, %v1344
      %v1346 = vpop.f32.mrb[0].mxu0
      %1347 = vmatprep.mubr.bf16.mxu0 0
      %1348 = vmatmul.mubr.bf16.gmra.mrb[0].mxu0 %v1251
      %v1349 = vpop.f32.mrb[0].mxu0
      %v1350 = vadd.f32 0.0, %v1349
      %v1351 = vpop.f32.mrb[0].mxu0
      %v1352 = vpop.f32.mrb[0].mxu0
      %v1353 = vadd.f32 0.0, %v1352
      %v1354 = vpop.f32.mrb[0].mxu0
      %1355 = vmatprep.mubr.bf16.mxu0 0
      %1356 = vmatmul.mubr.bf16.gmra.mrb[0].mxu0 %v1254
      %v1357 = vpop.f32.mrb[0].mxu0
      %v1358 = vadd.f32 0.0, %v1357
      %v1359 = vpop.f32.mrb[0].mxu0
      %v1360 = vpop.f32.mrb[0].mxu0
      %v1361 = vadd.f32 0.0, %v1360
      %v1362 = vpop.f32.mrb[0].mxu0
      %1363 = vdwg.mxu0
      %v1364 = vadd.f32 %v1180, %v1294
      %v1365 = vadd.f32 %v1181, %v1297
      %v1366 = vadd.f32 %v1182, %v1302
      %v1367 = vadd.f32 %v1183, %v1305
      %v1368 = vadd.f32 %v1184, %v1310
      %v1369 = vadd.f32 %v1185, %v1313
      %v1370 = vadd.f32 %v1186, %v1318
      %v1371 = vadd.f32 %v1187, %v1321
      %v1372 = vadd.f32 %v1188, %v1326
      %v1373 = vadd.f32 %v1189, %v1329
      %v1374 = vadd.f32 %v1190, %v1334
      %v1375 = vadd.f32 %v1191, %v1337
      %v1376 = vadd.f32 %v1192, %v1342
      %v1377 = vadd.f32 %v1193, %v1345
      %v1378 = vadd.f32 %v1194, %v1350
      %v1379 = vadd.f32 %v1195, %v1353
      %v1380 = vadd.f32 %v1196, %v1358
      %v1381 = vadd.f32 %v1197, %v1361
      %s1382 = sadd.s32 %s313, 36
      %s1383 = scalar_lea.vmem %s287, %s1382
      %v1384 = vld [vmem:[%s1383] sm:$0xff]
      %v1385 = vld [vmem:[%s1383 + $0x8] sm:$0xff]
      %v1386 = vld [vmem:[%s1383 + $0x10] sm:$0xff]
      %v1387 = vld [vmem:[%s1383 + $0x18] sm:$0xff]
      %v1388 = vld [vmem:[%s1383 + $0x20] sm:$0xff]
      %v1389 = vld [vmem:[%s1383 + $0x28] sm:$0xff]
      %v1390 = vld [vmem:[%s1383 + $0x30] sm:$0xff]
      %v1391 = vld [vmem:[%s1383 + $0x38] sm:$0xff]
      %v1392 = vld [vmem:[%s1383 + $0x40] sm:$0xff]
      %v1393 = vld [vmem:[%s1383 + $0x48] sm:$0xff]
      %v1394 = vld [vmem:[%s1383 + $0x50] sm:$0xff]
      %v1395 = vld [vmem:[%s1383 + $0x58] sm:$0xff]
      %v1396 = vld [vmem:[%s1383 + $0x60] sm:$0xff]
      %v1397 = vld [vmem:[%s1383 + $0x68] sm:$0xff]
      %v1398 = vld [vmem:[%s1383 + $0x70] sm:$0xff]
      %v1399 = vld [vmem:[%s1383 + $0x78] sm:$0xff]
      %v1400 = vld [vmem:[%s1383 + $0x80] sm:$0xff]
      %v1401 = vld [vmem:[%s1383 + $0x88] sm:$0xff]
      %v1402 = vpack.c.bf16 %v1385, %v1384
      %v1403 = vpack.c.bf16 %v1387, %v1386
      %v1404 = vpack.c.bf16 %v1389, %v1388
      %v1405 = vpack.c.bf16 %v1391, %v1390
      %v1406 = vpack.c.bf16 %v1393, %v1392
      %v1407 = vpack.c.bf16 %v1395, %v1394
      %v1408 = vpack.c.bf16 %v1397, %v1396
      %v1409 = vpack.c.bf16 %v1399, %v1398
      %v1410 = vpack.c.bf16 %v1401, %v1400
      %s1411 = scalar_lea.vmem %s1, 24
      %v1412 = vld [vmem:[%s1411] sm:$0xf]
      %v1414 = vsel %vm374, %v1402, 0
      %v1417 = vsel %vm374, %v1403, 0
      %v1420 = vsel %vm374, %v1404, 0
      %v1423 = vsel %vm374, %v1405, 0
      %v1426 = vsel %vm374, %v1406, 0
      %v1429 = vsel %vm374, %v1407, 0
      %v1432 = vsel %vm374, %v1408, 0
      %v1435 = vsel %vm374, %v1409, 0
      %v1438 = vsel %vm374, %v1410, 0
      %v1441 = vsel %vm402, %v1412, 0
      %1443 = vmatprep.subr.bf16.mxu0 0
      %1444 = vmatpush1.bf16.msra.mxu0 %v1441
      %1445 = vmatprep.subr.bf16.mxu0 0
      %1446 = vmatpush1.bf16.msra.mxu0 0
      %1447 = vmatprep.subr.bf16.mxu0 0
      %1448 = vmatpush1.bf16.msra.mxu0 0
      %1449 = vmatprep.subr.bf16.mxu0 0
      %1450 = vmatpush1.bf16.msra.mxu0 0
      %1451 = vmatprep.subr.bf16.mxu0 0
      %1452 = vmatpush1.bf16.msra.mxu0 0
      %1453 = vmatprep.subr.bf16.mxu0 0
      %1454 = vmatpush1.bf16.msra.mxu0 0
      %1455 = vmatprep.subr.bf16.mxu0 0
      %1456 = vmatpush1.bf16.msra.mxu0 0
      %1457 = vmatprep.subr.bf16.mxu0 0
      %1458 = vmatpush1.bf16.msra.mxu0 0
      %1459 = vmatprep.subr.bf16.mxu0 0
      %1460 = vmatpush1.bf16.msra.mxu0 0
      %1461 = vmatprep.subr.bf16.mxu0 0
      %1462 = vmatpush1.bf16.msra.mxu0 0
      %1463 = vmatprep.subr.bf16.mxu0 0
      %1464 = vmatpush1.bf16.msra.mxu0 0
      %1465 = vmatprep.subr.bf16.mxu0 0
      %1466 = vmatpush1.bf16.msra.mxu0 0
      %1467 = vmatprep.subr.bf16.mxu0 0
      %1468 = vmatpush1.bf16.msra.mxu0 0
      %1469 = vmatprep.subr.bf16.mxu0 0
      %1470 = vmatpush1.bf16.msra.mxu0 0
      %1471 = vmatprep.subr.bf16.mxu0 0
      %1472 = vmatpush1.bf16.msra.mxu0 0
      %1473 = vmatprep.subr.bf16.mxu0 0
      %1474 = vmatpush1.bf16.msra.mxu0 0
      %1475 = vmatprep.mubr.bf16.mxu0 0
      %1476 = vmatmul.mubr.bf16.gmra.mrb[0].mxu0 %v1414
      %v1477 = vpop.f32.mrb[0].mxu0
      %v1478 = vadd.f32 0.0, %v1477
      %v1479 = vpop.f32.mrb[0].mxu0
      %v1480 = vpop.f32.mrb[0].mxu0
      %v1481 = vadd.f32 0.0, %v1480
      %v1482 = vpop.f32.mrb[0].mxu0
      %1483 = vmatprep.mubr.bf16.mxu0 0
      %1484 = vmatmul.mubr.bf16.gmra.mrb[0].mxu0 %v1417
      %v1485 = vpop.f32.mrb[0].mxu0
      %v1486 = vadd.f32 0.0, %v1485
      %v1487 = vpop.f32.mrb[0].mxu0
      %v1488 = vpop.f32.mrb[0].mxu0
      %v1489 = vadd.f32 0.0, %v1488
      %v1490 = vpop.f32.mrb[0].mxu0
      %1491 = vmatprep.mubr.bf16.mxu0 0
      %1492 = vmatmul.mubr.bf16.gmra.mrb[0].mxu0 %v1420
      %v1493 = vpop.f32.mrb[0].mxu0
      %v1494 = vadd.f32 0.0, %v1493
      %v1495 = vpop.f32.mrb[0].mxu0
      %v1496 = vpop.f32.mrb[0].mxu0
      %v1497 = vadd.f32 0.0, %v1496
      %v1498 = vpop.f32.mrb[0].mxu0
      %1499 = vmatprep.mubr.bf16.mxu0 0
      %1500 = vmatmul.mubr.bf16.gmra.mrb[0].mxu0 %v1423
      %v1501 = vpop.f32.mrb[0].mxu0
      %v1502 = vadd.f32 0.0, %v1501
      %v1503 = vpop.f32.mrb[0].mxu0
      %v1504 = vpop.f32.mrb[0].mxu0
      %v1505 = vadd.f32 0.0, %v1504
      %v1506 = vpop.f32.mrb[0].mxu0
      %1507 = vmatprep.mubr.bf16.mxu0 0
      %1508 = vmatmul.mubr.bf16.gmra.mrb[0].mxu0 %v1426
      %v1509 = vpop.f32.mrb[0].mxu0
      %v1510 = vadd.f32 0.0, %v1509
      %v1511 = vpop.f32.mrb[0].mxu0
      %v1512 = vpop.f32.mrb[0].mxu0
      %v1513 = vadd.f32 0.0, %v1512
      %v1514 = vpop.f32.mrb[0].mxu0
      %1515 = vmatprep.mubr.bf16.mxu0 0
      %1516 = vmatmul.mubr.bf16.gmra.mrb[0].mxu0 %v1429
      %v1517 = vpop.f32.mrb[0].mxu0
      %v1518 = vadd.f32 0.0, %v1517
      %v1519 = vpop.f32.mrb[0].mxu0
      %v1520 = vpop.f32.mrb[0].mxu0
      %v1521 = vadd.f32 0.0, %v1520
      %v1522 = vpop.f32.mrb[0].mxu0
      %1523 = vmatprep.mubr.bf16.mxu0 0
      %1524 = vmatmul.mubr.bf16.gmra.mrb[0].mxu0 %v1432
      %v1525 = vpop.f32.mrb[0].mxu0
      %v1526 = vadd.f32 0.0, %v1525
      %v1527 = vpop.f32.mrb[0].mxu0
      %v1528 = vpop.f32.mrb[0].mxu0
      %v1529 = vadd.f32 0.0, %v1528
      %v1530 = vpop.f32.mrb[0].mxu0
      %1531 = vmatprep.mubr.bf16.mxu0 0
      %1532 = vmatmul.mubr.bf16.gmra.mrb[0].mxu0 %v1435
      %v1533 = vpop.f32.mrb[0].mxu0
      %v1534 = vadd.f32 0.0, %v1533
      %v1535 = vpop.f32.mrb[0].mxu0
      %v1536 = vpop.f32.mrb[0].mxu0
      %v1537 = vadd.f32 0.0, %v1536
      %v1538 = vpop.f32.mrb[0].mxu0
      %1539 = vmatprep.mubr.bf16.mxu0 0
      %1540 = vmatmul.mubr.bf16.gmra.mrb[0].mxu0 %v1438
      %v1541 = vpop.f32.mrb[0].mxu0
      %v1542 = vadd.f32 0.0, %v1541
      %v1543 = vpop.f32.mrb[0].mxu0
      %v1544 = vpop.f32.mrb[0].mxu0
      %v1545 = vadd.f32 0.0, %v1544
      %v1546 = vpop.f32.mrb[0].mxu0
      %1547 = vdwg.mxu0
      %v1548 = vadd.f32 %v1364, %v1478
      %v1549 = vadd.f32 %v1365, %v1481
      %v1550 = vadd.f32 %v1366, %v1486
      %v1551 = vadd.f32 %v1367, %v1489
      %v1552 = vadd.f32 %v1368, %v1494
      %v1553 = vadd.f32 %v1369, %v1497
      %v1554 = vadd.f32 %v1370, %v1502
      %v1555 = vadd.f32 %v1371, %v1505
      %v1556 = vadd.f32 %v1372, %v1510
      %v1557 = vadd.f32 %v1373, %v1513
      %v1558 = vadd.f32 %v1374, %v1518
      %v1559 = vadd.f32 %v1375, %v1521
      %v1560 = vadd.f32 %v1376, %v1526
      %v1561 = vadd.f32 %v1377, %v1529
      %v1562 = vadd.f32 %v1378, %v1534
      %v1563 = vadd.f32 %v1379, %v1537
      %v1564 = vadd.f32 %v1380, %v1542
      %v1565 = vadd.f32 %v1381, %v1545
      %s1566 = sadd.s32 %s313, 37
      %s1567 = scalar_lea.vmem %s287, %s1566
      %v1568 = vld [vmem:[%s1567] sm:$0xff]
      %v1569 = vld [vmem:[%s1567 + $0x8] sm:$0xff]
      %v1570 = vld [vmem:[%s1567 + $0x10] sm:$0xff]
      %v1571 = vld [vmem:[%s1567 + $0x18] sm:$0xff]
      %v1572 = vld [vmem:[%s1567 + $0x20] sm:$0xff]
      %v1573 = vld [vmem:[%s1567 + $0x28] sm:$0xff]
      %v1574 = vld [vmem:[%s1567 + $0x30] sm:$0xff]
      %v1575 = vld [vmem:[%s1567 + $0x38] sm:$0xff]
      %v1576 = vld [vmem:[%s1567 + $0x40] sm:$0xff]
      %v1577 = vld [vmem:[%s1567 + $0x48] sm:$0xff]
      %v1578 = vld [vmem:[%s1567 + $0x50] sm:$0xff]
      %v1579 = vld [vmem:[%s1567 + $0x58] sm:$0xff]
      %v1580 = vld [vmem:[%s1567 + $0x60] sm:$0xff]
      %v1581 = vld [vmem:[%s1567 + $0x68] sm:$0xff]
      %v1582 = vld [vmem:[%s1567 + $0x70] sm:$0xff]
      %v1583 = vld [vmem:[%s1567 + $0x78] sm:$0xff]
      %v1584 = vld [vmem:[%s1567 + $0x80] sm:$0xff]
      %v1585 = vld [vmem:[%s1567 + $0x88] sm:$0xff]
      %v1586 = vpack.c.bf16 %v1569, %v1568
      %v1587 = vpack.c.bf16 %v1571, %v1570
      %v1588 = vpack.c.bf16 %v1573, %v1572
      %v1589 = vpack.c.bf16 %v1575, %v1574
      %v1590 = vpack.c.bf16 %v1577, %v1576
      %v1591 = vpack.c.bf16 %v1579, %v1578
      %v1592 = vpack.c.bf16 %v1581, %v1580
      %v1593 = vpack.c.bf16 %v1583, %v1582
      %v1594 = vpack.c.bf16 %v1585, %v1584
      %s1595 = scalar_lea.vmem %s1, 28
      %v1596 = vld [vmem:[%s1595] sm:$0xf]
      %v1598 = vsel %vm374, %v1586, 0
      %v1601 = vsel %vm374, %v1587, 0
      %v1604 = vsel %vm374, %v1588, 0
      %v1607 = vsel %vm374, %v1589, 0
      %v1610 = vsel %vm374, %v1590, 0
      %v1613 = vsel %vm374, %v1591, 0
      %v1616 = vsel %vm374, %v1592, 0
      %v1619 = vsel %vm374, %v1593, 0
      %v1622 = vsel %vm374, %v1594, 0
      %v1625 = vsel %vm402, %v1596, 0
      %1627 = vmatprep.subr.bf16.mxu0 0
      %1628 = vmatpush1.bf16.msra.mxu0 %v1625
      %1629 = vmatprep.subr.bf16.mxu0 0
      %1630 = vmatpush1.bf16.msra.mxu0 0
      %1631 = vmatprep.subr.bf16.mxu0 0
      %1632 = vmatpush1.bf16.msra.mxu0 0
      %1633 = vmatprep.subr.bf16.mxu0 0
      %1634 = vmatpush1.bf16.msra.mxu0 0
      %1635 = vmatprep.subr.bf16.mxu0 0
      %1636 = vmatpush1.bf16.msra.mxu0 0
      %1637 = vmatprep.subr.bf16.mxu0 0
      %1638 = vmatpush1.bf16.msra.mxu0 0
      %1639 = vmatprep.subr.bf16.mxu0 0
      %1640 = vmatpush1.bf16.msra.mxu0 0
      %1641 = vmatprep.subr.bf16.mxu0 0
      %1642 = vmatpush1.bf16.msra.mxu0 0
      %1643 = vmatprep.subr.bf16.mxu0 0
      %1644 = vmatpush1.bf16.msra.mxu0 0
      %1645 = vmatprep.subr.bf16.mxu0 0
      %1646 = vmatpush1.bf16.msra.mxu0 0
      %1647 = vmatprep.subr.bf16.mxu0 0
      %1648 = vmatpush1.bf16.msra.mxu0 0
      %1649 = vmatprep.subr.bf16.mxu0 0
      %1650 = vmatpush1.bf16.msra.mxu0 0
      %1651 = vmatprep.subr.bf16.mxu0 0
      %1652 = vmatpush1.bf16.msra.mxu0 0
      %1653 = vmatprep.subr.bf16.mxu0 0
      %1654 = vmatpush1.bf16.msra.mxu0 0
      %1655 = vmatprep.subr.bf16.mxu0 0
      %1656 = vmatpush1.bf16.msra.mxu0 0
      %1657 = vmatprep.subr.bf16.mxu0 0
      %1658 = vmatpush1.bf16.msra.mxu0 0
      %1659 = vmatprep.mubr.bf16.mxu0 0
      %1660 = vmatmul.mubr.bf16.gmra.mrb[0].mxu0 %v1598
      %v1661 = vpop.f32.mrb[0].mxu0
      %v1662 = vadd.f32 0.0, %v1661
      %v1663 = vpop.f32.mrb[0].mxu0
      %v1664 = vpop.f32.mrb[0].mxu0
      %v1665 = vadd.f32 0.0, %v1664
      %v1666 = vpop.f32.mrb[0].mxu0
      %1667 = vmatprep.mubr.bf16.mxu0 0
      %1668 = vmatmul.mubr.bf16.gmra.mrb[0].mxu0 %v1601
      %v1669 = vpop.f32.mrb[0].mxu0
      %v1670 = vadd.f32 0.0, %v1669
      %v1671 = vpop.f32.mrb[0].mxu0
      %v1672 = vpop.f32.mrb[0].mxu0
      %v1673 = vadd.f32 0.0, %v1672
      %v1674 = vpop.f32.mrb[0].mxu0
      %1675 = vmatprep.mubr.bf16.mxu0 0
      %1676 = vmatmul.mubr.bf16.gmra.mrb[0].mxu0 %v1604
      %v1677 = vpop.f32.mrb[0].mxu0
      %v1678 = vadd.f32 0.0, %v1677
      %v1679 = vpop.f32.mrb[0].mxu0
      %v1680 = vpop.f32.mrb[0].mxu0
      %v1681 = vadd.f32 0.0, %v1680
      %v1682 = vpop.f32.mrb[0].mxu0
      %1683 = vmatprep.mubr.bf16.mxu0 0
      %1684 = vmatmul.mubr.bf16.gmra.mrb[0].mxu0 %v1607
      %v1685 = vpop.f32.mrb[0].mxu0
      %v1686 = vadd.f32 0.0, %v1685
      %v1687 = vpop.f32.mrb[0].mxu0
      %v1688 = vpop.f32.mrb[0].mxu0
      %v1689 = vadd.f32 0.0, %v1688
      %v1690 = vpop.f32.mrb[0].mxu0
      %1691 = vmatprep.mubr.bf16.mxu0 0
      %1692 = vmatmul.mubr.bf16.gmra.mrb[0].mxu0 %v1610
      %v1693 = vpop.f32.mrb[0].mxu0
      %v1694 = vadd.f32 0.0, %v1693
      %v1695 = vpop.f32.mrb[0].mxu0
      %v1696 = vpop.f32.mrb[0].mxu0
      %v1697 = vadd.f32 0.0, %v1696
      %v1698 = vpop.f32.mrb[0].mxu0
      %1699 = vmatprep.mubr.bf16.mxu0 0
      %1700 = vmatmul.mubr.bf16.gmra.mrb[0].mxu0 %v1613
      %v1701 = vpop.f32.mrb[0].mxu0
      %v1702 = vadd.f32 0.0, %v1701
      %v1703 = vpop.f32.mrb[0].mxu0
      %v1704 = vpop.f32.mrb[0].mxu0
      %v1705 = vadd.f32 0.0, %v1704
      %v1706 = vpop.f32.mrb[0].mxu0
      %1707 = vmatprep.mubr.bf16.mxu0 0
      %1708 = vmatmul.mubr.bf16.gmra.mrb[0].mxu0 %v1616
      %v1709 = vpop.f32.mrb[0].mxu0
      %v1710 = vadd.f32 0.0, %v1709
      %v1711 = vpop.f32.mrb[0].mxu0
      %v1712 = vpop.f32.mrb[0].mxu0
      %v1713 = vadd.f32 0.0, %v1712
      %v1714 = vpop.f32.mrb[0].mxu0
      %1715 = vmatprep.mubr.bf16.mxu0 0
      %1716 = vmatmul.mubr.bf16.gmra.mrb[0].mxu0 %v1619
      %v1717 = vpop.f32.mrb[0].mxu0
      %v1718 = vadd.f32 0.0, %v1717
      %v1719 = vpop.f32.mrb[0].mxu0
      %v1720 = vpop.f32.mrb[0].mxu0
      %v1721 = vadd.f32 0.0, %v1720
      %v1722 = vpop.f32.mrb[0].mxu0
      %1723 = vmatprep.mubr.bf16.mxu0 0
      %1724 = vmatmul.mubr.bf16.gmra.mrb[0].mxu0 %v1622
      %v1725 = vpop.f32.mrb[0].mxu0
      %v1726 = vadd.f32 0.0, %v1725
      %v1727 = vpop.f32.mrb[0].mxu0
      %v1728 = vpop.f32.mrb[0].mxu0
      %v1729 = vadd.f32 0.0, %v1728
      %v1730 = vpop.f32.mrb[0].mxu0
      %1731 = vdwg.mxu0
      %v1732 = vadd.f32 %v1548, %v1662
      %v1733 = vadd.f32 %v1549, %v1665
      %v1734 = vadd.f32 %v1550, %v1670
      %v1735 = vadd.f32 %v1551, %v1673
      %v1736 = vadd.f32 %v1552, %v1678
      %v1737 = vadd.f32 %v1553, %v1681
      %v1738 = vadd.f32 %v1554, %v1686
      %v1739 = vadd.f32 %v1555, %v1689
      %v1740 = vadd.f32 %v1556, %v1694
      %v1741 = vadd.f32 %v1557, %v1697
      %v1742 = vadd.f32 %v1558, %v1702
      %v1743 = vadd.f32 %v1559, %v1705
      %v1744 = vadd.f32 %v1560, %v1710
      %v1745 = vadd.f32 %v1561, %v1713
      %v1746 = vadd.f32 %v1562, %v1718
      %v1747 = vadd.f32 %v1563, %v1721
      %v1748 = vadd.f32 %v1564, %v1726
      %v1749 = vadd.f32 %v1565, %v1729
      %s1750 = sadd.s32 %s313, 38
      %s1751 = scalar_lea.vmem %s287, %s1750
      %v1752 = vld [vmem:[%s1751] sm:$0xff]
      %v1753 = vld [vmem:[%s1751 + $0x8] sm:$0xff]
      %v1754 = vld [vmem:[%s1751 + $0x10] sm:$0xff]
      %v1755 = vld [vmem:[%s1751 + $0x18] sm:$0xff]
      %v1756 = vld [vmem:[%s1751 + $0x20] sm:$0xff]
      %v1757 = vld [vmem:[%s1751 + $0x28] sm:$0xff]
      %v1758 = vld [vmem:[%s1751 + $0x30] sm:$0xff]
      %v1759 = vld [vmem:[%s1751 + $0x38] sm:$0xff]
      %v1760 = vld [vmem:[%s1751 + $0x40] sm:$0xff]
      %v1761 = vld [vmem:[%s1751 + $0x48] sm:$0xff]
      %v1762 = vld [vmem:[%s1751 + $0x50] sm:$0xff]
      %v1763 = vld [vmem:[%s1751 + $0x58] sm:$0xff]
      %v1764 = vld [vmem:[%s1751 + $0x60] sm:$0xff]
      %v1765 = vld [vmem:[%s1751 + $0x68] sm:$0xff]
      %v1766 = vld [vmem:[%s1751 + $0x70] sm:$0xff]
      %v1767 = vld [vmem:[%s1751 + $0x78] sm:$0xff]
      %v1768 = vld [vmem:[%s1751 + $0x80] sm:$0xff]
      %v1769 = vld [vmem:[%s1751 + $0x88] sm:$0xff]
      %v1770 = vpack.c.bf16 %v1753, %v1752
      %v1771 = vpack.c.bf16 %v1755, %v1754
      %v1772 = vpack.c.bf16 %v1757, %v1756
      %v1773 = vpack.c.bf16 %v1759, %v1758
      %v1774 = vpack.c.bf16 %v1761, %v1760
      %v1775 = vpack.c.bf16 %v1763, %v1762
      %v1776 = vpack.c.bf16 %v1765, %v1764
      %v1777 = vpack.c.bf16 %v1767, %v1766
      %v1778 = vpack.c.bf16 %v1769, %v1768
      %s1779 = scalar_lea.vmem %s1, 32
      %v1780 = vld [vmem:[%s1779] sm:$0xf]
      %v1782 = vsel %vm374, %v1770, 0
      %v1785 = vsel %vm374, %v1771, 0
      %v1788 = vsel %vm374, %v1772, 0
      %v1791 = vsel %vm374, %v1773, 0
      %v1794 = vsel %vm374, %v1774, 0
      %v1797 = vsel %vm374, %v1775, 0
      %v1800 = vsel %vm374, %v1776, 0
      %v1803 = vsel %vm374, %v1777, 0
      %v1806 = vsel %vm374, %v1778, 0
      %v1809 = vsel %vm402, %v1780, 0
      %1811 = vmatprep.subr.bf16.mxu0 0
      %1812 = vmatpush1.bf16.msra.mxu0 %v1809
      %1813 = vmatprep.subr.bf16.mxu0 0
      %1814 = vmatpush1.bf16.msra.mxu0 0
      %1815 = vmatprep.subr.bf16.mxu0 0
      %1816 = vmatpush1.bf16.msra.mxu0 0
      %1817 = vmatprep.subr.bf16.mxu0 0
      %1818 = vmatpush1.bf16.msra.mxu0 0
      %1819 = vmatprep.subr.bf16.mxu0 0
      %1820 = vmatpush1.bf16.msra.mxu0 0
      %1821 = vmatprep.subr.bf16.mxu0 0
      %1822 = vmatpush1.bf16.msra.mxu0 0
      %1823 = vmatprep.subr.bf16.mxu0 0
      %1824 = vmatpush1.bf16.msra.mxu0 0
      %1825 = vmatprep.subr.bf16.mxu0 0
      %1826 = vmatpush1.bf16.msra.mxu0 0
      %1827 = vmatprep.subr.bf16.mxu0 0
      %1828 = vmatpush1.bf16.msra.mxu0 0
      %1829 = vmatprep.subr.bf16.mxu0 0
      %1830 = vmatpush1.bf16.msra.mxu0 0
      %1831 = vmatprep.subr.bf16.mxu0 0
      %1832 = vmatpush1.bf16.msra.mxu0 0
      %1833 = vmatprep.subr.bf16.mxu0 0
      %1834 = vmatpush1.bf16.msra.mxu0 0
      %1835 = vmatprep.subr.bf16.mxu0 0
      %1836 = vmatpush1.bf16.msra.mxu0 0
      %1837 = vmatprep.subr.bf16.mxu0 0
      %1838 = vmatpush1.bf16.msra.mxu0 0
      %1839 = vmatprep.subr.bf16.mxu0 0
      %1840 = vmatpush1.bf16.msra.mxu0 0
      %1841 = vmatprep.subr.bf16.mxu0 0
      %1842 = vmatpush1.bf16.msra.mxu0 0
      %1843 = vmatprep.mubr.bf16.mxu0 0
      %1844 = vmatmul.mubr.bf16.gmra.mrb[0].mxu0 %v1782
      %v1845 = vpop.f32.mrb[0].mxu0
      %v1846 = vadd.f32 0.0, %v1845
      %v1847 = vpop.f32.mrb[0].mxu0
      %v1848 = vpop.f32.mrb[0].mxu0
      %v1849 = vadd.f32 0.0, %v1848
      %v1850 = vpop.f32.mrb[0].mxu0
      %1851 = vmatprep.mubr.bf16.mxu0 0
      %1852 = vmatmul.mubr.bf16.gmra.mrb[0].mxu0 %v1785
      %v1853 = vpop.f32.mrb[0].mxu0
      %v1854 = vadd.f32 0.0, %v1853
      %v1855 = vpop.f32.mrb[0].mxu0
      %v1856 = vpop.f32.mrb[0].mxu0
      %v1857 = vadd.f32 0.0, %v1856
      %v1858 = vpop.f32.mrb[0].mxu0
      %1859 = vmatprep.mubr.bf16.mxu0 0
      %1860 = vmatmul.mubr.bf16.gmra.mrb[0].mxu0 %v1788
      %v1861 = vpop.f32.mrb[0].mxu0
      %v1862 = vadd.f32 0.0, %v1861
      %v1863 = vpop.f32.mrb[0].mxu0
      %v1864 = vpop.f32.mrb[0].mxu0
      %v1865 = vadd.f32 0.0, %v1864
      %v1866 = vpop.f32.mrb[0].mxu0
      %1867 = vmatprep.mubr.bf16.mxu0 0
      %1868 = vmatmul.mubr.bf16.gmra.mrb[0].mxu0 %v1791
      %v1869 = vpop.f32.mrb[0].mxu0
      %v1870 = vadd.f32 0.0, %v1869
      %v1871 = vpop.f32.mrb[0].mxu0
      %v1872 = vpop.f32.mrb[0].mxu0
      %v1873 = vadd.f32 0.0, %v1872
      %v1874 = vpop.f32.mrb[0].mxu0
      %1875 = vmatprep.mubr.bf16.mxu0 0
      %1876 = vmatmul.mubr.bf16.gmra.mrb[0].mxu0 %v1794
      %v1877 = vpop.f32.mrb[0].mxu0
      %v1878 = vadd.f32 0.0, %v1877
      %v1879 = vpop.f32.mrb[0].mxu0
      %v1880 = vpop.f32.mrb[0].mxu0
      %v1881 = vadd.f32 0.0, %v1880
      %v1882 = vpop.f32.mrb[0].mxu0
      %1883 = vmatprep.mubr.bf16.mxu0 0
      %1884 = vmatmul.mubr.bf16.gmra.mrb[0].mxu0 %v1797
      %v1885 = vpop.f32.mrb[0].mxu0
      %v1886 = vadd.f32 0.0, %v1885
      %v1887 = vpop.f32.mrb[0].mxu0
      %v1888 = vpop.f32.mrb[0].mxu0
      %v1889 = vadd.f32 0.0, %v1888
      %v1890 = vpop.f32.mrb[0].mxu0
      %1891 = vmatprep.mubr.bf16.mxu0 0
      %1892 = vmatmul.mubr.bf16.gmra.mrb[0].mxu0 %v1800
      %v1893 = vpop.f32.mrb[0].mxu0
      %v1894 = vadd.f32 0.0, %v1893
      %v1895 = vpop.f32.mrb[0].mxu0
      %v1896 = vpop.f32.mrb[0].mxu0
      %v1897 = vadd.f32 0.0, %v1896
      %v1898 = vpop.f32.mrb[0].mxu0
      %1899 = vmatprep.mubr.bf16.mxu0 0
      %1900 = vmatmul.mubr.bf16.gmra.mrb[0].mxu0 %v1803
      %v1901 = vpop.f32.mrb[0].mxu0
      %v1902 = vadd.f32 0.0, %v1901
      %v1903 = vpop.f32.mrb[0].mxu0
      %v1904 = vpop.f32.mrb[0].mxu0
      %v1905 = vadd.f32 0.0, %v1904
      %v1906 = vpop.f32.mrb[0].mxu0
      %1907 = vmatprep.mubr.bf16.mxu0 0
      %1908 = vmatmul.mubr.bf16.gmra.mrb[0].mxu0 %v1806
      %v1909 = vpop.f32.mrb[0].mxu0
      %v1910 = vadd.f32 0.0, %v1909
      %v1911 = vpop.f32.mrb[0].mxu0
      %v1912 = vpop.f32.mrb[0].mxu0
      %v1913 = vadd.f32 0.0, %v1912
      %v1914 = vpop.f32.mrb[0].mxu0
      %1915 = vdwg.mxu0
      %v1916 = vadd.f32 %v1732, %v1846
      %v1917 = vadd.f32 %v1733, %v1849
      %v1918 = vadd.f32 %v1734, %v1854
      %v1919 = vadd.f32 %v1735, %v1857
      %v1920 = vadd.f32 %v1736, %v1862
      %v1921 = vadd.f32 %v1737, %v1865
      %v1922 = vadd.f32 %v1738, %v1870
      %v1923 = vadd.f32 %v1739, %v1873
      %v1924 = vadd.f32 %v1740, %v1878
      %v1925 = vadd.f32 %v1741, %v1881
      %v1926 = vadd.f32 %v1742, %v1886
      %v1927 = vadd.f32 %v1743, %v1889
      %v1928 = vadd.f32 %v1744, %v1894
      %v1929 = vadd.f32 %v1745, %v1897
      %v1930 = vadd.f32 %v1746, %v1902
      %v1931 = vadd.f32 %v1747, %v1905
      %v1932 = vadd.f32 %v1748, %v1910
      %v1933 = vadd.f32 %v1749, %v1913
      %v1934 = vld [vmem:[%s2] sm:$0x1]
      %v1936 = vlaneseq
      %v1937 = vshrl.u32 %v1936, 7
      %v1938 = vsub.s32 0, %v1937
      %v1939 = vrot.slane %v1934, %v1938
      %v1941 = vadd.f32 %v1916, %v1939
      %v1942 = vadd.f32 %v1917, %v1939
      %v1943 = vadd.f32 %v1918, %v1939
      %v1944 = vadd.f32 %v1919, %v1939
      %v1945 = vadd.f32 %v1920, %v1939
      %v1946 = vadd.f32 %v1921, %v1939
      %v1947 = vadd.f32 %v1922, %v1939
      %v1948 = vadd.f32 %v1923, %v1939
      %v1949 = vadd.f32 %v1924, %v1939
      %v1950 = vadd.f32 %v1925, %v1939
      %v1951 = vadd.f32 %v1926, %v1939
      %v1952 = vadd.f32 %v1927, %v1939
      %v1953 = vadd.f32 %v1928, %v1939
      %v1954 = vadd.f32 %v1929, %v1939
      %v1955 = vadd.f32 %v1930, %v1939
      %v1956 = vadd.f32 %v1931, %v1939
      %v1957 = vadd.f32 %v1932, %v1939
      %v1958 = vadd.f32 %v1933, %v1939
      %1959 = vst [vmem:[%s296] sm:$0xff] %v1941
      %1960 = vst [vmem:[%s296 + $0x8] sm:$0xff] %v1942
      %1961 = vst [vmem:[%s296 + $0x10] sm:$0xff] %v1943
      %1962 = vst [vmem:[%s296 + $0x18] sm:$0xff] %v1944
      %1963 = vst [vmem:[%s296 + $0x20] sm:$0xff] %v1945
      %1964 = vst [vmem:[%s296 + $0x28] sm:$0xff] %v1946
      %1965 = vst [vmem:[%s296 + $0x30] sm:$0xff] %v1947
      %1966 = vst [vmem:[%s296 + $0x38] sm:$0xff] %v1948
      %1967 = vst [vmem:[%s296 + $0x40] sm:$0xff] %v1949
      %1968 = vst [vmem:[%s296 + $0x48] sm:$0xff] %v1950
      %1969 = vst [vmem:[%s296 + $0x50] sm:$0xff] %v1951
      %1970 = vst [vmem:[%s296 + $0x58] sm:$0xff] %v1952
      %1971 = vst [vmem:[%s296 + $0x60] sm:$0xff] %v1953
      %1972 = vst [vmem:[%s296 + $0x68] sm:$0xff] %v1954
      %1973 = vst [vmem:[%s296 + $0x70] sm:$0xff] %v1955
      %1974 = vst [vmem:[%s296 + $0x78] sm:$0xff] %v1956
      %1975 = vst [vmem:[%s296 + $0x80] sm:$0xff] %v1957
      %1976 = vst [vmem:[%s296 + $0x88] sm:$0xff] %v1958
      %v1977 = vld [vmem:[%s3] sm:$0xff]
      %v1978 = vld [vmem:[%s3 + $0x8] sm:$0xff]
      %v1979 = vld [vmem:[%s3 + $0x10] sm:$0xff]
      %v1980 = vld [vmem:[%s3 + $0x18] sm:$0xff]
      %v1981 = vld [vmem:[%s3 + $0x20] sm:$0xff]
      %v1982 = vld [vmem:[%s3 + $0x28] sm:$0xff]
      %v1983 = vld [vmem:[%s3 + $0x30] sm:$0xff]
      %v1984 = vld [vmem:[%s3 + $0x38] sm:$0xff]
      %v1985 = vld [vmem:[%s3 + $0x40] sm:$0xff]
      %v1986 = vld [vmem:[%s3 + $0x48] sm:$0xff]
      %v1987 = vld [vmem:[%s3 + $0x50] sm:$0xff]
      %v1988 = vld [vmem:[%s3 + $0x58] sm:$0xff]
      %v1989 = vld [vmem:[%s3 + $0x60] sm:$0xff]
      %v1990 = vld [vmem:[%s3 + $0x68] sm:$0xff]
      %v1991 = vld [vmem:[%s3 + $0x70] sm:$0xff]
      %v1992 = vld [vmem:[%s3 + $0x78] sm:$0xff]
      %v1993 = vld [vmem:[%s3 + $0x80] sm:$0xff]
      %v1994 = vld [vmem:[%s3 + $0x88] sm:$0xff]
      %1996 = vset.pattern.permute.xlu0 0
      %1997 = vperm.xlu0 %1996, %v1977
      %v1998 = vpop.permute.xlu0 %1997
      %2001 = vset.pattern.permute.xlu0 0
      %2002 = vperm.xlu0 %2001, %v1978
      %v2003 = vpop.permute.xlu0 %2002
      %2006 = vset.pattern.permute.xlu0 0
      %2007 = vperm.xlu0 %2006, %v1979
      %v2008 = vpop.permute.xlu0 %2007
      %2011 = vset.pattern.permute.xlu0 0
      %2012 = vperm.xlu0 %2011, %v1980
      %v2013 = vpop.permute.xlu0 %2012
      %2016 = vset.pattern.permute.xlu0 0
      %2017 = vperm.xlu0 %2016, %v1981
      %v2018 = vpop.permute.xlu0 %2017
      %2021 = vset.pattern.permute.xlu0 0
      %2022 = vperm.xlu0 %2021, %v1982
      %v2023 = vpop.permute.xlu0 %2022
      %2026 = vset.pattern.permute.xlu0 0
      %2027 = vperm.xlu0 %2026, %v1983
      %v2028 = vpop.permute.xlu0 %2027
      %2031 = vset.pattern.permute.xlu0 0
      %2032 = vperm.xlu0 %2031, %v1984
      %v2033 = vpop.permute.xlu0 %2032
      %2036 = vset.pattern.permute.xlu0 0
      %2037 = vperm.xlu0 %2036, %v1985
      %v2038 = vpop.permute.xlu0 %2037
      %2041 = vset.pattern.permute.xlu0 0
      %2042 = vperm.xlu0 %2041, %v1986
      %v2043 = vpop.permute.xlu0 %2042
      %2046 = vset.pattern.permute.xlu0 0
      %2047 = vperm.xlu0 %2046, %v1987
      %v2048 = vpop.permute.xlu0 %2047
      %2051 = vset.pattern.permute.xlu0 0
      %2052 = vperm.xlu0 %2051, %v1988
      %v2053 = vpop.permute.xlu0 %2052
      %2056 = vset.pattern.permute.xlu0 0
      %2057 = vperm.xlu0 %2056, %v1989
      %v2058 = vpop.permute.xlu0 %2057
      %2061 = vset.pattern.permute.xlu0 0
      %2062 = vperm.xlu0 %2061, %v1990
      %v2063 = vpop.permute.xlu0 %2062
      %2066 = vset.pattern.permute.xlu0 0
      %2067 = vperm.xlu0 %2066, %v1991
      %v2068 = vpop.permute.xlu0 %2067
      %2071 = vset.pattern.permute.xlu0 0
      %2072 = vperm.xlu0 %2071, %v1992
      %v2073 = vpop.permute.xlu0 %2072
      %2076 = vset.pattern.permute.xlu0 0
      %2077 = vperm.xlu0 %2076, %v1993
      %v2078 = vpop.permute.xlu0 %2077
      %2081 = vset.pattern.permute.xlu0 0
      %2082 = vperm.xlu0 %2081, %v1994
      %v2083 = vpop.permute.xlu0 %2082
      %v2085 = vmul.f32 %v1941, %v1998
      %v2086 = vmul.f32 %v1942, %v2003
      %v2087 = vmul.f32 %v1943, %v2008
      %v2088 = vmul.f32 %v1944, %v2013
      %v2089 = vmul.f32 %v1945, %v2018
      %v2090 = vmul.f32 %v1946, %v2023
      %v2091 = vmul.f32 %v1947, %v2028
      %v2092 = vmul.f32 %v1948, %v2033
      %v2093 = vmul.f32 %v1949, %v2038
      %v2094 = vmul.f32 %v1950, %v2043
      %v2095 = vmul.f32 %v1951, %v2048
      %v2096 = vmul.f32 %v1952, %v2053
      %v2097 = vmul.f32 %v1953, %v2058
      %v2098 = vmul.f32 %v1954, %v2063
      %v2099 = vmul.f32 %v1955, %v2068
      %v2100 = vmul.f32 %v1956, %v2073
      %v2101 = vmul.f32 %v1957, %v2078
      %v2102 = vmul.f32 %v1958, %v2083
      %v2103 = vadd.f32 %v2085, %v2086
      %v2104 = vadd.f32 %v2103, %v2087
      %v2105 = vadd.f32 %v2104, %v2088
      %v2106 = vadd.f32 %v2105, %v2089
      %v2107 = vadd.f32 %v2106, %v2090
      %v2108 = vadd.f32 %v2107, %v2091
      %v2109 = vadd.f32 %v2108, %v2092
      %v2110 = vadd.f32 %v2109, %v2093
      %v2111 = vadd.f32 %v2110, %v2094
      %v2112 = vadd.f32 %v2111, %v2095
      %v2113 = vadd.f32 %v2112, %v2096
      %v2114 = vadd.f32 %v2113, %v2097
      %v2115 = vadd.f32 %v2114, %v2098
      %v2116 = vadd.f32 %v2115, %v2099
      %v2117 = vadd.f32 %v2116, %v2100
      %v2118 = vadd.f32 %v2117, %v2101
      %v2119 = vadd.f32 %v2118, %v2102
      %v2120 = vrot.slane %v2119, 4
      %v2121 = vadd.f32 %v2119, %v2120
      %v2122 = vrot.slane %v2121, 2
      %v2123 = vadd.f32 %v2121, %v2122
      %v2124 = vrot.slane %v2123, 1
      %v2125 = vadd.f32 %v2123, %v2124
      %2126 = vst [vmem:[%s304] sm:$0x1] %v2125
      %v2127 = vmul.f32 %v2085, %v2085
      %v2128 = vmul.f32 %v2086, %v2086
      %v2129 = vmul.f32 %v2087, %v2087
      %v2130 = vmul.f32 %v2088, %v2088
      %v2131 = vmul.f32 %v2089, %v2089
      %v2132 = vmul.f32 %v2090, %v2090
      %v2133 = vmul.f32 %v2091, %v2091
      %v2134 = vmul.f32 %v2092, %v2092
      %v2135 = vmul.f32 %v2093, %v2093
      %v2136 = vmul.f32 %v2094, %v2094
      %v2137 = vmul.f32 %v2095, %v2095
      %v2138 = vmul.f32 %v2096, %v2096
      %v2139 = vmul.f32 %v2097, %v2097
      %v2140 = vmul.f32 %v2098, %v2098
      %v2141 = vmul.f32 %v2099, %v2099
      %v2142 = vmul.f32 %v2100, %v2100
      %v2143 = vmul.f32 %v2101, %v2101
      %v2144 = vmul.f32 %v2102, %v2102
      %v2145 = vadd.f32 %v2127, %v2128
      %v2146 = vadd.f32 %v2145, %v2129
      %v2147 = vadd.f32 %v2146, %v2130
      %v2148 = vadd.f32 %v2147, %v2131
      %v2149 = vadd.f32 %v2148, %v2132
      %v2150 = vadd.f32 %v2149, %v2133
      %v2151 = vadd.f32 %v2150, %v2134
      %v2152 = vadd.f32 %v2151, %v2135
      %v2153 = vadd.f32 %v2152, %v2136
      %v2154 = vadd.f32 %v2153, %v2137
      %v2155 = vadd.f32 %v2154, %v2138
      %v2156 = vadd.f32 %v2155, %v2139
      %v2157 = vadd.f32 %v2156, %v2140
      %v2158 = vadd.f32 %v2157, %v2141
      %v2159 = vadd.f32 %v2158, %v2142
      %v2160 = vadd.f32 %v2159, %v2143
      %v2161 = vadd.f32 %v2160, %v2144
      %v2162 = vrot.slane %v2161, 4
      %v2163 = vadd.f32 %v2161, %v2162
      %v2164 = vrot.slane %v2163, 2
      %v2165 = vadd.f32 %v2163, %v2164
      %v2166 = vrot.slane %v2165, 1
      %v2167 = vadd.f32 %v2165, %v2166
      %2168 = vst [vmem:[%s311] sm:$0x1] %v2167
      %s2169 = smul.u32 18, %s23
      %p2170 = scmp.lt.s32.totalorder %s22, 1
      %s2171 = scalar_select %p2170, %s22, 1
      %p2172 = scmp.lt.s32.totalorder %s2169, 35
      %s2173 = scalar_select %p2172, %s2169, 35
      %s2174 = smul.addr %s2171, 36
      %s2175 = sadd.s32 %s2173, %s2174
      %s2176 = smul.addr %s2175, 8
      %s2177 = scalar_lea.vmem %s4, %s2176
      %p2178 = scmp.lt.s32.totalorder %s22, 1
      %s2179 = scalar_select %p2178, %s22, 1
      %p2180 = scmp.lt.s32.totalorder %s23, 1
      %s2181 = scalar_select %p2180, %s23, 1
      %s2182 = smul.addr %s2179, 2
      %s2183 = sadd.s32 %s2181, %s2182
      %s2184 = scalar_lea.vmem %s5, %s2183
      %p2185 = scmp.lt.s32.totalorder %s22, 1
      %s2186 = scalar_select %p2185, %s22, 1
      %p2187 = scmp.lt.s32.totalorder %s23, 1
      %s2188 = scalar_select %p2187, %s23, 1
      %s2189 = smul.addr %s2186, 2
      %s2190 = sadd.s32 %s2188, %s2189
      %s2191 = scalar_lea.vmem %s6, %s2190
      // Predicated region
      $region37: #{middle_block.6} parent=35 // pred_check
        %p2192 = pneg %p139
      $region38: #{middle_block.6} parent=35 // pred_check_branch
        %2194 = sbr.rel (%p2192) target = $region40
      $region39: #{middle_block.6} parent=35 // pred_region
        %s2195 = smul.u32 18, %s23
      $region40: #{middle_block.6} parent=35 // pred_fallthru
        _
      // Predicated region
      $region41: #{middle_block.6} parent=35 // pred_check
        %p2196 = pneg %p167
      $region42: #{middle_block.6} parent=35 // pred_check_branch
        %2198 = sbr.rel (%p2196) target = $region44
      $region43: #{middle_block.6} parent=35 // pred_region
        _
      $region44: #{middle_block.6} parent=35 // pred_fallthru
        _
      // Predicated region
      $region45: #{middle_block.6} parent=35 // pred_check
        %p2199 = pneg %p195
      $region46: #{middle_block.6} parent=35 // pred_check_branch
        %2201 = sbr.rel (%p2199) target = $region48
      $region47: #{middle_block.6} parent=35 // pred_region
        _
      $region48: #{middle_block.6} parent=35 // pred_fallthru
        _
    $region36: #{middle_block.6} parent=5 // pred_fallthru
      _
    %p2202 = scmp.le.s32.totalorder 2, %s13
    // Predicated region
    $region49: #{middle_block.6} parent=5 // pred_check
      %p2203 = pneg %p2202
    $region50: #{middle_block.6} parent=5 // pred_check_branch
      %2205 = sbr.rel (%p2203) target = $region52
    $region51: #{middle_block.6} parent=5 // pred_region
      %s2206 = ssub.s32 %s13, 2
      // Predicated region
      $region53: #{middle_block.6} parent=51 // pred_check
        %p2207 = pneg %p145
      $region54: #{middle_block.6} parent=51 // pred_check_branch
        %2209 = sbr.rel (%p2207) target = $region56
      $region55: #{middle_block.6} parent=51 // pred_region
        %s2210 = smul.u32 18, %s25
        %p2211 = scmp.lt.s32.totalorder %s24, 1
        %s2212 = scalar_select %p2211, %s24, 1
        %p2213 = scmp.lt.s32.totalorder %s2210, 35
        %s2214 = scalar_select %p2213, %s2210, 35
        %s2215 = smul.addr %s2212, 36
        %s2216 = sadd.s32 %s2214, %s2215
        %s2217 = smul.addr %s2216, 8
        %s2218 = scalar_lea.vmem %s4, %s2217
      $region56: #{middle_block.6} parent=51 // pred_fallthru
        _
      // Predicated region
      $region57: #{middle_block.6} parent=51 // pred_check
        %p2219 = pneg %p173
      $region58: #{middle_block.6} parent=51 // pred_check_branch
        %2221 = sbr.rel (%p2219) target = $region60
      $region59: #{middle_block.6} parent=51 // pred_region
        %p2222 = scmp.lt.s32.totalorder %s24, 1
        %s2223 = scalar_select %p2222, %s24, 1
        %p2224 = scmp.lt.s32.totalorder %s25, 1
        %s2225 = scalar_select %p2224, %s25, 1
        %s2226 = smul.addr %s2223, 2
        %s2227 = sadd.s32 %s2225, %s2226
        %s2228 = scalar_lea.vmem %s5, %s2227
      $region60: #{middle_block.6} parent=51 // pred_fallthru
        _
      // Predicated region
      $region61: #{middle_block.6} parent=51 // pred_check
        %p2229 = pneg %p201
      $region62: #{middle_block.6} parent=51 // pred_check_branch
        %2231 = sbr.rel (%p2229) target = $region64
      $region63: #{middle_block.6} parent=51 // pred_region
        %p2232 = scmp.lt.s32.totalorder %s24, 1
        %s2233 = scalar_select %p2232, %s24, 1
        %p2234 = scmp.lt.s32.totalorder %s25, 1
        %s2235 = scalar_select %p2234, %s25, 1
        %s2236 = smul.addr %s2233, 2
        %s2237 = sadd.s32 %s2235, %s2236
        %s2238 = scalar_lea.vmem %s6, %s2237
      $region64: #{middle_block.6} parent=51 // pred_fallthru
        _
    $region52: #{middle_block.6} parent=5 // pred_fallthru
      _
  $region6: #{middle_block.6} parent=0 // loop_footer
    %s17 = sadd.s32 1, %s13
  $region7: #{middle_block.6} parent=0 // loop_footer_branch
    %12 = sbr.rel target = $region3
  $region8: #{middle_block.6} parent=0 // loop_exit
    _

</llo_original>
